<compile_context>
chip_gen: v7x
topology: tpu7x:2x2x1
jax: 0.10.0
libtpu: 0.0.40
codegen_flags: <defaults>
</compile_context>

<pallas_src>
import functools

import jax
import jax.numpy as jnp
from jax.experimental import pallas as pl
from jax.experimental.pallas import tpu as pltpu


# ----------------------------------------------------------------------------
# Fused kernel: whole encoder for one batch element, intermediates in VMEM
# ----------------------------------------------------------------------------
def _encoder_fused_kernel(x_ref, w1_ref, b1_ref, w2_ref, b2_ref,
                          f1_ref, f2_ref, xp1, rowmax, xp2):
    # x_ref  : (H, W, Cin)         NHWC input tile (one batch element)
    # w1_ref : (9*Cin, Cmid)       conv1 taps flattened into one 2-D tile
    # b1_ref : (1, Cmid)
    # w2_ref : (9*Cmid, Cout)
    # b2_ref : (1, Cout)
    # f1_ref : (H, W, Cmid)        out: post-ReLU of child [1] (NHWC)
    # f2_ref : (Ho*Wo, Cout)       out: post-ReLU of child [4] (HW flattened)
    # xp1    : (H+2, W+2, Cin)     scratch: zero-padded conv1 input
    # rowmax : (Ho, W, Cmid)       scratch: vertical 2-max intermediate
    # xp2    : (Ho+2, Wo+2, Cmid)  scratch: zero-padded conv2 input
    H, W, Cin = x_ref.shape
    Cmid = w1_ref.shape[1]
    Cout = w2_ref.shape[1]
    Ho, Wo = H // 2, W // 2
    HW, HWo = H * W, Ho * Wo
    f32 = jnp.float32

    # ---- children [0] Conv2d(Cin->Cmid, k=3, pad=1) + [1] ReLU --------------
    # In-kernel zero halo (replaces wrapper-side jnp.pad + extra HBM buffer).
    xp1[...] = jnp.zeros_like(xp1)
    xp1[1:H + 1, 1:W + 1, :] = x_ref[...]
    # Bias folded into the accumulator init (saves a separate VPU bias pass).
    acc = jnp.broadcast_to(b1_ref[...].astype(f32), (HW, Cmid))
    for dy in range(3):          # static Python loop -> fully unrolled taps
        for dx in range(3):
            t = dy * 3 + dx
            tap = xp1[dy:dy + H, dx:dx + W, :].reshape(HW, Cin)
            acc = acc + jnp.dot(tap, w1_ref[t * Cin:(t + 1) * Cin, :],
                                preferred_element_type=f32)
    a1 = jnp.maximum(acc, 0.0)
    f1_ref[...] = a1.reshape(H, W, Cmid).astype(f1_ref.dtype)

    # ---- child [2] MaxPool2d(2): strided reads of the VMEM-resident f1 ------
    rowmax[...] = jnp.maximum(f1_ref[pl.ds(0, Ho, stride=2)],
                              f1_ref[pl.ds(1, Ho, stride=2)])
    pooled = jnp.maximum(rowmax[:, pl.ds(0, Wo, stride=2), :],
                         rowmax[:, pl.ds(1, Wo, stride=2), :])

    # ---- children [3] Conv2d(Cmid->Cout, k=3, pad=1) + [4] ReLU -------------
    xp2[...] = jnp.zeros_like(xp2)
    xp2[1:Ho + 1, 1:Wo + 1, :] = pooled
    acc2 = jnp.broadcast_to(b2_ref[...].astype(f32), (HWo, Cout))
    for dy in range(3):
        for dx in range(3):
            t = dy * 3 + dx
            tap = xp2[dy:dy + Ho, dx:dx + Wo, :].reshape(HWo, Cmid)
            acc2 = acc2 + jnp.dot(tap, w2_ref[t * Cmid:(t + 1) * Cmid, :],
                                  preferred_element_type=f32)
    f2_ref[...] = jnp.maximum(acc2, 0.0).astype(f2_ref.dtype)


# ----------------------------------------------------------------------------
# Wrapper: parameter plumbing + single fused pallas_call
# ----------------------------------------------------------------------------
def encoder_forward(x_nchw, params, feature_indices=(1, 4)):
    """Mirrors EncoderModule.forward; returns NCHW activations at the
    requested child indices (post-ReLU children 1 and 4)."""
    N, Cin, H, W = x_nchw.shape
    Cmid = params["conv1_b"].shape[0]
    Cout = params["conv2_b"].shape[0]
    Ho, Wo = H // 2, W // 2

    x_nhwc = jnp.transpose(x_nchw, (0, 2, 3, 1))          # NCHW -> NHWC
    w1 = params["conv1_w"].reshape(9 * Cin, Cmid)          # rows = (tap, cin)
    b1 = params["conv1_b"].reshape(1, Cmid)
    w2 = params["conv2_w"].reshape(9 * Cmid, Cout)
    b2 = params["conv2_b"].reshape(1, Cout)

    elt = jnp.dtype(x_nchw.dtype).itemsize
    cost = pl.CostEstimate(
        flops=2 * N * (H * W * 9 * Cin * Cmid + Ho * Wo * 9 * Cmid * Cout),
        transcendentals=0,
        bytes_accessed=(N * H * W * Cin + N * H * W * Cmid
                        + N * Ho * Wo * Cout) * elt
                       + (9 * Cin * Cmid + Cmid + 9 * Cmid * Cout + Cout) * 4,
    )

    f1_nhwc, f2_flat = pl.pallas_call(
        _encoder_fused_kernel,
        out_shape=(
            jax.ShapeDtypeStruct((N, H, W, Cmid), x_nchw.dtype),
            jax.ShapeDtypeStruct((N, Ho * Wo, Cout), x_nchw.dtype),
        ),
        grid=(N,),
        in_specs=[
            pl.BlockSpec((pl.Squeezed(), H, W, Cin), lambda n: (n, 0, 0, 0)),
            pl.BlockSpec((9 * Cin, Cmid), lambda n: (0, 0)),
            pl.BlockSpec((1, Cmid), lambda n: (0, 0)),
            pl.BlockSpec((9 * Cmid, Cout), lambda n: (0, 0)),
            pl.BlockSpec((1, Cout), lambda n: (0, 0)),
        ],
        out_specs=(
            pl.BlockSpec((pl.Squeezed(), H, W, Cmid), lambda n: (n, 0, 0, 0)),
            pl.BlockSpec((pl.Squeezed(), Ho * Wo, Cout), lambda n: (n, 0, 0)),
        ),
        scratch_shapes=[
            pltpu.VMEM((H + 2, W + 2, Cin), jnp.float32),     # xp1
            pltpu.VMEM((Ho, W, Cmid), jnp.float32),           # rowmax
            pltpu.VMEM((Ho + 2, Wo + 2, Cmid), jnp.float32),  # xp2
        ],
        compiler_params=pltpu.CompilerParams(
            dimension_semantics=("parallel",)),
        cost_estimate=cost,
    )(x_nhwc, w1, b1, w2, b2)

    feats = {
        1: jnp.transpose(f1_nhwc, (0, 3, 1, 2)),
        4: jnp.transpose(f2_flat.reshape(N, Ho, Wo, Cout), (0, 3, 1, 2)),
    }
    outputs = []
    for idx in feature_indices:
        if idx not in feats:
            # TODO(synk): only post-ReLU features (children 1 and 4) are
            # emitted; pre-ReLU / pooled intermediates stay VMEM-resident.
            raise NotImplementedError(
                f"feature index {idx} is not exported by the fused kernel")
        outputs.append(feats[idx])
    return outputs


# ----------------------------------------------------------------------------
# Parameters + pure-JAX reference for correctness checking
# ----------------------------------------------------------------------------
def init_params(c_in=4, c_mid=8, c_out=16):
    k = jax.random.PRNGKey(42)
    k1, k2, k3, k4 = jax.random.split(k, 4)
    return {
        "conv1_w": 0.1 * jax.random.normal(k1, (3, 3, c_in, c_mid), jnp.float32),
        "conv1_b": 0.1 * jax.random.normal(k2, (c_mid,), jnp.float32),
        "conv2_w": 0.1 * jax.random.normal(k3, (3, 3, c_mid, c_out), jnp.float32),
        "conv2_b": 0.1 * jax.random.normal(k4, (c_out,), jnp.float32),
    }


def _reference_forward(x_nchw, params):
    dn = ("NHWC", "HWIO", "NHWC")
    x = jnp.transpose(x_nchw, (0, 2, 3, 1))
    a1 = jax.nn.relu(
        jax.lax.conv_general_dilated(x, params["conv1_w"], (1, 1),
                                     ((1, 1), (1, 1)), dimension_numbers=dn)
        + params["conv1_b"])
    p = jax.lax.reduce_window(a1, -jnp.inf, jax.lax.max,
                              (1, 2, 2, 1), (1, 2, 2, 1), "VALID")
    a2 = jax.nn.relu(
        jax.lax.conv_general_dilated(p, params["conv2_w"], (1, 1),
                                     ((1, 1), (1, 1)), dimension_numbers=dn)
        + params["conv2_b"])
    return (jnp.transpose(a1, (0, 3, 1, 2)), jnp.transpose(a2, (0, 3, 1, 2)))


if __name__ == "__main__":
    key = jax.random.PRNGKey(0)
    x = jax.random.normal(key, (2, 4, 16, 16), jnp.float32)  # NCHW like PyTorch
    params = init_params(c_in=4, c_mid=8, c_out=16)

    fwd = jax.jit(functools.partial(encoder_forward, feature_indices=(1, 4)))
    feats = fwd(x, params)
    feats = [jax.block_until_ready(f) for f in feats]

    assert feats[0].shape == (2, 8, 16, 16), feats[0].shape
    assert feats[1].shape == (2, 16, 8, 8), feats[1].shape

    ref1, ref2 = _reference_forward(x, params)
    assert bool(jnp.allclose(feats[0], ref1, atol=2e-3, rtol=2e-3))
    assert bool(jnp.allclose(feats[1], ref2, atol=2e-3, rtol=2e-3))
    assert all(bool(jnp.all(f >= 0)) for f in feats)  # post-ReLU outputs

    print("KERNEL_OK")
</pallas_src>

<mosaic_0001>
module attributes {stable_mosaic.version = 11 : i64} {
  func.func @_encoder_fused_kernel(%arg0: i32, %arg1: memref<1x16x16x4xf32, #tpu.memory_space<vmem>>, %arg2: memref<36x8xf32, #tpu.memory_space<vmem>>, %arg3: memref<1x8xf32, #tpu.memory_space<vmem>>, %arg4: memref<72x16xf32, #tpu.memory_space<vmem>>, %arg5: memref<1x16xf32, #tpu.memory_space<vmem>>, %arg6: memref<1x16x16x8xf32, #tpu.memory_space<vmem>>, %arg7: memref<1x64x16xf32, #tpu.memory_space<vmem>>, %arg8: memref<18x18x4xf32, #tpu.memory_space<vmem>>, %arg9: memref<8x16x8xf32, #tpu.memory_space<vmem>>, %arg10: memref<10x10x8xf32, #tpu.memory_space<vmem>>) attributes {dimension_semantics = [#tpu.dimension_semantics<parallel>], iteration_bounds = array<i64: 2>, scalar_prefetch = 0 : i64, scratch_operands = 3 : i64, tpu.core_type = #tpu.core_type<tc>, window_params = [{transform_indices = @transform_0, window_bounds = array<i64: 1, 16, 16, 4>}, {pipeline_mode = #tpu.pipeline_mode<synchronous>, transform_indices = @transform_1, window_bounds = array<i64: 36, 8>}, {pipeline_mode = #tpu.pipeline_mode<synchronous>, transform_indices = @transform_2, window_bounds = array<i64: 1, 8>}, {pipeline_mode = #tpu.pipeline_mode<synchronous>, transform_indices = @transform_3, window_bounds = array<i64: 72, 16>}, {pipeline_mode = #tpu.pipeline_mode<synchronous>, transform_indices = @transform_4, window_bounds = array<i64: 1, 16>}, {transform_indices = @transform_5, window_bounds = array<i64: 1, 16, 16, 8>}, {transform_indices = @transform_6, window_bounds = array<i64: 1, 64, 16>}]} {
    %cst = arith.constant 0.000000e+00 : f32
    %0 = vector.broadcast %cst : f32 to vector<18x18x4xf32>
    %c0 = arith.constant 0 : index
    %c0_0 = arith.constant 0 : index
    %c0_1 = arith.constant 0 : index
    %1 = vector.load %arg8[%c0, %c0_0, %c0_1] : memref<18x18x4xf32, #tpu.memory_space<vmem>>, vector<18x18x4xf32>
    tpu.vector_store %arg8[%c0, %c0_0, %c0_1], %0 {strides = array<i32>} : memref<18x18x4xf32, #tpu.memory_space<vmem>>, vector<18x18x4xf32>,
    %c0_2 = arith.constant 0 : index
    %c0_3 = arith.constant 0 : index
    %c0_4 = arith.constant 0 : index
    %c0_5 = arith.constant 0 : index
    %2 = vector.load %arg1[%c0_2, %c0_3, %c0_4, %c0_5] : memref<1x16x16x4xf32, #tpu.memory_space<vmem>>, vector<1x16x16x4xf32>
    %3 = vector.shape_cast %2 : vector<1x16x16x4xf32> to vector<16x16x4xf32>
    %c1 = arith.constant 1 : index
    %c1_6 = arith.constant 1 : index
    %c0_7 = arith.constant 0 : index
    %4 = vector.load %arg8[%c1, %c1_6, %c0_7] : memref<18x18x4xf32, #tpu.memory_space<vmem>>, vector<16x16x4xf32>
    tpu.vector_store %arg8[%c1, %c1_6, %c0_7], %3 {strides = array<i32>} : memref<18x18x4xf32, #tpu.memory_space<vmem>>, vector<16x16x4xf32>,
    %c0_8 = arith.constant 0 : index
    %c0_9 = arith.constant 0 : index
    %5 = vector.load %arg3[%c0_8, %c0_9] : memref<1x8xf32, #tpu.memory_space<vmem>>, vector<1x8xf32>
    %6 = vector.shape_cast %5 : vector<1x8xf32> to vector<1x8xf32>
    %7 = vector.broadcast %6 : vector<1x8xf32> to vector<256x8xf32>
    %c0_10 = arith.constant 0 : index
    %c0_11 = arith.constant 0 : index
    %c0_12 = arith.constant 0 : index
    %8 = vector.load %arg8[%c0_10, %c0_11, %c0_12] : memref<18x18x4xf32, #tpu.memory_space<vmem>>, vector<16x16x4xf32>
    %9 = vector.shape_cast %8 : vector<16x16x4xf32> to vector<256x4xf32>
    %c0_13 = arith.constant 0 : index
    %c0_14 = arith.constant 0 : index
    %10 = vector.load %arg2[%c0_13, %c0_14] : memref<36x8xf32, #tpu.memory_space<vmem>>, vector<4x8xf32>
    %cst_15 = arith.constant dense<0.000000e+00> : vector<256x8xf32>
    %11 = tpu.matmul %9, %10, %cst_15 {dimension_numbers = #tpu.dot_dimension_numbers<[1], [0], [0], [1], [0, 0, 1, 1], [], []>} : vector<256x4xf32>, vector<4x8xf32>, vector<256x8xf32> -> vector<256x8xf32>
    %12 = arith.addf %7, %11 : vector<256x8xf32>
    %c0_16 = arith.constant 0 : index
    %c1_17 = arith.constant 1 : index
    %c0_18 = arith.constant 0 : index
    %13 = vector.load %arg8[%c0_16, %c1_17, %c0_18] : memref<18x18x4xf32, #tpu.memory_space<vmem>>, vector<16x16x4xf32>
    %14 = vector.shape_cast %13 : vector<16x16x4xf32> to vector<256x4xf32>
    %c4 = arith.constant 4 : index
    %c0_19 = arith.constant 0 : index
    %15 = vector.load %arg2[%c4, %c0_19] : memref<36x8xf32, #tpu.memory_space<vmem>>, vector<4x8xf32>
    %cst_20 = arith.constant dense<0.000000e+00> : vector<256x8xf32>
    %16 = tpu.matmul %14, %15, %cst_20 {dimension_numbers = #tpu.dot_dimension_numbers<[1], [0], [0], [1], [0, 0, 1, 1], [], []>} : vector<256x4xf32>, vector<4x8xf32>, vector<256x8xf32> -> vector<256x8xf32>
    %17 = arith.addf %12, %16 : vector<256x8xf32>
    %c0_21 = arith.constant 0 : index
    %c2 = arith.constant 2 : index
    %c0_22 = arith.constant 0 : index
    %18 = vector.load %arg8[%c0_21, %c2, %c0_22] : memref<18x18x4xf32, #tpu.memory_space<vmem>>, vector<16x16x4xf32>
    %19 = vector.shape_cast %18 : vector<16x16x4xf32> to vector<256x4xf32>
    %c8 = arith.constant 8 : index
    %c0_23 = arith.constant 0 : index
    %20 = vector.load %arg2[%c8, %c0_23] : memref<36x8xf32, #tpu.memory_space<vmem>>, vector<4x8xf32>
    %cst_24 = arith.constant dense<0.000000e+00> : vector<256x8xf32>
    %21 = tpu.matmul %19, %20, %cst_24 {dimension_numbers = #tpu.dot_dimension_numbers<[1], [0], [0], [1], [0, 0, 1, 1], [], []>} : vector<256x4xf32>, vector<4x8xf32>, vector<256x8xf32> -> vector<256x8xf32>
    %22 = arith.addf %17, %21 : vector<256x8xf32>
    %c1_25 = arith.constant 1 : index
    %c0_26 = arith.constant 0 : index
    %c0_27 = arith.constant 0 : index
    %23 = vector.load %arg8[%c1_25, %c0_26, %c0_27] : memref<18x18x4xf32, #tpu.memory_space<vmem>>, vector<16x16x4xf32>
    %24 = vector.shape_cast %23 : vector<16x16x4xf32> to vector<256x4xf32>
    %c12 = arith.constant 12 : index
    %c0_28 = arith.constant 0 : index
    %25 = vector.load %arg2[%c12, %c0_28] : memref<36x8xf32, #tpu.memory_space<vmem>>, vector<4x8xf32>
    %cst_29 = arith.constant dense<0.000000e+00> : vector<256x8xf32>
    %26 = tpu.matmul %24, %25, %cst_29 {dimension_numbers = #tpu.dot_dimension_numbers<[1], [0], [0], [1], [0, 0, 1, 1], [], []>} : vector<256x4xf32>, vector<4x8xf32>, vector<256x8xf32> -> vector<256x8xf32>
    %27 = arith.addf %22, %26 : vector<256x8xf32>
    %c1_30 = arith.constant 1 : index
    %c1_31 = arith.constant 1 : index
    %c0_32 = arith.constant 0 : index
    %28 = vector.load %arg8[%c1_30, %c1_31, %c0_32] : memref<18x18x4xf32, #tpu.memory_space<vmem>>, vector<16x16x4xf32>
    %29 = vector.shape_cast %28 : vector<16x16x4xf32> to vector<256x4xf32>
    %c16 = arith.constant 16 : index
    %c0_33 = arith.constant 0 : index
    %30 = vector.load %arg2[%c16, %c0_33] : memref<36x8xf32, #tpu.memory_space<vmem>>, vector<4x8xf32>
    %cst_34 = arith.constant dense<0.000000e+00> : vector<256x8xf32>
    %31 = tpu.matmul %29, %30, %cst_34 {dimension_numbers = #tpu.dot_dimension_numbers<[1], [0], [0], [1], [0, 0, 1, 1], [], []>} : vector<256x4xf32>, vector<4x8xf32>, vector<256x8xf32> -> vector<256x8xf32>
    %32 = arith.addf %27, %31 : vector<256x8xf32>
    %c1_35 = arith.constant 1 : index
    %c2_36 = arith.constant 2 : index
    %c0_37 = arith.constant 0 : index
    %33 = vector.load %arg8[%c1_35, %c2_36, %c0_37] : memref<18x18x4xf32, #tpu.memory_space<vmem>>, vector<16x16x4xf32>
    %34 = vector.shape_cast %33 : vector<16x16x4xf32> to vector<256x4xf32>
    %c20 = arith.constant 20 : index
    %c0_38 = arith.constant 0 : index
    %35 = vector.load %arg2[%c20, %c0_38] : memref<36x8xf32, #tpu.memory_space<vmem>>, vector<4x8xf32>
    %cst_39 = arith.constant dense<0.000000e+00> : vector<256x8xf32>
    %36 = tpu.matmul %34, %35, %cst_39 {dimension_numbers = #tpu.dot_dimension_numbers<[1], [0], [0], [1], [0, 0, 1, 1], [], []>} : vector<256x4xf32>, vector<4x8xf32>, vector<256x8xf32> -> vector<256x8xf32>
    %37 = arith.addf %32, %36 : vector<256x8xf32>
    %c2_40 = arith.constant 2 : index
    %c0_41 = arith.constant 0 : index
    %c0_42 = arith.constant 0 : index
    %38 = vector.load %arg8[%c2_40, %c0_41, %c0_42] : memref<18x18x4xf32, #tpu.memory_space<vmem>>, vector<16x16x4xf32>
    %39 = vector.shape_cast %38 : vector<16x16x4xf32> to vector<256x4xf32>
    %c24 = arith.constant 24 : index
    %c0_43 = arith.constant 0 : index
    %40 = vector.load %arg2[%c24, %c0_43] : memref<36x8xf32, #tpu.memory_space<vmem>>, vector<4x8xf32>
    %cst_44 = arith.constant dense<0.000000e+00> : vector<256x8xf32>
    %41 = tpu.matmul %39, %40, %cst_44 {dimension_numbers = #tpu.dot_dimension_numbers<[1], [0], [0], [1], [0, 0, 1, 1], [], []>} : vector<256x4xf32>, vector<4x8xf32>, vector<256x8xf32> -> vector<256x8xf32>
    %42 = arith.addf %37, %41 : vector<256x8xf32>
    %c2_45 = arith.constant 2 : index
    %c1_46 = arith.constant 1 : index
    %c0_47 = arith.constant 0 : index
    %43 = vector.load %arg8[%c2_45, %c1_46, %c0_47] : memref<18x18x4xf32, #tpu.memory_space<vmem>>, vector<16x16x4xf32>
    %44 = vector.shape_cast %43 : vector<16x16x4xf32> to vector<256x4xf32>
    %c28 = arith.constant 28 : index
    %c0_48 = arith.constant 0 : index
    %45 = vector.load %arg2[%c28, %c0_48] : memref<36x8xf32, #tpu.memory_space<vmem>>, vector<4x8xf32>
    %cst_49 = arith.constant dense<0.000000e+00> : vector<256x8xf32>
    %46 = tpu.matmul %44, %45, %cst_49 {dimension_numbers = #tpu.dot_dimension_numbers<[1], [0], [0], [1], [0, 0, 1, 1], [], []>} : vector<256x4xf32>, vector<4x8xf32>, vector<256x8xf32> -> vector<256x8xf32>
    %47 = arith.addf %42, %46 : vector<256x8xf32>
    %c2_50 = arith.constant 2 : index
    %c2_51 = arith.constant 2 : index
    %c0_52 = arith.constant 0 : index
    %48 = vector.load %arg8[%c2_50, %c2_51, %c0_52] : memref<18x18x4xf32, #tpu.memory_space<vmem>>, vector<16x16x4xf32>
    %49 = vector.shape_cast %48 : vector<16x16x4xf32> to vector<256x4xf32>
    %c32 = arith.constant 32 : index
    %c0_53 = arith.constant 0 : index
    %50 = vector.load %arg2[%c32, %c0_53] : memref<36x8xf32, #tpu.memory_space<vmem>>, vector<4x8xf32>
    %cst_54 = arith.constant dense<0.000000e+00> : vector<256x8xf32>
    %51 = tpu.matmul %49, %50, %cst_54 {dimension_numbers = #tpu.dot_dimension_numbers<[1], [0], [0], [1], [0, 0, 1, 1], [], []>} : vector<256x4xf32>, vector<4x8xf32>, vector<256x8xf32> -> vector<256x8xf32>
    %52 = arith.addf %47, %51 : vector<256x8xf32>
    %cst_55 = arith.constant 0.000000e+00 : f32
    %53 = vector.broadcast %cst_55 : f32 to vector<256x8xf32>
    %54 = arith.maximumf %52, %53 : vector<256x8xf32>
    %55 = vector.shape_cast %54 : vector<256x8xf32> to vector<16x16x8xf32>
    %c0_56 = arith.constant 0 : index
    %c0_57 = arith.constant 0 : index
    %c0_58 = arith.constant 0 : index
    %c0_59 = arith.constant 0 : index
    %56 = vector.load %arg6[%c0_56, %c0_57, %c0_58, %c0_59] : memref<1x16x16x8xf32, #tpu.memory_space<vmem>>, vector<1x16x16x8xf32>
    %57 = vector.shape_cast %56 : vector<1x16x16x8xf32> to vector<16x16x8xf32>
    %58 = vector.shape_cast %55 : vector<16x16x8xf32> to vector<1x16x16x8xf32>
    tpu.vector_store %arg6[%c0_56, %c0_57, %c0_58, %c0_59], %58 {strides = array<i32>} : memref<1x16x16x8xf32, #tpu.memory_space<vmem>>, vector<1x16x16x8xf32>,
    %c0_60 = arith.constant 0 : index
    %c0_61 = arith.constant 0 : index
    %c0_62 = arith.constant 0 : index
    %c0_63 = arith.constant 0 : index
    %59 = tpu.strided_load %arg6[%c0_60, %c0_61, %c0_62, %c0_63] {strides = array<i32: 1, 2, 1, 1>} : memref<1x16x16x8xf32, #tpu.memory_space<vmem>>, vector<1x8x16x8xf32>
    %60 = vector.shape_cast %59 : vector<1x8x16x8xf32> to vector<8x16x8xf32>
    %c0_64 = arith.constant 0 : index
    %c1_65 = arith.constant 1 : index
    %c0_66 = arith.constant 0 : index
    %c0_67 = arith.constant 0 : index
    %61 = tpu.strided_load %arg6[%c0_64, %c1_65, %c0_66, %c0_67] {strides = array<i32: 1, 2, 1, 1>} : memref<1x16x16x8xf32, #tpu.memory_space<vmem>>, vector<1x8x16x8xf32>
    %62 = vector.shape_cast %61 : vector<1x8x16x8xf32> to vector<8x16x8xf32>
    %63 = arith.maximumf %60, %62 : vector<8x16x8xf32>
    %c0_68 = arith.constant 0 : index
    %c0_69 = arith.constant 0 : index
    %c0_70 = arith.constant 0 : index
    %64 = vector.load %arg9[%c0_68, %c0_69, %c0_70] : memref<8x16x8xf32, #tpu.memory_space<vmem>>, vector<8x16x8xf32>
    tpu.vector_store %arg9[%c0_68, %c0_69, %c0_70], %63 {strides = array<i32>} : memref<8x16x8xf32, #tpu.memory_space<vmem>>, vector<8x16x8xf32>,
    %c0_71 = arith.constant 0 : index
    %c0_72 = arith.constant 0 : index
    %c0_73 = arith.constant 0 : index
    %65 = tpu.strided_load %arg9[%c0_71, %c0_72, %c0_73] {strides = array<i32: 1, 2, 1>} : memref<8x16x8xf32, #tpu.memory_space<vmem>>, vector<8x8x8xf32>
    %c0_74 = arith.constant 0 : index
    %c1_75 = arith.constant 1 : index
    %c0_76 = arith.constant 0 : index
    %66 = tpu.strided_load %arg9[%c0_74, %c1_75, %c0_76] {strides = array<i32: 1, 2, 1>} : memref<8x16x8xf32, #tpu.memory_space<vmem>>, vector<8x8x8xf32>
    %67 = arith.maximumf %65, %66 : vector<8x8x8xf32>
    %cst_77 = arith.constant 0.000000e+00 : f32
    %68 = vector.broadcast %cst_77 : f32 to vector<10x10x8xf32>
    %c0_78 = arith.constant 0 : index
    %c0_79 = arith.constant 0 : index
    %c0_80 = arith.constant 0 : index
    %69 = vector.load %arg10[%c0_78, %c0_79, %c0_80] : memref<10x10x8xf32, #tpu.memory_space<vmem>>, vector<10x10x8xf32>
    tpu.vector_store %arg10[%c0_78, %c0_79, %c0_80], %68 {strides = array<i32>} : memref<10x10x8xf32, #tpu.memory_space<vmem>>, vector<10x10x8xf32>,
    %c1_81 = arith.constant 1 : index
    %c1_82 = arith.constant 1 : index
    %c0_83 = arith.constant 0 : index
    %70 = vector.load %arg10[%c1_81, %c1_82, %c0_83] : memref<10x10x8xf32, #tpu.memory_space<vmem>>, vector<8x8x8xf32>
    tpu.vector_store %arg10[%c1_81, %c1_82, %c0_83], %67 {strides = array<i32>} : memref<10x10x8xf32, #tpu.memory_space<vmem>>, vector<8x8x8xf32>,
    %c0_84 = arith.constant 0 : index
    %c0_85 = arith.constant 0 : index
    %71 = vector.load %arg5[%c0_84, %c0_85] : memref<1x16xf32, #tpu.memory_space<vmem>>, vector<1x16xf32>
    %72 = vector.shape_cast %71 : vector<1x16xf32> to vector<1x16xf32>
    %73 = vector.broadcast %72 : vector<1x16xf32> to vector<64x16xf32>
    %c0_86 = arith.constant 0 : index
    %c0_87 = arith.constant 0 : index
    %c0_88 = arith.constant 0 : index
    %74 = vector.load %arg10[%c0_86, %c0_87, %c0_88] : memref<10x10x8xf32, #tpu.memory_space<vmem>>, vector<8x8x8xf32>
    %75 = vector.shape_cast %74 : vector<8x8x8xf32> to vector<64x8xf32>
    %c0_89 = arith.constant 0 : index
    %c0_90 = arith.constant 0 : index
    %76 = vector.load %arg4[%c0_89, %c0_90] : memref<72x16xf32, #tpu.memory_space<vmem>>, vector<8x16xf32>
    %cst_91 = arith.constant dense<0.000000e+00> : vector<64x16xf32>
    %77 = tpu.matmul %75, %76, %cst_91 {dimension_numbers = #tpu.dot_dimension_numbers<[1], [0], [0], [1], [0, 0, 1, 1], [], []>} : vector<64x8xf32>, vector<8x16xf32>, vector<64x16xf32> -> vector<64x16xf32>
    %78 = arith.addf %73, %77 : vector<64x16xf32>
    %c0_92 = arith.constant 0 : index
    %c1_93 = arith.constant 1 : index
    %c0_94 = arith.constant 0 : index
    %79 = vector.load %arg10[%c0_92, %c1_93, %c0_94] : memref<10x10x8xf32, #tpu.memory_space<vmem>>, vector<8x8x8xf32>
    %80 = vector.shape_cast %79 : vector<8x8x8xf32> to vector<64x8xf32>
    %c8_95 = arith.constant 8 : index
    %c0_96 = arith.constant 0 : index
    %81 = vector.load %arg4[%c8_95, %c0_96] : memref<72x16xf32, #tpu.memory_space<vmem>>, vector<8x16xf32>
    %cst_97 = arith.constant dense<0.000000e+00> : vector<64x16xf32>
    %82 = tpu.matmul %80, %81, %cst_97 {dimension_numbers = #tpu.dot_dimension_numbers<[1], [0], [0], [1], [0, 0, 1, 1], [], []>} : vector<64x8xf32>, vector<8x16xf32>, vector<64x16xf32> -> vector<64x16xf32>
    %83 = arith.addf %78, %82 : vector<64x16xf32>
    %c0_98 = arith.constant 0 : index
    %c2_99 = arith.constant 2 : index
    %c0_100 = arith.constant 0 : index
    %84 = vector.load %arg10[%c0_98, %c2_99, %c0_100] : memref<10x10x8xf32, #tpu.memory_space<vmem>>, vector<8x8x8xf32>
    %85 = vector.shape_cast %84 : vector<8x8x8xf32> to vector<64x8xf32>
    %c16_101 = arith.constant 16 : index
    %c0_102 = arith.constant 0 : index
    %86 = vector.load %arg4[%c16_101, %c0_102] : memref<72x16xf32, #tpu.memory_space<vmem>>, vector<8x16xf32>
    %cst_103 = arith.constant dense<0.000000e+00> : vector<64x16xf32>
    %87 = tpu.matmul %85, %86, %cst_103 {dimension_numbers = #tpu.dot_dimension_numbers<[1], [0], [0], [1], [0, 0, 1, 1], [], []>} : vector<64x8xf32>, vector<8x16xf32>, vector<64x16xf32> -> vector<64x16xf32>
    %88 = arith.addf %83, %87 : vector<64x16xf32>
    %c1_104 = arith.constant 1 : index
    %c0_105 = arith.constant 0 : index
    %c0_106 = arith.constant 0 : index
    %89 = vector.load %arg10[%c1_104, %c0_105, %c0_106] : memref<10x10x8xf32, #tpu.memory_space<vmem>>, vector<8x8x8xf32>
    %90 = vector.shape_cast %89 : vector<8x8x8xf32> to vector<64x8xf32>
    %c24_107 = arith.constant 24 : index
    %c0_108 = arith.constant 0 : index
    %91 = vector.load %arg4[%c24_107, %c0_108] : memref<72x16xf32, #tpu.memory_space<vmem>>, vector<8x16xf32>
    %cst_109 = arith.constant dense<0.000000e+00> : vector<64x16xf32>
    %92 = tpu.matmul %90, %91, %cst_109 {dimension_numbers = #tpu.dot_dimension_numbers<[1], [0], [0], [1], [0, 0, 1, 1], [], []>} : vector<64x8xf32>, vector<8x16xf32>, vector<64x16xf32> -> vector<64x16xf32>
    %93 = arith.addf %88, %92 : vector<64x16xf32>
    %c1_110 = arith.constant 1 : index
    %c1_111 = arith.constant 1 : index
    %c0_112 = arith.constant 0 : index
    %94 = vector.load %arg10[%c1_110, %c1_111, %c0_112] : memref<10x10x8xf32, #tpu.memory_space<vmem>>, vector<8x8x8xf32>
    %95 = vector.shape_cast %94 : vector<8x8x8xf32> to vector<64x8xf32>
    %c32_113 = arith.constant 32 : index
    %c0_114 = arith.constant 0 : index
    %96 = vector.load %arg4[%c32_113, %c0_114] : memref<72x16xf32, #tpu.memory_space<vmem>>, vector<8x16xf32>
    %cst_115 = arith.constant dense<0.000000e+00> : vector<64x16xf32>
    %97 = tpu.matmul %95, %96, %cst_115 {dimension_numbers = #tpu.dot_dimension_numbers<[1], [0], [0], [1], [0, 0, 1, 1], [], []>} : vector<64x8xf32>, vector<8x16xf32>, vector<64x16xf32> -> vector<64x16xf32>
    %98 = arith.addf %93, %97 : vector<64x16xf32>
    %c1_116 = arith.constant 1 : index
    %c2_117 = arith.constant 2 : index
    %c0_118 = arith.constant 0 : index
    %99 = vector.load %arg10[%c1_116, %c2_117, %c0_118] : memref<10x10x8xf32, #tpu.memory_space<vmem>>, vector<8x8x8xf32>
    %100 = vector.shape_cast %99 : vector<8x8x8xf32> to vector<64x8xf32>
    %c40 = arith.constant 40 : index
    %c0_119 = arith.constant 0 : index
    %101 = vector.load %arg4[%c40, %c0_119] : memref<72x16xf32, #tpu.memory_space<vmem>>, vector<8x16xf32>
    %cst_120 = arith.constant dense<0.000000e+00> : vector<64x16xf32>
    %102 = tpu.matmul %100, %101, %cst_120 {dimension_numbers = #tpu.dot_dimension_numbers<[1], [0], [0], [1], [0, 0, 1, 1], [], []>} : vector<64x8xf32>, vector<8x16xf32>, vector<64x16xf32> -> vector<64x16xf32>
    %103 = arith.addf %98, %102 : vector<64x16xf32>
    %c2_121 = arith.constant 2 : index
    %c0_122 = arith.constant 0 : index
    %c0_123 = arith.constant 0 : index
    %104 = vector.load %arg10[%c2_121, %c0_122, %c0_123] : memref<10x10x8xf32, #tpu.memory_space<vmem>>, vector<8x8x8xf32>
    %105 = vector.shape_cast %104 : vector<8x8x8xf32> to vector<64x8xf32>
    %c48 = arith.constant 48 : index
    %c0_124 = arith.constant 0 : index
    %106 = vector.load %arg4[%c48, %c0_124] : memref<72x16xf32, #tpu.memory_space<vmem>>, vector<8x16xf32>
    %cst_125 = arith.constant dense<0.000000e+00> : vector<64x16xf32>
    %107 = tpu.matmul %105, %106, %cst_125 {dimension_numbers = #tpu.dot_dimension_numbers<[1], [0], [0], [1], [0, 0, 1, 1], [], []>} : vector<64x8xf32>, vector<8x16xf32>, vector<64x16xf32> -> vector<64x16xf32>
    %108 = arith.addf %103, %107 : vector<64x16xf32>
    %c2_126 = arith.constant 2 : index
    %c1_127 = arith.constant 1 : index
    %c0_128 = arith.constant 0 : index
    %109 = vector.load %arg10[%c2_126, %c1_127, %c0_128] : memref<10x10x8xf32, #tpu.memory_space<vmem>>, vector<8x8x8xf32>
    %110 = vector.shape_cast %109 : vector<8x8x8xf32> to vector<64x8xf32>
    %c56 = arith.constant 56 : index
    %c0_129 = arith.constant 0 : index
    %111 = vector.load %arg4[%c56, %c0_129] : memref<72x16xf32, #tpu.memory_space<vmem>>, vector<8x16xf32>
    %cst_130 = arith.constant dense<0.000000e+00> : vector<64x16xf32>
    %112 = tpu.matmul %110, %111, %cst_130 {dimension_numbers = #tpu.dot_dimension_numbers<[1], [0], [0], [1], [0, 0, 1, 1], [], []>} : vector<64x8xf32>, vector<8x16xf32>, vector<64x16xf32> -> vector<64x16xf32>
    %113 = arith.addf %108, %112 : vector<64x16xf32>
    %c2_131 = arith.constant 2 : index
    %c2_132 = arith.constant 2 : index
    %c0_133 = arith.constant 0 : index
    %114 = vector.load %arg10[%c2_131, %c2_132, %c0_133] : memref<10x10x8xf32, #tpu.memory_space<vmem>>, vector<8x8x8xf32>
    %115 = vector.shape_cast %114 : vector<8x8x8xf32> to vector<64x8xf32>
    %c64 = arith.constant 64 : index
    %c0_134 = arith.constant 0 : index
    %116 = vector.load %arg4[%c64, %c0_134] : memref<72x16xf32, #tpu.memory_space<vmem>>, vector<8x16xf32>
    %cst_135 = arith.constant dense<0.000000e+00> : vector<64x16xf32>
    %117 = tpu.matmul %115, %116, %cst_135 {dimension_numbers = #tpu.dot_dimension_numbers<[1], [0], [0], [1], [0, 0, 1, 1], [], []>} : vector<64x8xf32>, vector<8x16xf32>, vector<64x16xf32> -> vector<64x16xf32>
    %118 = arith.addf %113, %117 : vector<64x16xf32>
    %cst_136 = arith.constant 0.000000e+00 : f32
    %119 = vector.broadcast %cst_136 : f32 to vector<64x16xf32>
    %120 = arith.maximumf %118, %119 : vector<64x16xf32>
    %c0_137 = arith.constant 0 : index
    %c0_138 = arith.constant 0 : index
    %c0_139 = arith.constant 0 : index
    %121 = vector.load %arg7[%c0_137, %c0_138, %c0_139] : memref<1x64x16xf32, #tpu.memory_space<vmem>>, vector<1x64x16xf32>
    %122 = vector.shape_cast %121 : vector<1x64x16xf32> to vector<64x16xf32>
    %123 = vector.shape_cast %120 : vector<64x16xf32> to vector<1x64x16xf32>
    tpu.vector_store %arg7[%c0_137, %c0_138, %c0_139], %123 {strides = array<i32>} : memref<1x64x16xf32, #tpu.memory_space<vmem>>, vector<1x64x16xf32>,
    return
  }
  func.func @transform_0(%arg0: i32) -> (i32, i32, i32, i32) {
    %c0_i32 = arith.constant 0 : i32
    %c0_i32_0 = arith.constant 0 : i32
    %c0_i32_1 = arith.constant 0 : i32
    %c0_i32_2 = arith.constant 0 : i32
    return %arg0, %c0_i32, %c0_i32_0, %c0_i32_1 : i32, i32, i32, i32
  }
  func.func @transform_1(%arg0: i32) -> (i32, i32) {
    %c0_i32 = arith.constant 0 : i32
    %c0_i32_0 = arith.constant 0 : i32
    %c0_i32_1 = arith.constant 0 : i32
    return %c0_i32, %c0_i32_0 : i32, i32
  }
  func.func @transform_2(%arg0: i32) -> (i32, i32) {
    %c0_i32 = arith.constant 0 : i32
    %c0_i32_0 = arith.constant 0 : i32
    %c0_i32_1 = arith.constant 0 : i32
    return %c0_i32, %c0_i32_0 : i32, i32
  }
  func.func @transform_3(%arg0: i32) -> (i32, i32) {
    %c0_i32 = arith.constant 0 : i32
    %c0_i32_0 = arith.constant 0 : i32
    %c0_i32_1 = arith.constant 0 : i32
    return %c0_i32, %c0_i32_0 : i32, i32
  }
  func.func @transform_4(%arg0: i32) -> (i32, i32) {
    %c0_i32 = arith.constant 0 : i32
    %c0_i32_0 = arith.constant 0 : i32
    %c0_i32_1 = arith.constant 0 : i32
    return %c0_i32, %c0_i32_0 : i32, i32
  }
  func.func @transform_5(%arg0: i32) -> (i32, i32, i32, i32) {
    %c0_i32 = arith.constant 0 : i32
    %c0_i32_0 = arith.constant 0 : i32
    %c0_i32_1 = arith.constant 0 : i32
    %c0_i32_2 = arith.constant 0 : i32
    return %arg0, %c0_i32, %c0_i32_0, %c0_i32_1 : i32, i32, i32, i32
  }
  func.func @transform_6(%arg0: i32) -> (i32, i32, i32) {
    %c0_i32 = arith.constant 0 : i32
    %c0_i32_0 = arith.constant 0 : i32
    %c0_i32_1 = arith.constant 0 : i32
    return %arg0, %c0_i32, %c0_i32_0 : i32, i32, i32
  }
}

</mosaic_0001>

<llo_original>
// kernel: encoder_forward.1
$region0: #{encoder_forward.1}
  #allocation0 [shape = 'u32[]', space=smem, size = 0x4, offset = 0x4, fixed_abs, tag = 'smem constant byte address 0x4 - core index']
  #allocation1 [shape = 'u32[144,128]{1,0:T(1,128)}', space=vmem, size = 0x12000, scoped, tag = 'internal scratch']
  #allocation2 [shape = 'f32[18,18,4]{2,1,0:T(8,128)}', space=vmem, size = 0x36000, scoped, tag = 'scratch operand']
  #allocation3 [shape = 'f32[8,16,8]{2,1,0:T(8,128)}', space=vmem, size = 0x10000, scoped, tag = 'scratch operand']
  #allocation4 [shape = 'f32[10,10,8]{2,1,0:T(8,128)}', space=vmem, size = 0x14000, scoped, tag = 'scratch operand']
  %s0 = inlined_call_operand.vmem [shape: f32[2,16,16,4], index: 0, kind: input, shape index: {}]
  %s1 = inlined_call_operand.vmem [shape: f32[36,8], index: 1, kind: input, shape index: {}]
  %s2 = inlined_call_operand.vmem [shape: f32[1,8], index: 2, kind: input, shape index: {}]
  %s3 = inlined_call_operand.vmem [shape: f32[72,16], index: 3, kind: input, shape index: {}]
  %s4 = inlined_call_operand.vmem [shape: f32[1,16], index: 4, kind: input, shape index: {}]
  %s5 = inlined_call_operand.vmem [shape: f32[2,16,16,8], index: 5, kind: output, shape index: {0}]
  %s6 = inlined_call_operand.hbm [shape: f32[2,64,16], index: 6, kind: output, shape index: {1}]
  %7 = xla_tuple %s5, %s6
  %s8 = sld [smem:[#allocation0]]
  $region61: #{encoder_forward.1} parent=0
    _
  %s10 = ssub.s32 1, %s8
  %s11 = scalar_select 0, %s10, %s8
  $region1: #{encoder_forward.1} parent=0
    #allocation5 [shape = 'u8[65536]{0}', space=vmem, size = 0x10000, scoped, tag = 'output window, operand 1']
    #allocation6 [shape = 's32[2]{0}', space=sflag, size = 0x8, scoped, tag = 'scoped memory for encoder_forward.1']
    %12 = vsyncpa [#allocation6], 0
    %s13 = scalar_lea.sflag [#allocation6], 1
    %14 = vsyncpa %s13, 0
    loop: start=0, step=1, limit=4
    $region2: #{encoder_forward.1} parent=1 // loop_pre_header
      _
    $region3: #{encoder_forward.1} parent=1 // loop_header
      %s16 = sphi 0, %s20
      %p17 = scmp.ge.s32.totalorder %s16, 4
      %s26 = sphi 0, %s28
      %s29 = sphi 0, %s26
      %s30 = sphi 0, %s29
      %s46 = sphi 0, %s30
      %s50 = sphi 0, %s50
      %s52 = sphi 0, %s50
      %s53 = sphi 0, %s52
      %s67 = sphi 0, %s53
      %s71 = sphi 0, %s71
      %s73 = sphi 0, %s71
      %s74 = sphi 0, %s73
      %s88 = sphi 0, %s74
      %s92 = sphi 0, %s92
      %s94 = sphi 0, %s92
      %s95 = sphi 0, %s94
      %s109 = sphi 0, %s95
      %s113 = sphi 0, %s113
      %s115 = sphi 0, %s113
      %s116 = sphi 0, %s115
      %s130 = sphi 0, %s116
      %s136 = sphi 0, %s138
      %s139 = sphi 0, %s136
      %s140 = sphi 0, %s139
      %s156 = sphi 0, %s140
      %s162 = sphi 0, %s164
      %s165 = sphi 0, %s162
      %s166 = sphi 0, %s165
      %s182 = sphi 0, %s166
    $region4: #{encoder_forward.1} parent=1 // loop_header_branch
      %19 = sbr.rel (%p17) target = $region8
    $region5: #{encoder_forward.1} parent=1 // loop_body
      %s21 = ssub.s32 %s16, 1
      %s22 = ssub.s32 %s16, 2
      %s23 = sadd.s32 %s16, 1
      %s24 = ssub.s32 %s16, %s23
      %p25 = scmp.eq.s32.totalorder %s24, 0
      %s27 = sadd.s32 %s26, 1
      %s28 = scalar_select %p25, %s26, %s27
      %p31 = pneg %p25
      %p32 = scmp.eq.s32.totalorder %s16, 1
      %p33 = por %p31, %p32
      %p34 = scmp.ne.s32.totalorder %s26, %s29
      %p35 = scmp.eq.s32.totalorder %s16, 0
      %p36 = por %p34, %p35
      %p37 = scmp.ne.s32.totalorder %s26, %s29
      %p38 = scmp.eq.s32.totalorder %s21, 1
      %p39 = por %p37, %p38
      %p40 = scmp.ne.s32.totalorder %s29, %s30
      %p41 = scmp.eq.s32.totalorder %s21, 0
      %p42 = por %p40, %p41
      %p43 = scmp.ne.s32.totalorder %s29, %s30
      %p44 = scmp.eq.s32.totalorder %s22, 1
      %p45 = por %p43, %p44
      %p47 = scmp.ne.s32.totalorder %s30, %s46
      %p48 = scmp.eq.s32.totalorder %s22, 0
      %p49 = por %p47, %p48
      %s51 = sadd.s32 %s50, 1
      %p54 = scmp.eq.s32.totalorder %s16, 1
      %p55 = scmp.ne.s32.totalorder %s50, %s52
      %p56 = scmp.eq.s32.totalorder %s16, 0
      %p57 = por %p55, %p56
      %p58 = scmp.ne.s32.totalorder %s50, %s52
      %p59 = scmp.eq.s32.totalorder %s21, 1
      %p60 = por %p58, %p59
      %p61 = scmp.ne.s32.totalorder %s52, %s53
      %p62 = scmp.eq.s32.totalorder %s21, 0
      %p63 = por %p61, %p62
      %p64 = scmp.ne.s32.totalorder %s52, %s53
      %p65 = scmp.eq.s32.totalorder %s22, 1
      %p66 = por %p64, %p65
      %p68 = scmp.ne.s32.totalorder %s53, %s67
      %p69 = scmp.eq.s32.totalorder %s22, 0
      %p70 = por %p68, %p69
      %s72 = sadd.s32 %s71, 1
      %p75 = scmp.eq.s32.totalorder %s16, 1
      %p76 = scmp.ne.s32.totalorder %s71, %s73
      %p77 = scmp.eq.s32.totalorder %s16, 0
      %p78 = por %p76, %p77
      %p79 = scmp.ne.s32.totalorder %s71, %s73
      %p80 = scmp.eq.s32.totalorder %s21, 1
      %p81 = por %p79, %p80
      %p82 = scmp.ne.s32.totalorder %s73, %s74
      %p83 = scmp.eq.s32.totalorder %s21, 0
      %p84 = por %p82, %p83
      %p85 = scmp.ne.s32.totalorder %s73, %s74
      %p86 = scmp.eq.s32.totalorder %s22, 1
      %p87 = por %p85, %p86
      %p89 = scmp.ne.s32.totalorder %s74, %s88
      %p90 = scmp.eq.s32.totalorder %s22, 0
      %p91 = por %p89, %p90
      %s93 = sadd.s32 %s92, 1
      %p96 = scmp.eq.s32.totalorder %s16, 1
      %p97 = scmp.ne.s32.totalorder %s92, %s94
      %p98 = scmp.eq.s32.totalorder %s16, 0
      %p99 = por %p97, %p98
      %p100 = scmp.ne.s32.totalorder %s92, %s94
      %p101 = scmp.eq.s32.totalorder %s21, 1
      %p102 = por %p100, %p101
      %p103 = scmp.ne.s32.totalorder %s94, %s95
      %p104 = scmp.eq.s32.totalorder %s21, 0
      %p105 = por %p103, %p104
      %p106 = scmp.ne.s32.totalorder %s94, %s95
      %p107 = scmp.eq.s32.totalorder %s22, 1
      %p108 = por %p106, %p107
      %p110 = scmp.ne.s32.totalorder %s95, %s109
      %p111 = scmp.eq.s32.totalorder %s22, 0
      %p112 = por %p110, %p111
      %s114 = sadd.s32 %s113, 1
      %p117 = scmp.eq.s32.totalorder %s16, 1
      %p118 = scmp.ne.s32.totalorder %s113, %s115
      %p119 = scmp.eq.s32.totalorder %s16, 0
      %p120 = por %p118, %p119
      %p121 = scmp.ne.s32.totalorder %s113, %s115
      %p122 = scmp.eq.s32.totalorder %s21, 1
      %p123 = por %p121, %p122
      %p124 = scmp.ne.s32.totalorder %s115, %s116
      %p125 = scmp.eq.s32.totalorder %s21, 0
      %p126 = por %p124, %p125
      %p127 = scmp.ne.s32.totalorder %s115, %s116
      %p128 = scmp.eq.s32.totalorder %s22, 1
      %p129 = por %p127, %p128
      %p131 = scmp.ne.s32.totalorder %s116, %s130
      %p132 = scmp.eq.s32.totalorder %s22, 0
      %p133 = por %p131, %p132
      %s134 = ssub.s32 %s16, %s23
      %p135 = scmp.eq.s32.totalorder %s134, 0
      %s137 = sadd.s32 %s136, 1
      %s138 = scalar_select %p135, %s136, %s137
      %p141 = pneg %p135
      %p142 = scmp.eq.s32.totalorder %s16, 1
      %p143 = por %p141, %p142
      %p144 = scmp.ne.s32.totalorder %s136, %s139
      %p145 = scmp.eq.s32.totalorder %s16, 0
      %p146 = por %p144, %p145
      %p147 = scmp.ne.s32.totalorder %s136, %s139
      %p148 = scmp.eq.s32.totalorder %s21, 1
      %p149 = por %p147, %p148
      %p150 = scmp.ne.s32.totalorder %s139, %s140
      %p151 = scmp.eq.s32.totalorder %s21, 0
      %p152 = por %p150, %p151
      %p153 = scmp.ne.s32.totalorder %s139, %s140
      %p154 = scmp.eq.s32.totalorder %s22, 1
      %p155 = por %p153, %p154
      %p157 = scmp.ne.s32.totalorder %s140, %s156
      %p158 = scmp.eq.s32.totalorder %s22, 0
      %p159 = por %p157, %p158
      %s160 = ssub.s32 %s16, %s23
      %p161 = scmp.eq.s32.totalorder %s160, 0
      %s163 = sadd.s32 %s162, 1
      %s164 = scalar_select %p161, %s162, %s163
      %p167 = pneg %p161
      %p168 = scmp.eq.s32.totalorder %s16, 1
      %p169 = por %p167, %p168
      %p170 = scmp.ne.s32.totalorder %s162, %s165
      %p171 = scmp.eq.s32.totalorder %s16, 0
      %p172 = por %p170, %p171
      %p173 = scmp.ne.s32.totalorder %s162, %s165
      %p174 = scmp.eq.s32.totalorder %s21, 1
      %p175 = por %p173, %p174
      %p176 = scmp.ne.s32.totalorder %s165, %s166
      %p177 = scmp.eq.s32.totalorder %s21, 0
      %p178 = por %p176, %p177
      %p179 = scmp.ne.s32.totalorder %s165, %s166
      %p180 = scmp.eq.s32.totalorder %s22, 1
      %p181 = por %p179, %p180
      %p183 = scmp.ne.s32.totalorder %s166, %s182
      %p184 = scmp.eq.s32.totalorder %s22, 0
      %p185 = por %p183, %p184
      %p186 = scmp.le.s32.totalorder 1, %s16
      %p187 = scmp.lt.s32.totalorder %s16, 3
      %p188 = pnand %p186, %p187
      %p189 = pneg %p188
      // Predicated region
      $region9: #{encoder_forward.1} parent=5 // pred_check
        _
      $region10: #{encoder_forward.1} parent=5 // pred_check_branch
        %191 = sbr.rel (%p188) target = $region12
      $region11: #{encoder_forward.1} parent=5 // pred_region
        %s192 = ssub.s32 %s16, 1
        // Predicated region
        $region13: #{encoder_forward.1} parent=11 // pred_check
          %p193 = pneg %p63
        $region14: #{encoder_forward.1} parent=11 // pred_check_branch
          %195 = sbr.rel (%p193) target = $region16
        $region15: #{encoder_forward.1} parent=11 // pred_region
          _
        $region16: #{encoder_forward.1} parent=11 // pred_fallthru
          _
        // Predicated region
        $region17: #{encoder_forward.1} parent=11 // pred_check
          %p196 = pneg %p84
        $region18: #{encoder_forward.1} parent=11 // pred_check_branch
          %198 = sbr.rel (%p196) target = $region20
        $region19: #{encoder_forward.1} parent=11 // pred_region
          _
        $region20: #{encoder_forward.1} parent=11 // pred_fallthru
          _
        // Predicated region
        $region21: #{encoder_forward.1} parent=11 // pred_check
          %p199 = pneg %p105
        $region22: #{encoder_forward.1} parent=11 // pred_check_branch
          %201 = sbr.rel (%p199) target = $region24
        $region23: #{encoder_forward.1} parent=11 // pred_region
          _
        $region24: #{encoder_forward.1} parent=11 // pred_fallthru
          _
        // Predicated region
        $region25: #{encoder_forward.1} parent=11 // pred_check
          %p202 = pneg %p126
        $region26: #{encoder_forward.1} parent=11 // pred_check_branch
          %204 = sbr.rel (%p202) target = $region28
        $region27: #{encoder_forward.1} parent=11 // pred_region
          _
        $region28: #{encoder_forward.1} parent=11 // pred_fallthru
          _
      $region12: #{encoder_forward.1} parent=5 // pred_fallthru
        _
      %p205 = scmp.lt.s32.totalorder %s16, 2
      // Predicated region
      $region29: #{encoder_forward.1} parent=5 // pred_check
        %p206 = pneg %p205
      $region30: #{encoder_forward.1} parent=5 // pred_check_branch
        %208 = sbr.rel (%p206) target = $region32
      $region31: #{encoder_forward.1} parent=5 // pred_region
        // Predicated region
        $region33: #{encoder_forward.1} parent=31 // pred_check
          %p209 = pneg %p36
        $region34: #{encoder_forward.1} parent=31 // pred_check_branch
          %211 = sbr.rel (%p209) target = $region36
        $region35: #{encoder_forward.1} parent=31 // pred_region
          %p212 = scmp.lt.s32.totalorder %s16, 1
          %s213 = scalar_select %p212, %s16, 1
          %s214 = smul.addr %s213, 32
          %s215 = smul.addr %s214, 8
          %s216 = scalar_lea.vmem %s0, %s215
        $region36: #{encoder_forward.1} parent=31 // pred_fallthru
          _
      $region32: #{encoder_forward.1} parent=5 // pred_fallthru
        _
      %p217 = scmp.le.s32.totalorder 1, %s16
      %p218 = scmp.lt.s32.totalorder %s16, 3
      %p219 = pnand %p217, %p218
      %p220 = pneg %p219
      // Predicated region
      $region37: #{encoder_forward.1} parent=5 // pred_check
        _
      $region38: #{encoder_forward.1} parent=5 // pred_check_branch
        %222 = sbr.rel (%p219) target = $region40
      $region39: #{encoder_forward.1} parent=5 // pred_region
        %s223 = ssub.s32 %s16, 1
        %p224 = scmp.lt.s32.totalorder %s21, 1
        %s225 = scalar_select %p224, %s21, 1
        %s226 = smul.addr %s225, 32
        %s227 = smul.addr %s226, 8
        %s228 = scalar_lea.vmem %s0, %s227
        %p229 = pneg %p42
        %p230 = pneg %p39
        %p231 = pneg %p63
        %p232 = pneg %p60
        %p233 = pneg %p84
        %p234 = pneg %p81
        %p235 = pneg %p105
        %p236 = pneg %p102
        %p237 = pneg %p126
        %p238 = pneg %p123
        %p239 = pneg %p152
        %p240 = pneg %p149
        %p241 = scmp.lt.s32.totalorder %s21, 1
        %s242 = scalar_select %p241, %s21, 1
        %s243 = smul.addr %s242, 32
        %s244 = smul.addr %s243, 8
        %s245 = scalar_lea.vmem %s5, %s244
        %p246 = pneg %p178
        %p247 = pneg %p175
        %s248 = sand.u32 %s165, 1
        %s249 = scalar_lea.sflag [#allocation6], %s248
        %s250 = sand.u32 %s165, 1
        %s251 = smul.addr %s250, 64
        %s252 = scalar_lea.vmem [#allocation5], %s251
        %p253 = scmp.lt.s32.totalorder %s21, 1
        %s254 = scalar_select %p253, %s21, 1
        %s255 = smul.addr %s254, 32
        %s256 = smul.addr %s255, 8
        %s257 = scalar_lea.vmem %s0, %s256
        %p258 = scmp.lt.s32.totalorder %s21, 1
        %s259 = scalar_select %p258, %s21, 1
        %s260 = smul.addr %s259, 32
        %s261 = smul.addr %s260, 8
        %s262 = scalar_lea.vmem %s5, %s261
        %vm263 = vcmask 31744
        %264 = vst.msk [vmem:[#allocation2] sm:$0xff] %vm263, 0.0
        %265 = vst.msk [vmem:[#allocation2 + $0x8] sm:$0xff] %vm263, 0.0
        %vm266 = vcmask 25600
        %267 = vst.msk [vmem:[#allocation2 + $0x10] sm:$0x3] %vm266, 0.0
        %268 = vst.msk [vmem:[#allocation2 + $0x18] sm:$0xff] %vm263, 0.0
        %269 = vst.msk [vmem:[#allocation2 + $0x20] sm:$0xff] %vm263, 0.0
        %270 = vst.msk [vmem:[#allocation2 + $0x28] sm:$0x3] %vm266, 0.0
        %271 = vst.msk [vmem:[#allocation2 + $0x30] sm:$0xff] %vm263, 0.0
        %272 = vst.msk [vmem:[#allocation2 + $0x38] sm:$0xff] %vm263, 0.0
        %273 = vst.msk [vmem:[#allocation2 + $0x40] sm:$0x3] %vm266, 0.0
        %274 = vst.msk [vmem:[#allocation2 + $0x48] sm:$0xff] %vm263, 0.0
        %275 = vst.msk [vmem:[#allocation2 + $0x50] sm:$0xff] %vm263, 0.0
        %276 = vst.msk [vmem:[#allocation2 + $0x58] sm:$0x3] %vm266, 0.0
        %277 = vst.msk [vmem:[#allocation2 + $0x60] sm:$0xff] %vm263, 0.0
        %278 = vst.msk [vmem:[#allocation2 + $0x68] sm:$0xff] %vm263, 0.0
        %279 = vst.msk [vmem:[#allocation2 + $0x70] sm:$0x3] %vm266, 0.0
        %280 = vst.msk [vmem:[#allocation2 + $0x78] sm:$0xff] %vm263, 0.0
        %281 = vst.msk [vmem:[#allocation2 + $0x80] sm:$0xff] %vm263, 0.0
        %282 = vst.msk [vmem:[#allocation2 + $0x88] sm:$0x3] %vm266, 0.0
        %283 = vst.msk [vmem:[#allocation2 + $0x90] sm:$0xff] %vm263, 0.0
        %284 = vst.msk [vmem:[#allocation2 + $0x98] sm:$0xff] %vm263, 0.0
        %285 = vst.msk [vmem:[#allocation2 + $0xa0] sm:$0x3] %vm266, 0.0
        %286 = vst.msk [vmem:[#allocation2 + $0xa8] sm:$0xff] %vm263, 0.0
        %287 = vst.msk [vmem:[#allocation2 + $0xb0] sm:$0xff] %vm263, 0.0
        %288 = vst.msk [vmem:[#allocation2 + $0xb8] sm:$0x3] %vm266, 0.0
        %289 = vst.msk [vmem:[#allocation2 + $0xc0] sm:$0xff] %vm263, 0.0
        %290 = vst.msk [vmem:[#allocation2 + $0xc8] sm:$0xff] %vm263, 0.0
        %291 = vst.msk [vmem:[#allocation2 + $0xd0] sm:$0x3] %vm266, 0.0
        %292 = vst.msk [vmem:[#allocation2 + $0xd8] sm:$0xff] %vm263, 0.0
        %293 = vst.msk [vmem:[#allocation2 + $0xe0] sm:$0xff] %vm263, 0.0
        %294 = vst.msk [vmem:[#allocation2 + $0xe8] sm:$0x3] %vm266, 0.0
        %295 = vst.msk [vmem:[#allocation2 + $0xf0] sm:$0xff] %vm263, 0.0
        %296 = vst.msk [vmem:[#allocation2 + $0xf8] sm:$0xff] %vm263, 0.0
        %297 = vst.msk [vmem:[#allocation2 + $0x100] sm:$0x3] %vm266, 0.0
        %298 = vst.msk [vmem:[#allocation2 + $0x108] sm:$0xff] %vm263, 0.0
        %299 = vst.msk [vmem:[#allocation2 + $0x110] sm:$0xff] %vm263, 0.0
        %300 = vst.msk [vmem:[#allocation2 + $0x118] sm:$0x3] %vm266, 0.0
        %301 = vst.msk [vmem:[#allocation2 + $0x120] sm:$0xff] %vm263, 0.0
        %302 = vst.msk [vmem:[#allocation2 + $0x128] sm:$0xff] %vm263, 0.0
        %303 = vst.msk [vmem:[#allocation2 + $0x130] sm:$0x3] %vm266, 0.0
        %304 = vst.msk [vmem:[#allocation2 + $0x138] sm:$0xff] %vm263, 0.0
        %305 = vst.msk [vmem:[#allocation2 + $0x140] sm:$0xff] %vm263, 0.0
        %306 = vst.msk [vmem:[#allocation2 + $0x148] sm:$0x3] %vm266, 0.0
        %307 = vst.msk [vmem:[#allocation2 + $0x150] sm:$0xff] %vm263, 0.0
        %308 = vst.msk [vmem:[#allocation2 + $0x158] sm:$0xff] %vm263, 0.0
        %309 = vst.msk [vmem:[#allocation2 + $0x160] sm:$0x3] %vm266, 0.0
        %310 = vst.msk [vmem:[#allocation2 + $0x168] sm:$0xff] %vm263, 0.0
        %311 = vst.msk [vmem:[#allocation2 + $0x170] sm:$0xff] %vm263, 0.0
        %312 = vst.msk [vmem:[#allocation2 + $0x178] sm:$0x3] %vm266, 0.0
        %313 = vst.msk [vmem:[#allocation2 + $0x180] sm:$0xff] %vm263, 0.0
        %314 = vst.msk [vmem:[#allocation2 + $0x188] sm:$0xff] %vm263, 0.0
        %315 = vst.msk [vmem:[#allocation2 + $0x190] sm:$0x3] %vm266, 0.0
        %316 = vst.msk [vmem:[#allocation2 + $0x198] sm:$0xff] %vm263, 0.0
        %317 = vst.msk [vmem:[#allocation2 + $0x1a0] sm:$0xff] %vm263, 0.0
        %318 = vst.msk [vmem:[#allocation2 + $0x1a8] sm:$0x3] %vm266, 0.0
        %v319 = vld [vmem:[%s257] sm:$0xff]
        %v320 = vld [vmem:[%s257 + $0x8] sm:$0xff]
        %v321 = vld [vmem:[%s257 + $0x10] sm:$0xff]
        %v322 = vld [vmem:[%s257 + $0x18] sm:$0xff]
        %v323 = vld [vmem:[%s257 + $0x20] sm:$0xff]
        %v324 = vld [vmem:[%s257 + $0x28] sm:$0xff]
        %v325 = vld [vmem:[%s257 + $0x30] sm:$0xff]
        %v326 = vld [vmem:[%s257 + $0x38] sm:$0xff]
        %v327 = vld [vmem:[%s257 + $0x40] sm:$0xff]
        %v328 = vld [vmem:[%s257 + $0x48] sm:$0xff]
        %v329 = vld [vmem:[%s257 + $0x50] sm:$0xff]
        %v330 = vld [vmem:[%s257 + $0x58] sm:$0xff]
        %v331 = vld [vmem:[%s257 + $0x60] sm:$0xff]
        %v332 = vld [vmem:[%s257 + $0x68] sm:$0xff]
        %v333 = vld [vmem:[%s257 + $0x70] sm:$0xff]
        %v334 = vld [vmem:[%s257 + $0x78] sm:$0xff]
        %v335 = vld [vmem:[%s257 + $0x80] sm:$0xff]
        %v336 = vld [vmem:[%s257 + $0x88] sm:$0xff]
        %v337 = vld [vmem:[%s257 + $0x90] sm:$0xff]
        %v338 = vld [vmem:[%s257 + $0x98] sm:$0xff]
        %v339 = vld [vmem:[%s257 + $0xa0] sm:$0xff]
        %v340 = vld [vmem:[%s257 + $0xa8] sm:$0xff]
        %v341 = vld [vmem:[%s257 + $0xb0] sm:$0xff]
        %v342 = vld [vmem:[%s257 + $0xb8] sm:$0xff]
        %v343 = vld [vmem:[%s257 + $0xc0] sm:$0xff]
        %v344 = vld [vmem:[%s257 + $0xc8] sm:$0xff]
        %v345 = vld [vmem:[%s257 + $0xd0] sm:$0xff]
        %v346 = vld [vmem:[%s257 + $0xd8] sm:$0xff]
        %v347 = vld [vmem:[%s257 + $0xe0] sm:$0xff]
        %v348 = vld [vmem:[%s257 + $0xe8] sm:$0xff]
        %v349 = vld [vmem:[%s257 + $0xf0] sm:$0xff]
        %v350 = vld [vmem:[%s257 + $0xf8] sm:$0xff]
        %s351 = scalar_lea.vmem [#allocation2], 24
        %352 = vst.msk [vmem:[%s351 + $0x1] sm:$0xff] %vm263, %v319
        %353 = vst.msk [vmem:[%s351 + $0x9] sm:$0xff] %vm263, %v320
        %354 = vst.msk [vmem:[%s351 + $0x19] sm:$0xff] %vm263, %v321
        %355 = vst.msk [vmem:[%s351 + $0x21] sm:$0xff] %vm263, %v322
        %356 = vst.msk [vmem:[%s351 + $0x31] sm:$0xff] %vm263, %v323
        %357 = vst.msk [vmem:[%s351 + $0x39] sm:$0xff] %vm263, %v324
        %358 = vst.msk [vmem:[%s351 + $0x49] sm:$0xff] %vm263, %v325
        %359 = vst.msk [vmem:[%s351 + $0x51] sm:$0xff] %vm263, %v326
        %360 = vst.msk [vmem:[%s351 + $0x61] sm:$0xff] %vm263, %v327
        %361 = vst.msk [vmem:[%s351 + $0x69] sm:$0xff] %vm263, %v328
        %362 = vst.msk [vmem:[%s351 + $0x79] sm:$0xff] %vm263, %v329
        %363 = vst.msk [vmem:[%s351 + $0x81] sm:$0xff] %vm263, %v330
        %364 = vst.msk [vmem:[%s351 + $0x91] sm:$0xff] %vm263, %v331
        %365 = vst.msk [vmem:[%s351 + $0x99] sm:$0xff] %vm263, %v332
        %366 = vst.msk [vmem:[%s351 + $0xa9] sm:$0xff] %vm263, %v333
        %367 = vst.msk [vmem:[%s351 + $0xb1] sm:$0xff] %vm263, %v334
        %368 = vst.msk [vmem:[%s351 + $0xc1] sm:$0xff] %vm263, %v335
        %369 = vst.msk [vmem:[%s351 + $0xc9] sm:$0xff] %vm263, %v336
        %370 = vst.msk [vmem:[%s351 + $0xd9] sm:$0xff] %vm263, %v337
        %371 = vst.msk [vmem:[%s351 + $0xe1] sm:$0xff] %vm263, %v338
        %372 = vst.msk [vmem:[%s351 + $0xf1] sm:$0xff] %vm263, %v339
        %373 = vst.msk [vmem:[%s351 + $0xf9] sm:$0xff] %vm263, %v340
        %374 = vst.msk [vmem:[%s351 + $0x109] sm:$0xff] %vm263, %v341
        %375 = vst.msk [vmem:[%s351 + $0x111] sm:$0xff] %vm263, %v342
        %376 = vst.msk [vmem:[%s351 + $0x121] sm:$0xff] %vm263, %v343
        %377 = vst.msk [vmem:[%s351 + $0x129] sm:$0xff] %vm263, %v344
        %378 = vst.msk [vmem:[%s351 + $0x139] sm:$0xff] %vm263, %v345
        %379 = vst.msk [vmem:[%s351 + $0x141] sm:$0xff] %vm263, %v346
        %380 = vst.msk [vmem:[%s351 + $0x151] sm:$0xff] %vm263, %v347
        %381 = vst.msk [vmem:[%s351 + $0x159] sm:$0xff] %vm263, %v348
        %382 = vst.msk [vmem:[%s351 + $0x169] sm:$0xff] %vm263, %v349
        %383 = vst.msk [vmem:[%s351 + $0x171] sm:$0xff] %vm263, %v350
        %v384 = vld [vmem:[%s2] sm:$0x1]
        %v386 = vlaneseq
        %v387 = vshrl.u32 %v386, 7
        %v388 = vsub.s32 0, %v387
        %v389 = vrot.slane %v384, %v388
        %v391 = vld [vmem:[#allocation2] sm:$0xff]
        %v392 = vld [vmem:[#allocation2 + $0x8] sm:$0xff]
        %v393 = vld [vmem:[#allocation2 + $0x18] sm:$0xff]
        %v394 = vld [vmem:[#allocation2 + $0x20] sm:$0xff]
        %v395 = vld [vmem:[#allocation2 + $0x30] sm:$0xff]
        %v396 = vld [vmem:[#allocation2 + $0x38] sm:$0xff]
        %v397 = vld [vmem:[#allocation2 + $0x48] sm:$0xff]
        %v398 = vld [vmem:[#allocation2 + $0x50] sm:$0xff]
        %v399 = vld [vmem:[#allocation2 + $0x60] sm:$0xff]
        %v400 = vld [vmem:[#allocation2 + $0x68] sm:$0xff]
        %v401 = vld [vmem:[#allocation2 + $0x78] sm:$0xff]
        %v402 = vld [vmem:[#allocation2 + $0x80] sm:$0xff]
        %v403 = vld [vmem:[#allocation2 + $0x90] sm:$0xff]
        %v404 = vld [vmem:[#allocation2 + $0x98] sm:$0xff]
        %v405 = vld [vmem:[#allocation2 + $0xa8] sm:$0xff]
        %v406 = vld [vmem:[#allocation2 + $0xb0] sm:$0xff]
        %v407 = vld [vmem:[#allocation2 + $0xc0] sm:$0xff]
        %v408 = vld [vmem:[#allocation2 + $0xc8] sm:$0xff]
        %v409 = vld [vmem:[#allocation2 + $0xd8] sm:$0xff]
        %v410 = vld [vmem:[#allocation2 + $0xe0] sm:$0xff]
        %v411 = vld [vmem:[#allocation2 + $0xf0] sm:$0xff]
        %v412 = vld [vmem:[#allocation2 + $0xf8] sm:$0xff]
        %v413 = vld [vmem:[#allocation2 + $0x108] sm:$0xff]
        %v414 = vld [vmem:[#allocation2 + $0x110] sm:$0xff]
        %v415 = vld [vmem:[#allocation2 + $0x120] sm:$0xff]
        %v416 = vld [vmem:[#allocation2 + $0x128] sm:$0xff]
        %v417 = vld [vmem:[#allocation2 + $0x138] sm:$0xff]
        %v418 = vld [vmem:[#allocation2 + $0x140] sm:$0xff]
        %v419 = vld [vmem:[#allocation2 + $0x150] sm:$0xff]
        %v420 = vld [vmem:[#allocation2 + $0x158] sm:$0xff]
        %v421 = vld [vmem:[#allocation2 + $0x168] sm:$0xff]
        %v422 = vld [vmem:[#allocation2 + $0x170] sm:$0xff]
        %v423 = vld [vmem:[%s1] sm:$0xf]
        %v425 = vsel %vm263, %v391, 0
        %v428 = vsel %vm263, %v392, 0
        %v431 = vsel %vm263, %v393, 0
        %v434 = vsel %vm263, %v394, 0
        %v437 = vsel %vm263, %v395, 0
        %v440 = vsel %vm263, %v396, 0
        %v443 = vsel %vm263, %v397, 0
        %v446 = vsel %vm263, %v398, 0
        %v449 = vsel %vm263, %v399, 0
        %v452 = vsel %vm263, %v400, 0
        %v455 = vsel %vm263, %v401, 0
        %v458 = vsel %vm263, %v402, 0
        %v461 = vsel %vm263, %v403, 0
        %v464 = vsel %vm263, %v404, 0
        %v467 = vsel %vm263, %v405, 0
        %v470 = vsel %vm263, %v406, 0
        %v473 = vsel %vm263, %v407, 0
        %v476 = vsel %vm263, %v408, 0
        %v479 = vsel %vm263, %v409, 0
        %v482 = vsel %vm263, %v410, 0
        %v485 = vsel %vm263, %v411, 0
        %v488 = vsel %vm263, %v412, 0
        %v491 = vsel %vm263, %v413, 0
        %v494 = vsel %vm263, %v414, 0
        %v497 = vsel %vm263, %v415, 0
        %v500 = vsel %vm263, %v416, 0
        %v503 = vsel %vm263, %v417, 0
        %v506 = vsel %vm263, %v418, 0
        %v509 = vsel %vm263, %v419, 0
        %v512 = vsel %vm263, %v420, 0
        %v515 = vsel %vm263, %v421, 0
        %v518 = vsel %vm263, %v422, 0
        %vm520 = vcmask 1043456
        %v522 = vsel %vm520, %v423, 0
        %524 = vmatprep.subr.mxu0 0.0
        %525 = vmatpush1.msra.mxu0 %v522
        %526 = vmatprep.subr.mxu0 0.0
        %527 = vmatpush1.msra.mxu0 0.0
        %528 = vmatprep.subr.mxu0 0.0
        %529 = vmatpush1.msra.mxu0 0.0
        %530 = vmatprep.subr.mxu0 0.0
        %531 = vmatpush1.msra.mxu0 0.0
        %532 = vmatprep.subr.mxu0 0.0
        %533 = vmatpush1.msra.mxu0 0.0
        %534 = vmatprep.subr.mxu0 0.0
        %535 = vmatpush1.msra.mxu0 0.0
        %536 = vmatprep.subr.mxu0 0.0
        %537 = vmatpush1.msra.mxu0 0.0
        %538 = vmatprep.subr.mxu0 0.0
        %539 = vmatpush1.msra.mxu0 0.0
        %540 = vmatprep.subr.mxu0 0.0
        %541 = vmatpush1.msra.mxu0 0.0
        %542 = vmatprep.subr.mxu0 0.0
        %543 = vmatpush1.msra.mxu0 0.0
        %544 = vmatprep.subr.mxu0 0.0
        %545 = vmatpush1.msra.mxu0 0.0
        %546 = vmatprep.subr.mxu0 0.0
        %547 = vmatpush1.msra.mxu0 0.0
        %548 = vmatprep.subr.mxu0 0.0
        %549 = vmatpush1.msra.mxu0 0.0
        %550 = vmatprep.subr.mxu0 0.0
        %551 = vmatpush1.msra.mxu0 0.0
        %552 = vmatprep.subr.mxu0 0.0
        %553 = vmatpush1.msra.mxu0 0.0
        %554 = vmatprep.subr.mxu0 0.0
        %555 = vmatpush1.msra.mxu0 0.0
        %556 = vmatprep.subr.mxu0 0.0
        %557 = vmatpush1.msra.mxu0 0.0
        %558 = vmatprep.subr.mxu0 0.0
        %559 = vmatpush1.msra.mxu0 0.0
        %560 = vmatprep.subr.mxu0 0.0
        %561 = vmatpush1.msra.mxu0 0.0
        %562 = vmatprep.subr.mxu0 0.0
        %563 = vmatpush1.msra.mxu0 0.0
        %564 = vmatprep.subr.mxu0 0.0
        %565 = vmatpush1.msra.mxu0 0.0
        %566 = vmatprep.subr.mxu0 0.0
        %567 = vmatpush1.msra.mxu0 0.0
        %568 = vmatprep.subr.mxu0 0.0
        %569 = vmatpush1.msra.mxu0 0.0
        %570 = vmatprep.subr.mxu0 0.0
        %571 = vmatpush1.msra.mxu0 0.0
        %572 = vmatprep.subr.mxu0 0.0
        %573 = vmatpush1.msra.mxu0 0.0
        %574 = vmatprep.subr.mxu0 0.0
        %575 = vmatpush1.msra.mxu0 0.0
        %576 = vmatprep.subr.mxu0 0.0
        %577 = vmatpush1.msra.mxu0 0.0
        %578 = vmatprep.subr.mxu0 0.0
        %579 = vmatpush1.msra.mxu0 0.0
        %580 = vmatprep.subr.mxu0 0.0
        %581 = vmatpush1.msra.mxu0 0.0
        %582 = vmatprep.subr.mxu0 0.0
        %583 = vmatpush1.msra.mxu0 0.0
        %584 = vmatprep.subr.mxu0 0.0
        %585 = vmatpush1.msra.mxu0 0.0
        %586 = vmatprep.subr.mxu0 0.0
        %587 = vmatpush1.msra.mxu0 0.0
        %588 = vmatprep.mubr.f32.mxu0 0.0
        %589 = vmatmul.mubr.f32.gmra.mrb[0].mxu0 %v425
        %v590 = vpop.f32.mrb[0].mxu0
        %v591 = vadd.f32 0.0, %v590
        %v592 = vpop.f32.mrb[0].mxu0
        %593 = vmatprep.mubr.f32.mxu0 0.0
        %594 = vmatmul.mubr.f32.gmra.mrb[0].mxu0 %v428
        %v595 = vpop.f32.mrb[0].mxu0
        %v596 = vadd.f32 0.0, %v595
        %v597 = vpop.f32.mrb[0].mxu0
        %598 = vmatprep.mubr.f32.mxu0 0.0
        %599 = vmatmul.mubr.f32.gmra.mrb[0].mxu0 %v431
        %v600 = vpop.f32.mrb[0].mxu0
        %v601 = vadd.f32 0.0, %v600
        %v602 = vpop.f32.mrb[0].mxu0
        %603 = vmatprep.mubr.f32.mxu0 0.0
        %604 = vmatmul.mubr.f32.gmra.mrb[0].mxu0 %v434
        %v605 = vpop.f32.mrb[0].mxu0
        %v606 = vadd.f32 0.0, %v605
        %v607 = vpop.f32.mrb[0].mxu0
        %608 = vmatprep.mubr.f32.mxu0 0.0
        %609 = vmatmul.mubr.f32.gmra.mrb[0].mxu0 %v437
        %v610 = vpop.f32.mrb[0].mxu0
        %v611 = vadd.f32 0.0, %v610
        %v612 = vpop.f32.mrb[0].mxu0
        %613 = vmatprep.mubr.f32.mxu0 0.0
        %614 = vmatmul.mubr.f32.gmra.mrb[0].mxu0 %v440
        %v615 = vpop.f32.mrb[0].mxu0
        %v616 = vadd.f32 0.0, %v615
        %v617 = vpop.f32.mrb[0].mxu0
        %618 = vmatprep.mubr.f32.mxu0 0.0
        %619 = vmatmul.mubr.f32.gmra.mrb[0].mxu0 %v443
        %v620 = vpop.f32.mrb[0].mxu0
        %v621 = vadd.f32 0.0, %v620
        %v622 = vpop.f32.mrb[0].mxu0
        %623 = vmatprep.mubr.f32.mxu0 0.0
        %624 = vmatmul.mubr.f32.gmra.mrb[0].mxu0 %v446
        %v625 = vpop.f32.mrb[0].mxu0
        %v626 = vadd.f32 0.0, %v625
        %v627 = vpop.f32.mrb[0].mxu0
        %628 = vmatprep.mubr.f32.mxu0 0.0
        %629 = vmatmul.mubr.f32.gmra.mrb[0].mxu0 %v449
        %v630 = vpop.f32.mrb[0].mxu0
        %v631 = vadd.f32 0.0, %v630
        %v632 = vpop.f32.mrb[0].mxu0
        %633 = vmatprep.mubr.f32.mxu0 0.0
        %634 = vmatmul.mubr.f32.gmra.mrb[0].mxu0 %v452
        %v635 = vpop.f32.mrb[0].mxu0
        %v636 = vadd.f32 0.0, %v635
        %v637 = vpop.f32.mrb[0].mxu0
        %638 = vmatprep.mubr.f32.mxu0 0.0
        %639 = vmatmul.mubr.f32.gmra.mrb[0].mxu0 %v455
        %v640 = vpop.f32.mrb[0].mxu0
        %v641 = vadd.f32 0.0, %v640
        %v642 = vpop.f32.mrb[0].mxu0
        %643 = vmatprep.mubr.f32.mxu0 0.0
        %644 = vmatmul.mubr.f32.gmra.mrb[0].mxu0 %v458
        %v645 = vpop.f32.mrb[0].mxu0
        %v646 = vadd.f32 0.0, %v645
        %v647 = vpop.f32.mrb[0].mxu0
        %648 = vmatprep.mubr.f32.mxu0 0.0
        %649 = vmatmul.mubr.f32.gmra.mrb[0].mxu0 %v461
        %v650 = vpop.f32.mrb[0].mxu0
        %v651 = vadd.f32 0.0, %v650
        %v652 = vpop.f32.mrb[0].mxu0
        %653 = vmatprep.mubr.f32.mxu0 0.0
        %654 = vmatmul.mubr.f32.gmra.mrb[0].mxu0 %v464
        %v655 = vpop.f32.mrb[0].mxu0
        %v656 = vadd.f32 0.0, %v655
        %v657 = vpop.f32.mrb[0].mxu0
        %658 = vmatprep.mubr.f32.mxu0 0.0
        %659 = vmatmul.mubr.f32.gmra.mrb[0].mxu0 %v467
        %v660 = vpop.f32.mrb[0].mxu0
        %v661 = vadd.f32 0.0, %v660
        %v662 = vpop.f32.mrb[0].mxu0
        %663 = vmatprep.mubr.f32.mxu0 0.0
        %664 = vmatmul.mubr.f32.gmra.mrb[0].mxu0 %v470
        %v665 = vpop.f32.mrb[0].mxu0
        %v666 = vadd.f32 0.0, %v665
        %v667 = vpop.f32.mrb[0].mxu0
        %668 = vmatprep.mubr.f32.mxu0 0.0
        %669 = vmatmul.mubr.f32.gmra.mrb[0].mxu0 %v473
        %v670 = vpop.f32.mrb[0].mxu0
        %v671 = vadd.f32 0.0, %v670
        %v672 = vpop.f32.mrb[0].mxu0
        %673 = vmatprep.mubr.f32.mxu0 0.0
        %674 = vmatmul.mubr.f32.gmra.mrb[0].mxu0 %v476
        %v675 = vpop.f32.mrb[0].mxu0
        %v676 = vadd.f32 0.0, %v675
        %v677 = vpop.f32.mrb[0].mxu0
        %678 = vmatprep.mubr.f32.mxu0 0.0
        %679 = vmatmul.mubr.f32.gmra.mrb[0].mxu0 %v479
        %v680 = vpop.f32.mrb[0].mxu0
        %v681 = vadd.f32 0.0, %v680
        %v682 = vpop.f32.mrb[0].mxu0
        %683 = vmatprep.mubr.f32.mxu0 0.0
        %684 = vmatmul.mubr.f32.gmra.mrb[0].mxu0 %v482
        %v685 = vpop.f32.mrb[0].mxu0
        %v686 = vadd.f32 0.0, %v685
        %v687 = vpop.f32.mrb[0].mxu0
        %688 = vmatprep.mubr.f32.mxu0 0.0
        %689 = vmatmul.mubr.f32.gmra.mrb[0].mxu0 %v485
        %v690 = vpop.f32.mrb[0].mxu0
        %v691 = vadd.f32 0.0, %v690
        %v692 = vpop.f32.mrb[0].mxu0
        %693 = vmatprep.mubr.f32.mxu0 0.0
        %694 = vmatmul.mubr.f32.gmra.mrb[0].mxu0 %v488
        %v695 = vpop.f32.mrb[0].mxu0
        %v696 = vadd.f32 0.0, %v695
        %v697 = vpop.f32.mrb[0].mxu0
        %698 = vmatprep.mubr.f32.mxu0 0.0
        %699 = vmatmul.mubr.f32.gmra.mrb[0].mxu0 %v491
        %v700 = vpop.f32.mrb[0].mxu0
        %v701 = vadd.f32 0.0, %v700
        %v702 = vpop.f32.mrb[0].mxu0
        %703 = vmatprep.mubr.f32.mxu0 0.0
        %704 = vmatmul.mubr.f32.gmra.mrb[0].mxu0 %v494
        %v705 = vpop.f32.mrb[0].mxu0
        %v706 = vadd.f32 0.0, %v705
        %v707 = vpop.f32.mrb[0].mxu0
        %708 = vmatprep.mubr.f32.mxu0 0.0
        %709 = vmatmul.mubr.f32.gmra.mrb[0].mxu0 %v497
        %v710 = vpop.f32.mrb[0].mxu0
        %v711 = vadd.f32 0.0, %v710
        %v712 = vpop.f32.mrb[0].mxu0
        %713 = vmatprep.mubr.f32.mxu0 0.0
        %714 = vmatmul.mubr.f32.gmra.mrb[0].mxu0 %v500
        %v715 = vpop.f32.mrb[0].mxu0
        %v716 = vadd.f32 0.0, %v715
        %v717 = vpop.f32.mrb[0].mxu0
        %718 = vmatprep.mubr.f32.mxu0 0.0
        %719 = vmatmul.mubr.f32.gmra.mrb[0].mxu0 %v503
        %v720 = vpop.f32.mrb[0].mxu0
        %v721 = vadd.f32 0.0, %v720
        %v722 = vpop.f32.mrb[0].mxu0
        %723 = vmatprep.mubr.f32.mxu0 0.0
        %724 = vmatmul.mubr.f32.gmra.mrb[0].mxu0 %v506
        %v725 = vpop.f32.mrb[0].mxu0
        %v726 = vadd.f32 0.0, %v725
        %v727 = vpop.f32.mrb[0].mxu0
        %728 = vmatprep.mubr.f32.mxu0 0.0
        %729 = vmatmul.mubr.f32.gmra.mrb[0].mxu0 %v509
        %v730 = vpop.f32.mrb[0].mxu0
        %v731 = vadd.f32 0.0, %v730
        %v732 = vpop.f32.mrb[0].mxu0
        %733 = vmatprep.mubr.f32.mxu0 0.0
        %734 = vmatmul.mubr.f32.gmra.mrb[0].mxu0 %v512
        %v735 = vpop.f32.mrb[0].mxu0
        %v736 = vadd.f32 0.0, %v735
        %v737 = vpop.f32.mrb[0].mxu0
        %738 = vmatprep.mubr.f32.mxu0 0.0
        %739 = vmatmul.mubr.f32.gmra.mrb[0].mxu0 %v515
        %v740 = vpop.f32.mrb[0].mxu0
        %v741 = vadd.f32 0.0, %v740
        %v742 = vpop.f32.mrb[0].mxu0
        %743 = vmatprep.mubr.f32.mxu0 0.0
        %744 = vmatmul.mubr.f32.gmra.mrb[0].mxu0 %v518
        %v745 = vpop.f32.mrb[0].mxu0
        %v746 = vadd.f32 0.0, %v745
        %v747 = vpop.f32.mrb[0].mxu0
        %748 = vdwg.mxu0
        %v749 = vadd.f32 %v389, %v591
        %v750 = vadd.f32 %v389, %v596
        %v751 = vadd.f32 %v389, %v601
        %v752 = vadd.f32 %v389, %v606
        %v753 = vadd.f32 %v389, %v611
        %v754 = vadd.f32 %v389, %v616
        %v755 = vadd.f32 %v389, %v621
        %v756 = vadd.f32 %v389, %v626
        %v757 = vadd.f32 %v389, %v631
        %v758 = vadd.f32 %v389, %v636
        %v759 = vadd.f32 %v389, %v641
        %v760 = vadd.f32 %v389, %v646
        %v761 = vadd.f32 %v389, %v651
        %v762 = vadd.f32 %v389, %v656
        %v763 = vadd.f32 %v389, %v661
        %v764 = vadd.f32 %v389, %v666
        %v765 = vadd.f32 %v389, %v671
        %v766 = vadd.f32 %v389, %v676
        %v767 = vadd.f32 %v389, %v681
        %v768 = vadd.f32 %v389, %v686
        %v769 = vadd.f32 %v389, %v691
        %v770 = vadd.f32 %v389, %v696
        %v771 = vadd.f32 %v389, %v701
        %v772 = vadd.f32 %v389, %v706
        %v773 = vadd.f32 %v389, %v711
        %v774 = vadd.f32 %v389, %v716
        %v775 = vadd.f32 %v389, %v721
        %v776 = vadd.f32 %v389, %v726
        %v777 = vadd.f32 %v389, %v731
        %v778 = vadd.f32 %v389, %v736
        %v779 = vadd.f32 %v389, %v741
        %v780 = vadd.f32 %v389, %v746
        %v781 = vld [vmem:[#allocation2 + $0x1] sm:$0xff]
        %v782 = vld [vmem:[#allocation2 + $0x9] sm:$0xff]
        %v783 = vld [vmem:[#allocation2 + $0x19] sm:$0xff]
        %v784 = vld [vmem:[#allocation2 + $0x21] sm:$0xff]
        %v785 = vld [vmem:[#allocation2 + $0x31] sm:$0xff]
        %v786 = vld [vmem:[#allocation2 + $0x39] sm:$0xff]
        %v787 = vld [vmem:[#allocation2 + $0x49] sm:$0xff]
        %v788 = vld [vmem:[#allocation2 + $0x51] sm:$0xff]
        %v789 = vld [vmem:[#allocation2 + $0x61] sm:$0xff]
        %v790 = vld [vmem:[#allocation2 + $0x69] sm:$0xff]
        %v791 = vld [vmem:[#allocation2 + $0x79] sm:$0xff]
        %v792 = vld [vmem:[#allocation2 + $0x81] sm:$0xff]
        %v793 = vld [vmem:[#allocation2 + $0x91] sm:$0xff]
        %v794 = vld [vmem:[#allocation2 + $0x99] sm:$0xff]
        %v795 = vld [vmem:[#allocation2 + $0xa9] sm:$0xff]
        %v796 = vld [vmem:[#allocation2 + $0xb1] sm:$0xff]
        %v797 = vld [vmem:[#allocation2 + $0xc1] sm:$0xff]
        %v798 = vld [vmem:[#allocation2 + $0xc9] sm:$0xff]
        %v799 = vld [vmem:[#allocation2 + $0xd9] sm:$0xff]
        %v800 = vld [vmem:[#allocation2 + $0xe1] sm:$0xff]
        %v801 = vld [vmem:[#allocation2 + $0xf1] sm:$0xff]
        %v802 = vld [vmem:[#allocation2 + $0xf9] sm:$0xff]
        %v803 = vld [vmem:[#allocation2 + $0x109] sm:$0xff]
        %v804 = vld [vmem:[#allocation2 + $0x111] sm:$0xff]
        %v805 = vld [vmem:[#allocation2 + $0x121] sm:$0xff]
        %v806 = vld [vmem:[#allocation2 + $0x129] sm:$0xff]
        %v807 = vld [vmem:[#allocation2 + $0x139] sm:$0xff]
        %v808 = vld [vmem:[#allocation2 + $0x141] sm:$0xff]
        %v809 = vld [vmem:[#allocation2 + $0x151] sm:$0xff]
        %v810 = vld [vmem:[#allocation2 + $0x159] sm:$0xff]
        %v811 = vld [vmem:[#allocation2 + $0x169] sm:$0xff]
        %v812 = vld [vmem:[#allocation2 + $0x171] sm:$0xff]
        %v813 = vld [vmem:[%s1 + $0x4] sm:$0xf]
        %v815 = vsel %vm263, %v781, 0
        %v818 = vsel %vm263, %v782, 0
        %v821 = vsel %vm263, %v783, 0
        %v824 = vsel %vm263, %v784, 0
        %v827 = vsel %vm263, %v785, 0
        %v830 = vsel %vm263, %v786, 0
        %v833 = vsel %vm263, %v787, 0
        %v836 = vsel %vm263, %v788, 0
        %v839 = vsel %vm263, %v789, 0
        %v842 = vsel %vm263, %v790, 0
        %v845 = vsel %vm263, %v791, 0
        %v848 = vsel %vm263, %v792, 0
        %v851 = vsel %vm263, %v793, 0
        %v854 = vsel %vm263, %v794, 0
        %v857 = vsel %vm263, %v795, 0
        %v860 = vsel %vm263, %v796, 0
        %v863 = vsel %vm263, %v797, 0
        %v866 = vsel %vm263, %v798, 0
        %v869 = vsel %vm263, %v799, 0
        %v872 = vsel %vm263, %v800, 0
        %v875 = vsel %vm263, %v801, 0
        %v878 = vsel %vm263, %v802, 0
        %v881 = vsel %vm263, %v803, 0
        %v884 = vsel %vm263, %v804, 0
        %v887 = vsel %vm263, %v805, 0
        %v890 = vsel %vm263, %v806, 0
        %v893 = vsel %vm263, %v807, 0
        %v896 = vsel %vm263, %v808, 0
        %v899 = vsel %vm263, %v809, 0
        %v902 = vsel %vm263, %v810, 0
        %v905 = vsel %vm263, %v811, 0
        %v908 = vsel %vm263, %v812, 0
        %v911 = vsel %vm520, %v813, 0
        %913 = vmatprep.subr.mxu0 0.0
        %914 = vmatpush1.msra.mxu0 %v911
        %915 = vmatprep.subr.mxu0 0.0
        %916 = vmatpush1.msra.mxu0 0.0
        %917 = vmatprep.subr.mxu0 0.0
        %918 = vmatpush1.msra.mxu0 0.0
        %919 = vmatprep.subr.mxu0 0.0
        %920 = vmatpush1.msra.mxu0 0.0
        %921 = vmatprep.subr.mxu0 0.0
        %922 = vmatpush1.msra.mxu0 0.0
        %923 = vmatprep.subr.mxu0 0.0
        %924 = vmatpush1.msra.mxu0 0.0
        %925 = vmatprep.subr.mxu0 0.0
        %926 = vmatpush1.msra.mxu0 0.0
        %927 = vmatprep.subr.mxu0 0.0
        %928 = vmatpush1.msra.mxu0 0.0
        %929 = vmatprep.subr.mxu0 0.0
        %930 = vmatpush1.msra.mxu0 0.0
        %931 = vmatprep.subr.mxu0 0.0
        %932 = vmatpush1.msra.mxu0 0.0
        %933 = vmatprep.subr.mxu0 0.0
        %934 = vmatpush1.msra.mxu0 0.0
        %935 = vmatprep.subr.mxu0 0.0
        %936 = vmatpush1.msra.mxu0 0.0
        %937 = vmatprep.subr.mxu0 0.0
        %938 = vmatpush1.msra.mxu0 0.0
        %939 = vmatprep.subr.mxu0 0.0
        %940 = vmatpush1.msra.mxu0 0.0
        %941 = vmatprep.subr.mxu0 0.0
        %942 = vmatpush1.msra.mxu0 0.0
        %943 = vmatprep.subr.mxu0 0.0
        %944 = vmatpush1.msra.mxu0 0.0
        %945 = vmatprep.subr.mxu0 0.0
        %946 = vmatpush1.msra.mxu0 0.0
        %947 = vmatprep.subr.mxu0 0.0
        %948 = vmatpush1.msra.mxu0 0.0
        %949 = vmatprep.subr.mxu0 0.0
        %950 = vmatpush1.msra.mxu0 0.0
        %951 = vmatprep.subr.mxu0 0.0
        %952 = vmatpush1.msra.mxu0 0.0
        %953 = vmatprep.subr.mxu0 0.0
        %954 = vmatpush1.msra.mxu0 0.0
        %955 = vmatprep.subr.mxu0 0.0
        %956 = vmatpush1.msra.mxu0 0.0
        %957 = vmatprep.subr.mxu0 0.0
        %958 = vmatpush1.msra.mxu0 0.0
        %959 = vmatprep.subr.mxu0 0.0
        %960 = vmatpush1.msra.mxu0 0.0
        %961 = vmatprep.subr.mxu0 0.0
        %962 = vmatpush1.msra.mxu0 0.0
        %963 = vmatprep.subr.mxu0 0.0
        %964 = vmatpush1.msra.mxu0 0.0
        %965 = vmatprep.subr.mxu0 0.0
        %966 = vmatpush1.msra.mxu0 0.0
        %967 = vmatprep.subr.mxu0 0.0
        %968 = vmatpush1.msra.mxu0 0.0
        %969 = vmatprep.subr.mxu0 0.0
        %970 = vmatpush1.msra.mxu0 0.0
        %971 = vmatprep.subr.mxu0 0.0
        %972 = vmatpush1.msra.mxu0 0.0
        %973 = vmatprep.subr.mxu0 0.0
        %974 = vmatpush1.msra.mxu0 0.0
        %975 = vmatprep.subr.mxu0 0.0
        %976 = vmatpush1.msra.mxu0 0.0
        %977 = vmatprep.mubr.f32.mxu0 0.0
        %978 = vmatmul.mubr.f32.gmra.mrb[0].mxu0 %v815
        %v979 = vpop.f32.mrb[0].mxu0
        %v980 = vadd.f32 0.0, %v979
        %v981 = vpop.f32.mrb[0].mxu0
        %982 = vmatprep.mubr.f32.mxu0 0.0
        %983 = vmatmul.mubr.f32.gmra.mrb[0].mxu0 %v818
        %v984 = vpop.f32.mrb[0].mxu0
        %v985 = vadd.f32 0.0, %v984
        %v986 = vpop.f32.mrb[0].mxu0
        %987 = vmatprep.mubr.f32.mxu0 0.0
        %988 = vmatmul.mubr.f32.gmra.mrb[0].mxu0 %v821
        %v989 = vpop.f32.mrb[0].mxu0
        %v990 = vadd.f32 0.0, %v989
        %v991 = vpop.f32.mrb[0].mxu0
        %992 = vmatprep.mubr.f32.mxu0 0.0
        %993 = vmatmul.mubr.f32.gmra.mrb[0].mxu0 %v824
        %v994 = vpop.f32.mrb[0].mxu0
        %v995 = vadd.f32 0.0, %v994
        %v996 = vpop.f32.mrb[0].mxu0
        %997 = vmatprep.mubr.f32.mxu0 0.0
        %998 = vmatmul.mubr.f32.gmra.mrb[0].mxu0 %v827
        %v999 = vpop.f32.mrb[0].mxu0
        %v1000 = vadd.f32 0.0, %v999
        %v1001 = vpop.f32.mrb[0].mxu0
        %1002 = vmatprep.mubr.f32.mxu0 0.0
        %1003 = vmatmul.mubr.f32.gmra.mrb[0].mxu0 %v830
        %v1004 = vpop.f32.mrb[0].mxu0
        %v1005 = vadd.f32 0.0, %v1004
        %v1006 = vpop.f32.mrb[0].mxu0
        %1007 = vmatprep.mubr.f32.mxu0 0.0
        %1008 = vmatmul.mubr.f32.gmra.mrb[0].mxu0 %v833
        %v1009 = vpop.f32.mrb[0].mxu0
        %v1010 = vadd.f32 0.0, %v1009
        %v1011 = vpop.f32.mrb[0].mxu0
        %1012 = vmatprep.mubr.f32.mxu0 0.0
        %1013 = vmatmul.mubr.f32.gmra.mrb[0].mxu0 %v836
        %v1014 = vpop.f32.mrb[0].mxu0
        %v1015 = vadd.f32 0.0, %v1014
        %v1016 = vpop.f32.mrb[0].mxu0
        %1017 = vmatprep.mubr.f32.mxu0 0.0
        %1018 = vmatmul.mubr.f32.gmra.mrb[0].mxu0 %v839
        %v1019 = vpop.f32.mrb[0].mxu0
        %v1020 = vadd.f32 0.0, %v1019
        %v1021 = vpop.f32.mrb[0].mxu0
        %1022 = vmatprep.mubr.f32.mxu0 0.0
        %1023 = vmatmul.mubr.f32.gmra.mrb[0].mxu0 %v842
        %v1024 = vpop.f32.mrb[0].mxu0
        %v1025 = vadd.f32 0.0, %v1024
        %v1026 = vpop.f32.mrb[0].mxu0
        %1027 = vmatprep.mubr.f32.mxu0 0.0
        %1028 = vmatmul.mubr.f32.gmra.mrb[0].mxu0 %v845
        %v1029 = vpop.f32.mrb[0].mxu0
        %v1030 = vadd.f32 0.0, %v1029
        %v1031 = vpop.f32.mrb[0].mxu0
        %1032 = vmatprep.mubr.f32.mxu0 0.0
        %1033 = vmatmul.mubr.f32.gmra.mrb[0].mxu0 %v848
        %v1034 = vpop.f32.mrb[0].mxu0
        %v1035 = vadd.f32 0.0, %v1034
        %v1036 = vpop.f32.mrb[0].mxu0
        %1037 = vmatprep.mubr.f32.mxu0 0.0
        %1038 = vmatmul.mubr.f32.gmra.mrb[0].mxu0 %v851
        %v1039 = vpop.f32.mrb[0].mxu0
        %v1040 = vadd.f32 0.0, %v1039
        %v1041 = vpop.f32.mrb[0].mxu0
        %1042 = vmatprep.mubr.f32.mxu0 0.0
        %1043 = vmatmul.mubr.f32.gmra.mrb[0].mxu0 %v854
        %v1044 = vpop.f32.mrb[0].mxu0
        %v1045 = vadd.f32 0.0, %v1044
        %v1046 = vpop.f32.mrb[0].mxu0
        %1047 = vmatprep.mubr.f32.mxu0 0.0
        %1048 = vmatmul.mubr.f32.gmra.mrb[0].mxu0 %v857
        %v1049 = vpop.f32.mrb[0].mxu0
        %v1050 = vadd.f32 0.0, %v1049
        %v1051 = vpop.f32.mrb[0].mxu0
        %1052 = vmatprep.mubr.f32.mxu0 0.0
        %1053 = vmatmul.mubr.f32.gmra.mrb[0].mxu0 %v860
        %v1054 = vpop.f32.mrb[0].mxu0
        %v1055 = vadd.f32 0.0, %v1054
        %v1056 = vpop.f32.mrb[0].mxu0
        %1057 = vmatprep.mubr.f32.mxu0 0.0
        %1058 = vmatmul.mubr.f32.gmra.mrb[0].mxu0 %v863
        %v1059 = vpop.f32.mrb[0].mxu0
        %v1060 = vadd.f32 0.0, %v1059
        %v1061 = vpop.f32.mrb[0].mxu0
        %1062 = vmatprep.mubr.f32.mxu0 0.0
        %1063 = vmatmul.mubr.f32.gmra.mrb[0].mxu0 %v866
        %v1064 = vpop.f32.mrb[0].mxu0
        %v1065 = vadd.f32 0.0, %v1064
        %v1066 = vpop.f32.mrb[0].mxu0
        %1067 = vmatprep.mubr.f32.mxu0 0.0
        %1068 = vmatmul.mubr.f32.gmra.mrb[0].mxu0 %v869
        %v1069 = vpop.f32.mrb[0].mxu0
        %v1070 = vadd.f32 0.0, %v1069
        %v1071 = vpop.f32.mrb[0].mxu0
        %1072 = vmatprep.mubr.f32.mxu0 0.0
        %1073 = vmatmul.mubr.f32.gmra.mrb[0].mxu0 %v872
        %v1074 = vpop.f32.mrb[0].mxu0
        %v1075 = vadd.f32 0.0, %v1074
        %v1076 = vpop.f32.mrb[0].mxu0
        %1077 = vmatprep.mubr.f32.mxu0 0.0
        %1078 = vmatmul.mubr.f32.gmra.mrb[0].mxu0 %v875
        %v1079 = vpop.f32.mrb[0].mxu0
        %v1080 = vadd.f32 0.0, %v1079
        %v1081 = vpop.f32.mrb[0].mxu0
        %1082 = vmatprep.mubr.f32.mxu0 0.0
        %1083 = vmatmul.mubr.f32.gmra.mrb[0].mxu0 %v878
        %v1084 = vpop.f32.mrb[0].mxu0
        %v1085 = vadd.f32 0.0, %v1084
        %v1086 = vpop.f32.mrb[0].mxu0
        %1087 = vmatprep.mubr.f32.mxu0 0.0
        %1088 = vmatmul.mubr.f32.gmra.mrb[0].mxu0 %v881
        %v1089 = vpop.f32.mrb[0].mxu0
        %v1090 = vadd.f32 0.0, %v1089
        %v1091 = vpop.f32.mrb[0].mxu0
        %1092 = vmatprep.mubr.f32.mxu0 0.0
        %1093 = vmatmul.mubr.f32.gmra.mrb[0].mxu0 %v884
        %v1094 = vpop.f32.mrb[0].mxu0
        %v1095 = vadd.f32 0.0, %v1094
        %v1096 = vpop.f32.mrb[0].mxu0
        %1097 = vmatprep.mubr.f32.mxu0 0.0
        %1098 = vmatmul.mubr.f32.gmra.mrb[0].mxu0 %v887
        %v1099 = vpop.f32.mrb[0].mxu0
        %v1100 = vadd.f32 0.0, %v1099
        %v1101 = vpop.f32.mrb[0].mxu0
        %1102 = vmatprep.mubr.f32.mxu0 0.0
        %1103 = vmatmul.mubr.f32.gmra.mrb[0].mxu0 %v890
        %v1104 = vpop.f32.mrb[0].mxu0
        %v1105 = vadd.f32 0.0, %v1104
        %v1106 = vpop.f32.mrb[0].mxu0
        %1107 = vmatprep.mubr.f32.mxu0 0.0
        %1108 = vmatmul.mubr.f32.gmra.mrb[0].mxu0 %v893
        %v1109 = vpop.f32.mrb[0].mxu0
        %v1110 = vadd.f32 0.0, %v1109
        %v1111 = vpop.f32.mrb[0].mxu0
        %1112 = vmatprep.mubr.f32.mxu0 0.0
        %1113 = vmatmul.mubr.f32.gmra.mrb[0].mxu0 %v896
        %v1114 = vpop.f32.mrb[0].mxu0
        %v1115 = vadd.f32 0.0, %v1114
        %v1116 = vpop.f32.mrb[0].mxu0
        %1117 = vmatprep.mubr.f32.mxu0 0.0
        %1118 = vmatmul.mubr.f32.gmra.mrb[0].mxu0 %v899
        %v1119 = vpop.f32.mrb[0].mxu0
        %v1120 = vadd.f32 0.0, %v1119
        %v1121 = vpop.f32.mrb[0].mxu0
        %1122 = vmatprep.mubr.f32.mxu0 0.0
        %1123 = vmatmul.mubr.f32.gmra.mrb[0].mxu0 %v902
        %v1124 = vpop.f32.mrb[0].mxu0
        %v1125 = vadd.f32 0.0, %v1124
        %v1126 = vpop.f32.mrb[0].mxu0
        %1127 = vmatprep.mubr.f32.mxu0 0.0
        %1128 = vmatmul.mubr.f32.gmra.mrb[0].mxu0 %v905
        %v1129 = vpop.f32.mrb[0].mxu0
        %v1130 = vadd.f32 0.0, %v1129
        %v1131 = vpop.f32.mrb[0].mxu0
        %1132 = vmatprep.mubr.f32.mxu0 0.0
        %1133 = vmatmul.mubr.f32.gmra.mrb[0].mxu0 %v908
        %v1134 = vpop.f32.mrb[0].mxu0
        %v1135 = vadd.f32 0.0, %v1134
        %v1136 = vpop.f32.mrb[0].mxu0
        %1137 = vdwg.mxu0
        %v1138 = vadd.f32 %v749, %v980
        %v1139 = vadd.f32 %v750, %v985
        %v1140 = vadd.f32 %v751, %v990
        %v1141 = vadd.f32 %v752, %v995
        %v1142 = vadd.f32 %v753, %v1000
        %v1143 = vadd.f32 %v754, %v1005
        %v1144 = vadd.f32 %v755, %v1010
        %v1145 = vadd.f32 %v756, %v1015
        %v1146 = vadd.f32 %v757, %v1020
        %v1147 = vadd.f32 %v758, %v1025
        %v1148 = vadd.f32 %v759, %v1030
        %v1149 = vadd.f32 %v760, %v1035
        %v1150 = vadd.f32 %v761, %v1040
        %v1151 = vadd.f32 %v762, %v1045
        %v1152 = vadd.f32 %v763, %v1050
        %v1153 = vadd.f32 %v764, %v1055
        %v1154 = vadd.f32 %v765, %v1060
        %v1155 = vadd.f32 %v766, %v1065
        %v1156 = vadd.f32 %v767, %v1070
        %v1157 = vadd.f32 %v768, %v1075
        %v1158 = vadd.f32 %v769, %v1080
        %v1159 = vadd.f32 %v770, %v1085
        %v1160 = vadd.f32 %v771, %v1090
        %v1161 = vadd.f32 %v772, %v1095
        %v1162 = vadd.f32 %v773, %v1100
        %v1163 = vadd.f32 %v774, %v1105
        %v1164 = vadd.f32 %v775, %v1110
        %v1165 = vadd.f32 %v776, %v1115
        %v1166 = vadd.f32 %v777, %v1120
        %v1167 = vadd.f32 %v778, %v1125
        %v1168 = vadd.f32 %v779, %v1130
        %v1169 = vadd.f32 %v780, %v1135
        %v1170 = vld [vmem:[#allocation2 + $0x2] sm:$0xff]
        %v1171 = vld [vmem:[#allocation2 + $0xa] sm:$0xff]
        %v1172 = vld [vmem:[#allocation2 + $0x1a] sm:$0xff]
        %v1173 = vld [vmem:[#allocation2 + $0x22] sm:$0xff]
        %v1174 = vld [vmem:[#allocation2 + $0x32] sm:$0xff]
        %v1175 = vld [vmem:[#allocation2 + $0x3a] sm:$0xff]
        %v1176 = vld [vmem:[#allocation2 + $0x4a] sm:$0xff]
        %v1177 = vld [vmem:[#allocation2 + $0x52] sm:$0xff]
        %v1178 = vld [vmem:[#allocation2 + $0x62] sm:$0xff]
        %v1179 = vld [vmem:[#allocation2 + $0x6a] sm:$0xff]
        %v1180 = vld [vmem:[#allocation2 + $0x7a] sm:$0xff]
        %v1181 = vld [vmem:[#allocation2 + $0x82] sm:$0xff]
        %v1182 = vld [vmem:[#allocation2 + $0x92] sm:$0xff]
        %v1183 = vld [vmem:[#allocation2 + $0x9a] sm:$0xff]
        %v1184 = vld [vmem:[#allocation2 + $0xaa] sm:$0xff]
        %v1185 = vld [vmem:[#allocation2 + $0xb2] sm:$0xff]
        %v1186 = vld [vmem:[#allocation2 + $0xc2] sm:$0xff]
        %v1187 = vld [vmem:[#allocation2 + $0xca] sm:$0xff]
        %v1188 = vld [vmem:[#allocation2 + $0xda] sm:$0xff]
        %v1189 = vld [vmem:[#allocation2 + $0xe2] sm:$0xff]
        %v1190 = vld [vmem:[#allocation2 + $0xf2] sm:$0xff]
        %v1191 = vld [vmem:[#allocation2 + $0xfa] sm:$0xff]
        %v1192 = vld [vmem:[#allocation2 + $0x10a] sm:$0xff]
        %v1193 = vld [vmem:[#allocation2 + $0x112] sm:$0xff]
        %v1194 = vld [vmem:[#allocation2 + $0x122] sm:$0xff]
        %v1195 = vld [vmem:[#allocation2 + $0x12a] sm:$0xff]
        %v1196 = vld [vmem:[#allocation2 + $0x13a] sm:$0xff]
        %v1197 = vld [vmem:[#allocation2 + $0x142] sm:$0xff]
        %v1198 = vld [vmem:[#allocation2 + $0x152] sm:$0xff]
        %v1199 = vld [vmem:[#allocation2 + $0x15a] sm:$0xff]
        %v1200 = vld [vmem:[#allocation2 + $0x16a] sm:$0xff]
        %v1201 = vld [vmem:[#allocation2 + $0x172] sm:$0xff]
        %v1202 = vld [vmem:[%s1 + $0x8] sm:$0xf]
        %v1204 = vsel %vm263, %v1170, 0
        %v1207 = vsel %vm263, %v1171, 0
        %v1210 = vsel %vm263, %v1172, 0
        %v1213 = vsel %vm263, %v1173, 0
        %v1216 = vsel %vm263, %v1174, 0
        %v1219 = vsel %vm263, %v1175, 0
        %v1222 = vsel %vm263, %v1176, 0
        %v1225 = vsel %vm263, %v1177, 0
        %v1228 = vsel %vm263, %v1178, 0
        %v1231 = vsel %vm263, %v1179, 0
        %v1234 = vsel %vm263, %v1180, 0
        %v1237 = vsel %vm263, %v1181, 0
        %v1240 = vsel %vm263, %v1182, 0
        %v1243 = vsel %vm263, %v1183, 0
        %v1246 = vsel %vm263, %v1184, 0
        %v1249 = vsel %vm263, %v1185, 0
        %v1252 = vsel %vm263, %v1186, 0
        %v1255 = vsel %vm263, %v1187, 0
        %v1258 = vsel %vm263, %v1188, 0
        %v1261 = vsel %vm263, %v1189, 0
        %v1264 = vsel %vm263, %v1190, 0
        %v1267 = vsel %vm263, %v1191, 0
        %v1270 = vsel %vm263, %v1192, 0
        %v1273 = vsel %vm263, %v1193, 0
        %v1276 = vsel %vm263, %v1194, 0
        %v1279 = vsel %vm263, %v1195, 0
        %v1282 = vsel %vm263, %v1196, 0
        %v1285 = vsel %vm263, %v1197, 0
        %v1288 = vsel %vm263, %v1198, 0
        %v1291 = vsel %vm263, %v1199, 0
        %v1294 = vsel %vm263, %v1200, 0
        %v1297 = vsel %vm263, %v1201, 0
        %v1300 = vsel %vm520, %v1202, 0
        %1302 = vmatprep.subr.mxu0 0.0
        %1303 = vmatpush1.msra.mxu0 %v1300
        %1304 = vmatprep.subr.mxu0 0.0
        %1305 = vmatpush1.msra.mxu0 0.0
        %1306 = vmatprep.subr.mxu0 0.0
        %1307 = vmatpush1.msra.mxu0 0.0
        %1308 = vmatprep.subr.mxu0 0.0
        %1309 = vmatpush1.msra.mxu0 0.0
        %1310 = vmatprep.subr.mxu0 0.0
        %1311 = vmatpush1.msra.mxu0 0.0
        %1312 = vmatprep.subr.mxu0 0.0
        %1313 = vmatpush1.msra.mxu0 0.0
        %1314 = vmatprep.subr.mxu0 0.0
        %1315 = vmatpush1.msra.mxu0 0.0
        %1316 = vmatprep.subr.mxu0 0.0
        %1317 = vmatpush1.msra.mxu0 0.0
        %1318 = vmatprep.subr.mxu0 0.0
        %1319 = vmatpush1.msra.mxu0 0.0
        %1320 = vmatprep.subr.mxu0 0.0
        %1321 = vmatpush1.msra.mxu0 0.0
        %1322 = vmatprep.subr.mxu0 0.0
        %1323 = vmatpush1.msra.mxu0 0.0
        %1324 = vmatprep.subr.mxu0 0.0
        %1325 = vmatpush1.msra.mxu0 0.0
        %1326 = vmatprep.subr.mxu0 0.0
        %1327 = vmatpush1.msra.mxu0 0.0
        %1328 = vmatprep.subr.mxu0 0.0
        %1329 = vmatpush1.msra.mxu0 0.0
        %1330 = vmatprep.subr.mxu0 0.0
        %1331 = vmatpush1.msra.mxu0 0.0
        %1332 = vmatprep.subr.mxu0 0.0
        %1333 = vmatpush1.msra.mxu0 0.0
        %1334 = vmatprep.subr.mxu0 0.0
        %1335 = vmatpush1.msra.mxu0 0.0
        %1336 = vmatprep.subr.mxu0 0.0
        %1337 = vmatpush1.msra.mxu0 0.0
        %1338 = vmatprep.subr.mxu0 0.0
        %1339 = vmatpush1.msra.mxu0 0.0
        %1340 = vmatprep.subr.mxu0 0.0
        %1341 = vmatpush1.msra.mxu0 0.0
        %1342 = vmatprep.subr.mxu0 0.0
        %1343 = vmatpush1.msra.mxu0 0.0
        %1344 = vmatprep.subr.mxu0 0.0
        %1345 = vmatpush1.msra.mxu0 0.0
        %1346 = vmatprep.subr.mxu0 0.0
        %1347 = vmatpush1.msra.mxu0 0.0
        %1348 = vmatprep.subr.mxu0 0.0
        %1349 = vmatpush1.msra.mxu0 0.0
        %1350 = vmatprep.subr.mxu0 0.0
        %1351 = vmatpush1.msra.mxu0 0.0
        %1352 = vmatprep.subr.mxu0 0.0
        %1353 = vmatpush1.msra.mxu0 0.0
        %1354 = vmatprep.subr.mxu0 0.0
        %1355 = vmatpush1.msra.mxu0 0.0
        %1356 = vmatprep.subr.mxu0 0.0
        %1357 = vmatpush1.msra.mxu0 0.0
        %1358 = vmatprep.subr.mxu0 0.0
        %1359 = vmatpush1.msra.mxu0 0.0
        %1360 = vmatprep.subr.mxu0 0.0
        %1361 = vmatpush1.msra.mxu0 0.0
        %1362 = vmatprep.subr.mxu0 0.0
        %1363 = vmatpush1.msra.mxu0 0.0
        %1364 = vmatprep.subr.mxu0 0.0
        %1365 = vmatpush1.msra.mxu0 0.0
        %1366 = vmatprep.mubr.f32.mxu0 0.0
        %1367 = vmatmul.mubr.f32.gmra.mrb[0].mxu0 %v1204
        %v1368 = vpop.f32.mrb[0].mxu0
        %v1369 = vadd.f32 0.0, %v1368
        %v1370 = vpop.f32.mrb[0].mxu0
        %1371 = vmatprep.mubr.f32.mxu0 0.0
        %1372 = vmatmul.mubr.f32.gmra.mrb[0].mxu0 %v1207
        %v1373 = vpop.f32.mrb[0].mxu0
        %v1374 = vadd.f32 0.0, %v1373
        %v1375 = vpop.f32.mrb[0].mxu0
        %1376 = vmatprep.mubr.f32.mxu0 0.0
        %1377 = vmatmul.mubr.f32.gmra.mrb[0].mxu0 %v1210
        %v1378 = vpop.f32.mrb[0].mxu0
        %v1379 = vadd.f32 0.0, %v1378
        %v1380 = vpop.f32.mrb[0].mxu0
        %1381 = vmatprep.mubr.f32.mxu0 0.0
        %1382 = vmatmul.mubr.f32.gmra.mrb[0].mxu0 %v1213
        %v1383 = vpop.f32.mrb[0].mxu0
        %v1384 = vadd.f32 0.0, %v1383
        %v1385 = vpop.f32.mrb[0].mxu0
        %1386 = vmatprep.mubr.f32.mxu0 0.0
        %1387 = vmatmul.mubr.f32.gmra.mrb[0].mxu0 %v1216
        %v1388 = vpop.f32.mrb[0].mxu0
        %v1389 = vadd.f32 0.0, %v1388
        %v1390 = vpop.f32.mrb[0].mxu0
        %1391 = vmatprep.mubr.f32.mxu0 0.0
        %1392 = vmatmul.mubr.f32.gmra.mrb[0].mxu0 %v1219
        %v1393 = vpop.f32.mrb[0].mxu0
        %v1394 = vadd.f32 0.0, %v1393
        %v1395 = vpop.f32.mrb[0].mxu0
        %1396 = vmatprep.mubr.f32.mxu0 0.0
        %1397 = vmatmul.mubr.f32.gmra.mrb[0].mxu0 %v1222
        %v1398 = vpop.f32.mrb[0].mxu0
        %v1399 = vadd.f32 0.0, %v1398
        %v1400 = vpop.f32.mrb[0].mxu0
        %1401 = vmatprep.mubr.f32.mxu0 0.0
        %1402 = vmatmul.mubr.f32.gmra.mrb[0].mxu0 %v1225
        %v1403 = vpop.f32.mrb[0].mxu0
        %v1404 = vadd.f32 0.0, %v1403
        %v1405 = vpop.f32.mrb[0].mxu0
        %1406 = vmatprep.mubr.f32.mxu0 0.0
        %1407 = vmatmul.mubr.f32.gmra.mrb[0].mxu0 %v1228
        %v1408 = vpop.f32.mrb[0].mxu0
        %v1409 = vadd.f32 0.0, %v1408
        %v1410 = vpop.f32.mrb[0].mxu0
        %1411 = vmatprep.mubr.f32.mxu0 0.0
        %1412 = vmatmul.mubr.f32.gmra.mrb[0].mxu0 %v1231
        %v1413 = vpop.f32.mrb[0].mxu0
        %v1414 = vadd.f32 0.0, %v1413
        %v1415 = vpop.f32.mrb[0].mxu0
        %1416 = vmatprep.mubr.f32.mxu0 0.0
        %1417 = vmatmul.mubr.f32.gmra.mrb[0].mxu0 %v1234
        %v1418 = vpop.f32.mrb[0].mxu0
        %v1419 = vadd.f32 0.0, %v1418
        %v1420 = vpop.f32.mrb[0].mxu0
        %1421 = vmatprep.mubr.f32.mxu0 0.0
        %1422 = vmatmul.mubr.f32.gmra.mrb[0].mxu0 %v1237
        %v1423 = vpop.f32.mrb[0].mxu0
        %v1424 = vadd.f32 0.0, %v1423
        %v1425 = vpop.f32.mrb[0].mxu0
        %1426 = vmatprep.mubr.f32.mxu0 0.0
        %1427 = vmatmul.mubr.f32.gmra.mrb[0].mxu0 %v1240
        %v1428 = vpop.f32.mrb[0].mxu0
        %v1429 = vadd.f32 0.0, %v1428
        %v1430 = vpop.f32.mrb[0].mxu0
        %1431 = vmatprep.mubr.f32.mxu0 0.0
        %1432 = vmatmul.mubr.f32.gmra.mrb[0].mxu0 %v1243
        %v1433 = vpop.f32.mrb[0].mxu0
        %v1434 = vadd.f32 0.0, %v1433
        %v1435 = vpop.f32.mrb[0].mxu0
        %1436 = vmatprep.mubr.f32.mxu0 0.0
        %1437 = vmatmul.mubr.f32.gmra.mrb[0].mxu0 %v1246
        %v1438 = vpop.f32.mrb[0].mxu0
        %v1439 = vadd.f32 0.0, %v1438
        %v1440 = vpop.f32.mrb[0].mxu0
        %1441 = vmatprep.mubr.f32.mxu0 0.0
        %1442 = vmatmul.mubr.f32.gmra.mrb[0].mxu0 %v1249
        %v1443 = vpop.f32.mrb[0].mxu0
        %v1444 = vadd.f32 0.0, %v1443
        %v1445 = vpop.f32.mrb[0].mxu0
        %1446 = vmatprep.mubr.f32.mxu0 0.0
        %1447 = vmatmul.mubr.f32.gmra.mrb[0].mxu0 %v1252
        %v1448 = vpop.f32.mrb[0].mxu0
        %v1449 = vadd.f32 0.0, %v1448
        %v1450 = vpop.f32.mrb[0].mxu0
        %1451 = vmatprep.mubr.f32.mxu0 0.0
        %1452 = vmatmul.mubr.f32.gmra.mrb[0].mxu0 %v1255
        %v1453 = vpop.f32.mrb[0].mxu0
        %v1454 = vadd.f32 0.0, %v1453
        %v1455 = vpop.f32.mrb[0].mxu0
        %1456 = vmatprep.mubr.f32.mxu0 0.0
        %1457 = vmatmul.mubr.f32.gmra.mrb[0].mxu0 %v1258
        %v1458 = vpop.f32.mrb[0].mxu0
        %v1459 = vadd.f32 0.0, %v1458
        %v1460 = vpop.f32.mrb[0].mxu0
        %1461 = vmatprep.mubr.f32.mxu0 0.0
        %1462 = vmatmul.mubr.f32.gmra.mrb[0].mxu0 %v1261
        %v1463 = vpop.f32.mrb[0].mxu0
        %v1464 = vadd.f32 0.0, %v1463
        %v1465 = vpop.f32.mrb[0].mxu0
        %1466 = vmatprep.mubr.f32.mxu0 0.0
        %1467 = vmatmul.mubr.f32.gmra.mrb[0].mxu0 %v1264
        %v1468 = vpop.f32.mrb[0].mxu0
        %v1469 = vadd.f32 0.0, %v1468
        %v1470 = vpop.f32.mrb[0].mxu0
        %1471 = vmatprep.mubr.f32.mxu0 0.0
        %1472 = vmatmul.mubr.f32.gmra.mrb[0].mxu0 %v1267
        %v1473 = vpop.f32.mrb[0].mxu0
        %v1474 = vadd.f32 0.0, %v1473
        %v1475 = vpop.f32.mrb[0].mxu0
        %1476 = vmatprep.mubr.f32.mxu0 0.0
        %1477 = vmatmul.mubr.f32.gmra.mrb[0].mxu0 %v1270
        %v1478 = vpop.f32.mrb[0].mxu0
        %v1479 = vadd.f32 0.0, %v1478
        %v1480 = vpop.f32.mrb[0].mxu0
        %1481 = vmatprep.mubr.f32.mxu0 0.0
        %1482 = vmatmul.mubr.f32.gmra.mrb[0].mxu0 %v1273
        %v1483 = vpop.f32.mrb[0].mxu0
        %v1484 = vadd.f32 0.0, %v1483
        %v1485 = vpop.f32.mrb[0].mxu0
        %1486 = vmatprep.mubr.f32.mxu0 0.0
        %1487 = vmatmul.mubr.f32.gmra.mrb[0].mxu0 %v1276
        %v1488 = vpop.f32.mrb[0].mxu0
        %v1489 = vadd.f32 0.0, %v1488
        %v1490 = vpop.f32.mrb[0].mxu0
        %1491 = vmatprep.mubr.f32.mxu0 0.0
        %1492 = vmatmul.mubr.f32.gmra.mrb[0].mxu0 %v1279
        %v1493 = vpop.f32.mrb[0].mxu0
        %v1494 = vadd.f32 0.0, %v1493
        %v1495 = vpop.f32.mrb[0].mxu0
        %1496 = vmatprep.mubr.f32.mxu0 0.0
        %1497 = vmatmul.mubr.f32.gmra.mrb[0].mxu0 %v1282
        %v1498 = vpop.f32.mrb[0].mxu0
        %v1499 = vadd.f32 0.0, %v1498
        %v1500 = vpop.f32.mrb[0].mxu0
        %1501 = vmatprep.mubr.f32.mxu0 0.0
        %1502 = vmatmul.mubr.f32.gmra.mrb[0].mxu0 %v1285
        %v1503 = vpop.f32.mrb[0].mxu0
        %v1504 = vadd.f32 0.0, %v1503
        %v1505 = vpop.f32.mrb[0].mxu0
        %1506 = vmatprep.mubr.f32.mxu0 0.0
        %1507 = vmatmul.mubr.f32.gmra.mrb[0].mxu0 %v1288
        %v1508 = vpop.f32.mrb[0].mxu0
        %v1509 = vadd.f32 0.0, %v1508
        %v1510 = vpop.f32.mrb[0].mxu0
        %1511 = vmatprep.mubr.f32.mxu0 0.0
        %1512 = vmatmul.mubr.f32.gmra.mrb[0].mxu0 %v1291
        %v1513 = vpop.f32.mrb[0].mxu0
        %v1514 = vadd.f32 0.0, %v1513
        %v1515 = vpop.f32.mrb[0].mxu0
        %1516 = vmatprep.mubr.f32.mxu0 0.0
        %1517 = vmatmul.mubr.f32.gmra.mrb[0].mxu0 %v1294
        %v1518 = vpop.f32.mrb[0].mxu0
        %v1519 = vadd.f32 0.0, %v1518
        %v1520 = vpop.f32.mrb[0].mxu0
        %1521 = vmatprep.mubr.f32.mxu0 0.0
        %1522 = vmatmul.mubr.f32.gmra.mrb[0].mxu0 %v1297
        %v1523 = vpop.f32.mrb[0].mxu0
        %v1524 = vadd.f32 0.0, %v1523
        %v1525 = vpop.f32.mrb[0].mxu0
        %1526 = vdwg.mxu0
        %v1527 = vadd.f32 %v1138, %v1369
        %v1528 = vadd.f32 %v1139, %v1374
        %v1529 = vadd.f32 %v1140, %v1379
        %v1530 = vadd.f32 %v1141, %v1384
        %v1531 = vadd.f32 %v1142, %v1389
        %v1532 = vadd.f32 %v1143, %v1394
        %v1533 = vadd.f32 %v1144, %v1399
        %v1534 = vadd.f32 %v1145, %v1404
        %v1535 = vadd.f32 %v1146, %v1409
        %v1536 = vadd.f32 %v1147, %v1414
        %v1537 = vadd.f32 %v1148, %v1419
        %v1538 = vadd.f32 %v1149, %v1424
        %v1539 = vadd.f32 %v1150, %v1429
        %v1540 = vadd.f32 %v1151, %v1434
        %v1541 = vadd.f32 %v1152, %v1439
        %v1542 = vadd.f32 %v1153, %v1444
        %v1543 = vadd.f32 %v1154, %v1449
        %v1544 = vadd.f32 %v1155, %v1454
        %v1545 = vadd.f32 %v1156, %v1459
        %v1546 = vadd.f32 %v1157, %v1464
        %v1547 = vadd.f32 %v1158, %v1469
        %v1548 = vadd.f32 %v1159, %v1474
        %v1549 = vadd.f32 %v1160, %v1479
        %v1550 = vadd.f32 %v1161, %v1484
        %v1551 = vadd.f32 %v1162, %v1489
        %v1552 = vadd.f32 %v1163, %v1494
        %v1553 = vadd.f32 %v1164, %v1499
        %v1554 = vadd.f32 %v1165, %v1504
        %v1555 = vadd.f32 %v1166, %v1509
        %v1556 = vadd.f32 %v1167, %v1514
        %v1557 = vadd.f32 %v1168, %v1519
        %v1558 = vadd.f32 %v1169, %v1524
        %v1559 = vld [vmem:[%s351] sm:$0xff]
        %v1560 = vld [vmem:[%s351 + $0x8] sm:$0xff]
        %v1561 = vld [vmem:[%s351 + $0x18] sm:$0xff]
        %v1562 = vld [vmem:[%s351 + $0x20] sm:$0xff]
        %v1563 = vld [vmem:[%s351 + $0x30] sm:$0xff]
        %v1564 = vld [vmem:[%s351 + $0x38] sm:$0xff]
        %v1565 = vld [vmem:[%s351 + $0x48] sm:$0xff]
        %v1566 = vld [vmem:[%s351 + $0x50] sm:$0xff]
        %v1567 = vld [vmem:[%s351 + $0x60] sm:$0xff]
        %v1568 = vld [vmem:[%s351 + $0x68] sm:$0xff]
        %v1569 = vld [vmem:[%s351 + $0x78] sm:$0xff]
        %v1570 = vld [vmem:[%s351 + $0x80] sm:$0xff]
        %v1571 = vld [vmem:[%s351 + $0x90] sm:$0xff]
        %v1572 = vld [vmem:[%s351 + $0x98] sm:$0xff]
        %v1573 = vld [vmem:[%s351 + $0xa8] sm:$0xff]
        %v1574 = vld [vmem:[%s351 + $0xb0] sm:$0xff]
        %v1575 = vld [vmem:[%s351 + $0xc0] sm:$0xff]
        %v1576 = vld [vmem:[%s351 + $0xc8] sm:$0xff]
        %v1577 = vld [vmem:[%s351 + $0xd8] sm:$0xff]
        %v1578 = vld [vmem:[%s351 + $0xe0] sm:$0xff]
        %v1579 = vld [vmem:[%s351 + $0xf0] sm:$0xff]
        %v1580 = vld [vmem:[%s351 + $0xf8] sm:$0xff]
        %v1581 = vld [vmem:[%s351 + $0x108] sm:$0xff]
        %v1582 = vld [vmem:[%s351 + $0x110] sm:$0xff]
        %v1583 = vld [vmem:[%s351 + $0x120] sm:$0xff]
        %v1584 = vld [vmem:[%s351 + $0x128] sm:$0xff]
        %v1585 = vld [vmem:[%s351 + $0x138] sm:$0xff]
        %v1586 = vld [vmem:[%s351 + $0x140] sm:$0xff]
        %v1587 = vld [vmem:[%s351 + $0x150] sm:$0xff]
        %v1588 = vld [vmem:[%s351 + $0x158] sm:$0xff]
        %v1589 = vld [vmem:[%s351 + $0x168] sm:$0xff]
        %v1590 = vld [vmem:[%s351 + $0x170] sm:$0xff]
        %v1591 = vld [vmem:[%s1 + $0xc] sm:$0xf]
        %v1593 = vsel %vm263, %v1559, 0
        %v1596 = vsel %vm263, %v1560, 0
        %v1599 = vsel %vm263, %v1561, 0
        %v1602 = vsel %vm263, %v1562, 0
        %v1605 = vsel %vm263, %v1563, 0
        %v1608 = vsel %vm263, %v1564, 0
        %v1611 = vsel %vm263, %v1565, 0
        %v1614 = vsel %vm263, %v1566, 0
        %v1617 = vsel %vm263, %v1567, 0
        %v1620 = vsel %vm263, %v1568, 0
        %v1623 = vsel %vm263, %v1569, 0
        %v1626 = vsel %vm263, %v1570, 0
        %v1629 = vsel %vm263, %v1571, 0
        %v1632 = vsel %vm263, %v1572, 0
        %v1635 = vsel %vm263, %v1573, 0
        %v1638 = vsel %vm263, %v1574, 0
        %v1641 = vsel %vm263, %v1575, 0
        %v1644 = vsel %vm263, %v1576, 0
        %v1647 = vsel %vm263, %v1577, 0
        %v1650 = vsel %vm263, %v1578, 0
        %v1653 = vsel %vm263, %v1579, 0
        %v1656 = vsel %vm263, %v1580, 0
        %v1659 = vsel %vm263, %v1581, 0
        %v1662 = vsel %vm263, %v1582, 0
        %v1665 = vsel %vm263, %v1583, 0
        %v1668 = vsel %vm263, %v1584, 0
        %v1671 = vsel %vm263, %v1585, 0
        %v1674 = vsel %vm263, %v1586, 0
        %v1677 = vsel %vm263, %v1587, 0
        %v1680 = vsel %vm263, %v1588, 0
        %v1683 = vsel %vm263, %v1589, 0
        %v1686 = vsel %vm263, %v1590, 0
        %v1689 = vsel %vm520, %v1591, 0
        %1691 = vmatprep.subr.mxu0 0.0
        %1692 = vmatpush1.msra.mxu0 %v1689
        %1693 = vmatprep.subr.mxu0 0.0
        %1694 = vmatpush1.msra.mxu0 0.0
        %1695 = vmatprep.subr.mxu0 0.0
        %1696 = vmatpush1.msra.mxu0 0.0
        %1697 = vmatprep.subr.mxu0 0.0
        %1698 = vmatpush1.msra.mxu0 0.0
        %1699 = vmatprep.subr.mxu0 0.0
        %1700 = vmatpush1.msra.mxu0 0.0
        %1701 = vmatprep.subr.mxu0 0.0
        %1702 = vmatpush1.msra.mxu0 0.0
        %1703 = vmatprep.subr.mxu0 0.0
        %1704 = vmatpush1.msra.mxu0 0.0
        %1705 = vmatprep.subr.mxu0 0.0
        %1706 = vmatpush1.msra.mxu0 0.0
        %1707 = vmatprep.subr.mxu0 0.0
        %1708 = vmatpush1.msra.mxu0 0.0
        %1709 = vmatprep.subr.mxu0 0.0
        %1710 = vmatpush1.msra.mxu0 0.0
        %1711 = vmatprep.subr.mxu0 0.0
        %1712 = vmatpush1.msra.mxu0 0.0
        %1713 = vmatprep.subr.mxu0 0.0
        %1714 = vmatpush1.msra.mxu0 0.0
        %1715 = vmatprep.subr.mxu0 0.0
        %1716 = vmatpush1.msra.mxu0 0.0
        %1717 = vmatprep.subr.mxu0 0.0
        %1718 = vmatpush1.msra.mxu0 0.0
        %1719 = vmatprep.subr.mxu0 0.0
        %1720 = vmatpush1.msra.mxu0 0.0
        %1721 = vmatprep.subr.mxu0 0.0
        %1722 = vmatpush1.msra.mxu0 0.0
        %1723 = vmatprep.subr.mxu0 0.0
        %1724 = vmatpush1.msra.mxu0 0.0
        %1725 = vmatprep.subr.mxu0 0.0
        %1726 = vmatpush1.msra.mxu0 0.0
        %1727 = vmatprep.subr.mxu0 0.0
        %1728 = vmatpush1.msra.mxu0 0.0
        %1729 = vmatprep.subr.mxu0 0.0
        %1730 = vmatpush1.msra.mxu0 0.0
        %1731 = vmatprep.subr.mxu0 0.0
        %1732 = vmatpush1.msra.mxu0 0.0
        %1733 = vmatprep.subr.mxu0 0.0
        %1734 = vmatpush1.msra.mxu0 0.0
        %1735 = vmatprep.subr.mxu0 0.0
        %1736 = vmatpush1.msra.mxu0 0.0
        %1737 = vmatprep.subr.mxu0 0.0
        %1738 = vmatpush1.msra.mxu0 0.0
        %1739 = vmatprep.subr.mxu0 0.0
        %1740 = vmatpush1.msra.mxu0 0.0
        %1741 = vmatprep.subr.mxu0 0.0
        %1742 = vmatpush1.msra.mxu0 0.0
        %1743 = vmatprep.subr.mxu0 0.0
        %1744 = vmatpush1.msra.mxu0 0.0
        %1745 = vmatprep.subr.mxu0 0.0
        %1746 = vmatpush1.msra.mxu0 0.0
        %1747 = vmatprep.subr.mxu0 0.0
        %1748 = vmatpush1.msra.mxu0 0.0
        %1749 = vmatprep.subr.mxu0 0.0
        %1750 = vmatpush1.msra.mxu0 0.0
        %1751 = vmatprep.subr.mxu0 0.0
        %1752 = vmatpush1.msra.mxu0 0.0
        %1753 = vmatprep.subr.mxu0 0.0
        %1754 = vmatpush1.msra.mxu0 0.0
        %1755 = vmatprep.mubr.f32.mxu0 0.0
        %1756 = vmatmul.mubr.f32.gmra.mrb[0].mxu0 %v1593
        %v1757 = vpop.f32.mrb[0].mxu0
        %v1758 = vadd.f32 0.0, %v1757
        %v1759 = vpop.f32.mrb[0].mxu0
        %1760 = vmatprep.mubr.f32.mxu0 0.0
        %1761 = vmatmul.mubr.f32.gmra.mrb[0].mxu0 %v1596
        %v1762 = vpop.f32.mrb[0].mxu0
        %v1763 = vadd.f32 0.0, %v1762
        %v1764 = vpop.f32.mrb[0].mxu0
        %1765 = vmatprep.mubr.f32.mxu0 0.0
        %1766 = vmatmul.mubr.f32.gmra.mrb[0].mxu0 %v1599
        %v1767 = vpop.f32.mrb[0].mxu0
        %v1768 = vadd.f32 0.0, %v1767
        %v1769 = vpop.f32.mrb[0].mxu0
        %1770 = vmatprep.mubr.f32.mxu0 0.0
        %1771 = vmatmul.mubr.f32.gmra.mrb[0].mxu0 %v1602
        %v1772 = vpop.f32.mrb[0].mxu0
        %v1773 = vadd.f32 0.0, %v1772
        %v1774 = vpop.f32.mrb[0].mxu0
        %1775 = vmatprep.mubr.f32.mxu0 0.0
        %1776 = vmatmul.mubr.f32.gmra.mrb[0].mxu0 %v1605
        %v1777 = vpop.f32.mrb[0].mxu0
        %v1778 = vadd.f32 0.0, %v1777
        %v1779 = vpop.f32.mrb[0].mxu0
        %1780 = vmatprep.mubr.f32.mxu0 0.0
        %1781 = vmatmul.mubr.f32.gmra.mrb[0].mxu0 %v1608
        %v1782 = vpop.f32.mrb[0].mxu0
        %v1783 = vadd.f32 0.0, %v1782
        %v1784 = vpop.f32.mrb[0].mxu0
        %1785 = vmatprep.mubr.f32.mxu0 0.0
        %1786 = vmatmul.mubr.f32.gmra.mrb[0].mxu0 %v1611
        %v1787 = vpop.f32.mrb[0].mxu0
        %v1788 = vadd.f32 0.0, %v1787
        %v1789 = vpop.f32.mrb[0].mxu0
        %1790 = vmatprep.mubr.f32.mxu0 0.0
        %1791 = vmatmul.mubr.f32.gmra.mrb[0].mxu0 %v1614
        %v1792 = vpop.f32.mrb[0].mxu0
        %v1793 = vadd.f32 0.0, %v1792
        %v1794 = vpop.f32.mrb[0].mxu0
        %1795 = vmatprep.mubr.f32.mxu0 0.0
        %1796 = vmatmul.mubr.f32.gmra.mrb[0].mxu0 %v1617
        %v1797 = vpop.f32.mrb[0].mxu0
        %v1798 = vadd.f32 0.0, %v1797
        %v1799 = vpop.f32.mrb[0].mxu0
        %1800 = vmatprep.mubr.f32.mxu0 0.0
        %1801 = vmatmul.mubr.f32.gmra.mrb[0].mxu0 %v1620
        %v1802 = vpop.f32.mrb[0].mxu0
        %v1803 = vadd.f32 0.0, %v1802
        %v1804 = vpop.f32.mrb[0].mxu0
        %1805 = vmatprep.mubr.f32.mxu0 0.0
        %1806 = vmatmul.mubr.f32.gmra.mrb[0].mxu0 %v1623
        %v1807 = vpop.f32.mrb[0].mxu0
        %v1808 = vadd.f32 0.0, %v1807
        %v1809 = vpop.f32.mrb[0].mxu0
        %1810 = vmatprep.mubr.f32.mxu0 0.0
        %1811 = vmatmul.mubr.f32.gmra.mrb[0].mxu0 %v1626
        %v1812 = vpop.f32.mrb[0].mxu0
        %v1813 = vadd.f32 0.0, %v1812
        %v1814 = vpop.f32.mrb[0].mxu0
        %1815 = vmatprep.mubr.f32.mxu0 0.0
        %1816 = vmatmul.mubr.f32.gmra.mrb[0].mxu0 %v1629
        %v1817 = vpop.f32.mrb[0].mxu0
        %v1818 = vadd.f32 0.0, %v1817
        %v1819 = vpop.f32.mrb[0].mxu0
        %1820 = vmatprep.mubr.f32.mxu0 0.0
        %1821 = vmatmul.mubr.f32.gmra.mrb[0].mxu0 %v1632
        %v1822 = vpop.f32.mrb[0].mxu0
        %v1823 = vadd.f32 0.0, %v1822
        %v1824 = vpop.f32.mrb[0].mxu0
        %1825 = vmatprep.mubr.f32.mxu0 0.0
        %1826 = vmatmul.mubr.f32.gmra.mrb[0].mxu0 %v1635
        %v1827 = vpop.f32.mrb[0].mxu0
        %v1828 = vadd.f32 0.0, %v1827
        %v1829 = vpop.f32.mrb[0].mxu0
        %1830 = vmatprep.mubr.f32.mxu0 0.0
        %1831 = vmatmul.mubr.f32.gmra.mrb[0].mxu0 %v1638
        %v1832 = vpop.f32.mrb[0].mxu0
        %v1833 = vadd.f32 0.0, %v1832
        %v1834 = vpop.f32.mrb[0].mxu0
        %1835 = vmatprep.mubr.f32.mxu0 0.0
        %1836 = vmatmul.mubr.f32.gmra.mrb[0].mxu0 %v1641
        %v1837 = vpop.f32.mrb[0].mxu0
        %v1838 = vadd.f32 0.0, %v1837
        %v1839 = vpop.f32.mrb[0].mxu0
        %1840 = vmatprep.mubr.f32.mxu0 0.0
        %1841 = vmatmul.mubr.f32.gmra.mrb[0].mxu0 %v1644
        %v1842 = vpop.f32.mrb[0].mxu0
        %v1843 = vadd.f32 0.0, %v1842
        %v1844 = vpop.f32.mrb[0].mxu0
        %1845 = vmatprep.mubr.f32.mxu0 0.0
        %1846 = vmatmul.mubr.f32.gmra.mrb[0].mxu0 %v1647
        %v1847 = vpop.f32.mrb[0].mxu0
        %v1848 = vadd.f32 0.0, %v1847
        %v1849 = vpop.f32.mrb[0].mxu0
        %1850 = vmatprep.mubr.f32.mxu0 0.0
        %1851 = vmatmul.mubr.f32.gmra.mrb[0].mxu0 %v1650
        %v1852 = vpop.f32.mrb[0].mxu0
        %v1853 = vadd.f32 0.0, %v1852
        %v1854 = vpop.f32.mrb[0].mxu0
        %1855 = vmatprep.mubr.f32.mxu0 0.0
        %1856 = vmatmul.mubr.f32.gmra.mrb[0].mxu0 %v1653
        %v1857 = vpop.f32.mrb[0].mxu0
        %v1858 = vadd.f32 0.0, %v1857
        %v1859 = vpop.f32.mrb[0].mxu0
        %1860 = vmatprep.mubr.f32.mxu0 0.0
        %1861 = vmatmul.mubr.f32.gmra.mrb[0].mxu0 %v1656
        %v1862 = vpop.f32.mrb[0].mxu0
        %v1863 = vadd.f32 0.0, %v1862
        %v1864 = vpop.f32.mrb[0].mxu0
        %1865 = vmatprep.mubr.f32.mxu0 0.0
        %1866 = vmatmul.mubr.f32.gmra.mrb[0].mxu0 %v1659
        %v1867 = vpop.f32.mrb[0].mxu0
        %v1868 = vadd.f32 0.0, %v1867
        %v1869 = vpop.f32.mrb[0].mxu0
        %1870 = vmatprep.mubr.f32.mxu0 0.0
        %1871 = vmatmul.mubr.f32.gmra.mrb[0].mxu0 %v1662
        %v1872 = vpop.f32.mrb[0].mxu0
        %v1873 = vadd.f32 0.0, %v1872
        %v1874 = vpop.f32.mrb[0].mxu0
        %1875 = vmatprep.mubr.f32.mxu0 0.0
        %1876 = vmatmul.mubr.f32.gmra.mrb[0].mxu0 %v1665
        %v1877 = vpop.f32.mrb[0].mxu0
        %v1878 = vadd.f32 0.0, %v1877
        %v1879 = vpop.f32.mrb[0].mxu0
        %1880 = vmatprep.mubr.f32.mxu0 0.0
        %1881 = vmatmul.mubr.f32.gmra.mrb[0].mxu0 %v1668
        %v1882 = vpop.f32.mrb[0].mxu0
        %v1883 = vadd.f32 0.0, %v1882
        %v1884 = vpop.f32.mrb[0].mxu0
        %1885 = vmatprep.mubr.f32.mxu0 0.0
        %1886 = vmatmul.mubr.f32.gmra.mrb[0].mxu0 %v1671
        %v1887 = vpop.f32.mrb[0].mxu0
        %v1888 = vadd.f32 0.0, %v1887
        %v1889 = vpop.f32.mrb[0].mxu0
        %1890 = vmatprep.mubr.f32.mxu0 0.0
        %1891 = vmatmul.mubr.f32.gmra.mrb[0].mxu0 %v1674
        %v1892 = vpop.f32.mrb[0].mxu0
        %v1893 = vadd.f32 0.0, %v1892
        %v1894 = vpop.f32.mrb[0].mxu0
        %1895 = vmatprep.mubr.f32.mxu0 0.0
        %1896 = vmatmul.mubr.f32.gmra.mrb[0].mxu0 %v1677
        %v1897 = vpop.f32.mrb[0].mxu0
        %v1898 = vadd.f32 0.0, %v1897
        %v1899 = vpop.f32.mrb[0].mxu0
        %1900 = vmatprep.mubr.f32.mxu0 0.0
        %1901 = vmatmul.mubr.f32.gmra.mrb[0].mxu0 %v1680
        %v1902 = vpop.f32.mrb[0].mxu0
        %v1903 = vadd.f32 0.0, %v1902
        %v1904 = vpop.f32.mrb[0].mxu0
        %1905 = vmatprep.mubr.f32.mxu0 0.0
        %1906 = vmatmul.mubr.f32.gmra.mrb[0].mxu0 %v1683
        %v1907 = vpop.f32.mrb[0].mxu0
        %v1908 = vadd.f32 0.0, %v1907
        %v1909 = vpop.f32.mrb[0].mxu0
        %1910 = vmatprep.mubr.f32.mxu0 0.0
        %1911 = vmatmul.mubr.f32.gmra.mrb[0].mxu0 %v1686
        %v1912 = vpop.f32.mrb[0].mxu0
        %v1913 = vadd.f32 0.0, %v1912
        %v1914 = vpop.f32.mrb[0].mxu0
        %1915 = vdwg.mxu0
        %v1916 = vadd.f32 %v1527, %v1758
        %v1917 = vadd.f32 %v1528, %v1763
        %v1918 = vadd.f32 %v1529, %v1768
        %v1919 = vadd.f32 %v1530, %v1773
        %v1920 = vadd.f32 %v1531, %v1778
        %v1921 = vadd.f32 %v1532, %v1783
        %v1922 = vadd.f32 %v1533, %v1788
        %v1923 = vadd.f32 %v1534, %v1793
        %v1924 = vadd.f32 %v1535, %v1798
        %v1925 = vadd.f32 %v1536, %v1803
        %v1926 = vadd.f32 %v1537, %v1808
        %v1927 = vadd.f32 %v1538, %v1813
        %v1928 = vadd.f32 %v1539, %v1818
        %v1929 = vadd.f32 %v1540, %v1823
        %v1930 = vadd.f32 %v1541, %v1828
        %v1931 = vadd.f32 %v1542, %v1833
        %v1932 = vadd.f32 %v1543, %v1838
        %v1933 = vadd.f32 %v1544, %v1843
        %v1934 = vadd.f32 %v1545, %v1848
        %v1935 = vadd.f32 %v1546, %v1853
        %v1936 = vadd.f32 %v1547, %v1858
        %v1937 = vadd.f32 %v1548, %v1863
        %v1938 = vadd.f32 %v1549, %v1868
        %v1939 = vadd.f32 %v1550, %v1873
        %v1940 = vadd.f32 %v1551, %v1878
        %v1941 = vadd.f32 %v1552, %v1883
        %v1942 = vadd.f32 %v1553, %v1888
        %v1943 = vadd.f32 %v1554, %v1893
        %v1944 = vadd.f32 %v1555, %v1898
        %v1945 = vadd.f32 %v1556, %v1903
        %v1946 = vadd.f32 %v1557, %v1908
        %v1947 = vadd.f32 %v1558, %v1913
        %v1948 = vld [vmem:[%s351 + $0x1] sm:$0xff]
        %v1949 = vld [vmem:[%s351 + $0x9] sm:$0xff]
        %v1950 = vld [vmem:[%s351 + $0x19] sm:$0xff]
        %v1951 = vld [vmem:[%s351 + $0x21] sm:$0xff]
        %v1952 = vld [vmem:[%s351 + $0x31] sm:$0xff]
        %v1953 = vld [vmem:[%s351 + $0x39] sm:$0xff]
        %v1954 = vld [vmem:[%s351 + $0x49] sm:$0xff]
        %v1955 = vld [vmem:[%s351 + $0x51] sm:$0xff]
        %v1956 = vld [vmem:[%s351 + $0x61] sm:$0xff]
        %v1957 = vld [vmem:[%s351 + $0x69] sm:$0xff]
        %v1958 = vld [vmem:[%s351 + $0x79] sm:$0xff]
        %v1959 = vld [vmem:[%s351 + $0x81] sm:$0xff]
        %v1960 = vld [vmem:[%s351 + $0x91] sm:$0xff]
        %v1961 = vld [vmem:[%s351 + $0x99] sm:$0xff]
        %v1962 = vld [vmem:[%s351 + $0xa9] sm:$0xff]
        %v1963 = vld [vmem:[%s351 + $0xb1] sm:$0xff]
        %v1964 = vld [vmem:[%s351 + $0xc1] sm:$0xff]
        %v1965 = vld [vmem:[%s351 + $0xc9] sm:$0xff]
        %v1966 = vld [vmem:[%s351 + $0xd9] sm:$0xff]
        %v1967 = vld [vmem:[%s351 + $0xe1] sm:$0xff]
        %v1968 = vld [vmem:[%s351 + $0xf1] sm:$0xff]
        %v1969 = vld [vmem:[%s351 + $0xf9] sm:$0xff]
        %v1970 = vld [vmem:[%s351 + $0x109] sm:$0xff]
        %v1971 = vld [vmem:[%s351 + $0x111] sm:$0xff]
        %v1972 = vld [vmem:[%s351 + $0x121] sm:$0xff]
        %v1973 = vld [vmem:[%s351 + $0x129] sm:$0xff]
        %v1974 = vld [vmem:[%s351 + $0x139] sm:$0xff]
        %v1975 = vld [vmem:[%s351 + $0x141] sm:$0xff]
        %v1976 = vld [vmem:[%s351 + $0x151] sm:$0xff]
        %v1977 = vld [vmem:[%s351 + $0x159] sm:$0xff]
        %v1978 = vld [vmem:[%s351 + $0x169] sm:$0xff]
        %v1979 = vld [vmem:[%s351 + $0x171] sm:$0xff]
        %v1980 = vld [vmem:[%s1 + $0x10] sm:$0xf]
        %v1982 = vsel %vm263, %v1948, 0
        %v1985 = vsel %vm263, %v1949, 0
        %v1988 = vsel %vm263, %v1950, 0
        %v1991 = vsel %vm263, %v1951, 0
        %v1994 = vsel %vm263, %v1952, 0
        %v1997 = vsel %vm263, %v1953, 0
        %v2000 = vsel %vm263, %v1954, 0
        %v2003 = vsel %vm263, %v1955, 0
        %v2006 = vsel %vm263, %v1956, 0
        %v2009 = vsel %vm263, %v1957, 0
        %v2012 = vsel %vm263, %v1958, 0
        %v2015 = vsel %vm263, %v1959, 0
        %v2018 = vsel %vm263, %v1960, 0
        %v2021 = vsel %vm263, %v1961, 0
        %v2024 = vsel %vm263, %v1962, 0
        %v2027 = vsel %vm263, %v1963, 0
        %v2030 = vsel %vm263, %v1964, 0
        %v2033 = vsel %vm263, %v1965, 0
        %v2036 = vsel %vm263, %v1966, 0
        %v2039 = vsel %vm263, %v1967, 0
        %v2042 = vsel %vm263, %v1968, 0
        %v2045 = vsel %vm263, %v1969, 0
        %v2048 = vsel %vm263, %v1970, 0
        %v2051 = vsel %vm263, %v1971, 0
        %v2054 = vsel %vm263, %v1972, 0
        %v2057 = vsel %vm263, %v1973, 0
        %v2060 = vsel %vm263, %v1974, 0
        %v2063 = vsel %vm263, %v1975, 0
        %v2066 = vsel %vm263, %v1976, 0
        %v2069 = vsel %vm263, %v1977, 0
        %v2072 = vsel %vm263, %v1978, 0
        %v2075 = vsel %vm263, %v1979, 0
        %v2078 = vsel %vm520, %v1980, 0
        %2080 = vmatprep.subr.mxu0 0.0
        %2081 = vmatpush1.msra.mxu0 %v2078
        %2082 = vmatprep.subr.mxu0 0.0
        %2083 = vmatpush1.msra.mxu0 0.0
        %2084 = vmatprep.subr.mxu0 0.0
        %2085 = vmatpush1.msra.mxu0 0.0
        %2086 = vmatprep.subr.mxu0 0.0
        %2087 = vmatpush1.msra.mxu0 0.0
        %2088 = vmatprep.subr.mxu0 0.0
        %2089 = vmatpush1.msra.mxu0 0.0
        %2090 = vmatprep.subr.mxu0 0.0
        %2091 = vmatpush1.msra.mxu0 0.0
        %2092 = vmatprep.subr.mxu0 0.0
        %2093 = vmatpush1.msra.mxu0 0.0
        %2094 = vmatprep.subr.mxu0 0.0
        %2095 = vmatpush1.msra.mxu0 0.0
        %2096 = vmatprep.subr.mxu0 0.0
        %2097 = vmatpush1.msra.mxu0 0.0
        %2098 = vmatprep.subr.mxu0 0.0
        %2099 = vmatpush1.msra.mxu0 0.0
        %2100 = vmatprep.subr.mxu0 0.0
        %2101 = vmatpush1.msra.mxu0 0.0
        %2102 = vmatprep.subr.mxu0 0.0
        %2103 = vmatpush1.msra.mxu0 0.0
        %2104 = vmatprep.subr.mxu0 0.0
        %2105 = vmatpush1.msra.mxu0 0.0
        %2106 = vmatprep.subr.mxu0 0.0
        %2107 = vmatpush1.msra.mxu0 0.0
        %2108 = vmatprep.subr.mxu0 0.0
        %2109 = vmatpush1.msra.mxu0 0.0
        %2110 = vmatprep.subr.mxu0 0.0
        %2111 = vmatpush1.msra.mxu0 0.0
        %2112 = vmatprep.subr.mxu0 0.0
        %2113 = vmatpush1.msra.mxu0 0.0
        %2114 = vmatprep.subr.mxu0 0.0
        %2115 = vmatpush1.msra.mxu0 0.0
        %2116 = vmatprep.subr.mxu0 0.0
        %2117 = vmatpush1.msra.mxu0 0.0
        %2118 = vmatprep.subr.mxu0 0.0
        %2119 = vmatpush1.msra.mxu0 0.0
        %2120 = vmatprep.subr.mxu0 0.0
        %2121 = vmatpush1.msra.mxu0 0.0
        %2122 = vmatprep.subr.mxu0 0.0
        %2123 = vmatpush1.msra.mxu0 0.0
        %2124 = vmatprep.subr.mxu0 0.0
        %2125 = vmatpush1.msra.mxu0 0.0
        %2126 = vmatprep.subr.mxu0 0.0
        %2127 = vmatpush1.msra.mxu0 0.0
        %2128 = vmatprep.subr.mxu0 0.0
        %2129 = vmatpush1.msra.mxu0 0.0
        %2130 = vmatprep.subr.mxu0 0.0
        %2131 = vmatpush1.msra.mxu0 0.0
        %2132 = vmatprep.subr.mxu0 0.0
        %2133 = vmatpush1.msra.mxu0 0.0
        %2134 = vmatprep.subr.mxu0 0.0
        %2135 = vmatpush1.msra.mxu0 0.0
        %2136 = vmatprep.subr.mxu0 0.0
        %2137 = vmatpush1.msra.mxu0 0.0
        %2138 = vmatprep.subr.mxu0 0.0
        %2139 = vmatpush1.msra.mxu0 0.0
        %2140 = vmatprep.subr.mxu0 0.0
        %2141 = vmatpush1.msra.mxu0 0.0
        %2142 = vmatprep.subr.mxu0 0.0
        %2143 = vmatpush1.msra.mxu0 0.0
        %2144 = vmatprep.mubr.f32.mxu0 0.0
        %2145 = vmatmul.mubr.f32.gmra.mrb[0].mxu0 %v1982
        %v2146 = vpop.f32.mrb[0].mxu0
        %v2147 = vadd.f32 0.0, %v2146
        %v2148 = vpop.f32.mrb[0].mxu0
        %2149 = vmatprep.mubr.f32.mxu0 0.0
        %2150 = vmatmul.mubr.f32.gmra.mrb[0].mxu0 %v1985
        %v2151 = vpop.f32.mrb[0].mxu0
        %v2152 = vadd.f32 0.0, %v2151
        %v2153 = vpop.f32.mrb[0].mxu0
        %2154 = vmatprep.mubr.f32.mxu0 0.0
        %2155 = vmatmul.mubr.f32.gmra.mrb[0].mxu0 %v1988
        %v2156 = vpop.f32.mrb[0].mxu0
        %v2157 = vadd.f32 0.0, %v2156
        %v2158 = vpop.f32.mrb[0].mxu0
        %2159 = vmatprep.mubr.f32.mxu0 0.0
        %2160 = vmatmul.mubr.f32.gmra.mrb[0].mxu0 %v1991
        %v2161 = vpop.f32.mrb[0].mxu0
        %v2162 = vadd.f32 0.0, %v2161
        %v2163 = vpop.f32.mrb[0].mxu0
        %2164 = vmatprep.mubr.f32.mxu0 0.0
        %2165 = vmatmul.mubr.f32.gmra.mrb[0].mxu0 %v1994
        %v2166 = vpop.f32.mrb[0].mxu0
        %v2167 = vadd.f32 0.0, %v2166
        %v2168 = vpop.f32.mrb[0].mxu0
        %2169 = vmatprep.mubr.f32.mxu0 0.0
        %2170 = vmatmul.mubr.f32.gmra.mrb[0].mxu0 %v1997
        %v2171 = vpop.f32.mrb[0].mxu0
        %v2172 = vadd.f32 0.0, %v2171
        %v2173 = vpop.f32.mrb[0].mxu0
        %2174 = vmatprep.mubr.f32.mxu0 0.0
        %2175 = vmatmul.mubr.f32.gmra.mrb[0].mxu0 %v2000
        %v2176 = vpop.f32.mrb[0].mxu0
        %v2177 = vadd.f32 0.0, %v2176
        %v2178 = vpop.f32.mrb[0].mxu0
        %2179 = vmatprep.mubr.f32.mxu0 0.0
        %2180 = vmatmul.mubr.f32.gmra.mrb[0].mxu0 %v2003
        %v2181 = vpop.f32.mrb[0].mxu0
        %v2182 = vadd.f32 0.0, %v2181
        %v2183 = vpop.f32.mrb[0].mxu0
        %2184 = vmatprep.mubr.f32.mxu0 0.0
        %2185 = vmatmul.mubr.f32.gmra.mrb[0].mxu0 %v2006
        %v2186 = vpop.f32.mrb[0].mxu0
        %v2187 = vadd.f32 0.0, %v2186
        %v2188 = vpop.f32.mrb[0].mxu0
        %2189 = vmatprep.mubr.f32.mxu0 0.0
        %2190 = vmatmul.mubr.f32.gmra.mrb[0].mxu0 %v2009
        %v2191 = vpop.f32.mrb[0].mxu0
        %v2192 = vadd.f32 0.0, %v2191
        %v2193 = vpop.f32.mrb[0].mxu0
        %2194 = vmatprep.mubr.f32.mxu0 0.0
        %2195 = vmatmul.mubr.f32.gmra.mrb[0].mxu0 %v2012
        %v2196 = vpop.f32.mrb[0].mxu0
        %v2197 = vadd.f32 0.0, %v2196
        %v2198 = vpop.f32.mrb[0].mxu0
        %2199 = vmatprep.mubr.f32.mxu0 0.0
        %2200 = vmatmul.mubr.f32.gmra.mrb[0].mxu0 %v2015
        %v2201 = vpop.f32.mrb[0].mxu0
        %v2202 = vadd.f32 0.0, %v2201
        %v2203 = vpop.f32.mrb[0].mxu0
        %2204 = vmatprep.mubr.f32.mxu0 0.0
        %2205 = vmatmul.mubr.f32.gmra.mrb[0].mxu0 %v2018
        %v2206 = vpop.f32.mrb[0].mxu0
        %v2207 = vadd.f32 0.0, %v2206
        %v2208 = vpop.f32.mrb[0].mxu0
        %2209 = vmatprep.mubr.f32.mxu0 0.0
        %2210 = vmatmul.mubr.f32.gmra.mrb[0].mxu0 %v2021
        %v2211 = vpop.f32.mrb[0].mxu0
        %v2212 = vadd.f32 0.0, %v2211
        %v2213 = vpop.f32.mrb[0].mxu0
        %2214 = vmatprep.mubr.f32.mxu0 0.0
        %2215 = vmatmul.mubr.f32.gmra.mrb[0].mxu0 %v2024
        %v2216 = vpop.f32.mrb[0].mxu0
        %v2217 = vadd.f32 0.0, %v2216
        %v2218 = vpop.f32.mrb[0].mxu0
        %2219 = vmatprep.mubr.f32.mxu0 0.0
        %2220 = vmatmul.mubr.f32.gmra.mrb[0].mxu0 %v2027
        %v2221 = vpop.f32.mrb[0].mxu0
        %v2222 = vadd.f32 0.0, %v2221
        %v2223 = vpop.f32.mrb[0].mxu0
        %2224 = vmatprep.mubr.f32.mxu0 0.0
        %2225 = vmatmul.mubr.f32.gmra.mrb[0].mxu0 %v2030
        %v2226 = vpop.f32.mrb[0].mxu0
        %v2227 = vadd.f32 0.0, %v2226
        %v2228 = vpop.f32.mrb[0].mxu0
        %2229 = vmatprep.mubr.f32.mxu0 0.0
        %2230 = vmatmul.mubr.f32.gmra.mrb[0].mxu0 %v2033
        %v2231 = vpop.f32.mrb[0].mxu0
        %v2232 = vadd.f32 0.0, %v2231
        %v2233 = vpop.f32.mrb[0].mxu0
        %2234 = vmatprep.mubr.f32.mxu0 0.0
        %2235 = vmatmul.mubr.f32.gmra.mrb[0].mxu0 %v2036
        %v2236 = vpop.f32.mrb[0].mxu0
        %v2237 = vadd.f32 0.0, %v2236
        %v2238 = vpop.f32.mrb[0].mxu0
        %2239 = vmatprep.mubr.f32.mxu0 0.0
        %2240 = vmatmul.mubr.f32.gmra.mrb[0].mxu0 %v2039
        %v2241 = vpop.f32.mrb[0].mxu0
        %v2242 = vadd.f32 0.0, %v2241
        %v2243 = vpop.f32.mrb[0].mxu0
        %2244 = vmatprep.mubr.f32.mxu0 0.0
        %2245 = vmatmul.mubr.f32.gmra.mrb[0].mxu0 %v2042
        %v2246 = vpop.f32.mrb[0].mxu0
        %v2247 = vadd.f32 0.0, %v2246
        %v2248 = vpop.f32.mrb[0].mxu0
        %2249 = vmatprep.mubr.f32.mxu0 0.0
        %2250 = vmatmul.mubr.f32.gmra.mrb[0].mxu0 %v2045
        %v2251 = vpop.f32.mrb[0].mxu0
        %v2252 = vadd.f32 0.0, %v2251
        %v2253 = vpop.f32.mrb[0].mxu0
        %2254 = vmatprep.mubr.f32.mxu0 0.0
        %2255 = vmatmul.mubr.f32.gmra.mrb[0].mxu0 %v2048
        %v2256 = vpop.f32.mrb[0].mxu0
        %v2257 = vadd.f32 0.0, %v2256
        %v2258 = vpop.f32.mrb[0].mxu0
        %2259 = vmatprep.mubr.f32.mxu0 0.0
        %2260 = vmatmul.mubr.f32.gmra.mrb[0].mxu0 %v2051
        %v2261 = vpop.f32.mrb[0].mxu0
        %v2262 = vadd.f32 0.0, %v2261
        %v2263 = vpop.f32.mrb[0].mxu0
        %2264 = vmatprep.mubr.f32.mxu0 0.0
        %2265 = vmatmul.mubr.f32.gmra.mrb[0].mxu0 %v2054
        %v2266 = vpop.f32.mrb[0].mxu0
        %v2267 = vadd.f32 0.0, %v2266
        %v2268 = vpop.f32.mrb[0].mxu0
        %2269 = vmatprep.mubr.f32.mxu0 0.0
        %2270 = vmatmul.mubr.f32.gmra.mrb[0].mxu0 %v2057
        %v2271 = vpop.f32.mrb[0].mxu0
        %v2272 = vadd.f32 0.0, %v2271
        %v2273 = vpop.f32.mrb[0].mxu0
        %2274 = vmatprep.mubr.f32.mxu0 0.0
        %2275 = vmatmul.mubr.f32.gmra.mrb[0].mxu0 %v2060
        %v2276 = vpop.f32.mrb[0].mxu0
        %v2277 = vadd.f32 0.0, %v2276
        %v2278 = vpop.f32.mrb[0].mxu0
        %2279 = vmatprep.mubr.f32.mxu0 0.0
        %2280 = vmatmul.mubr.f32.gmra.mrb[0].mxu0 %v2063
        %v2281 = vpop.f32.mrb[0].mxu0
        %v2282 = vadd.f32 0.0, %v2281
        %v2283 = vpop.f32.mrb[0].mxu0
        %2284 = vmatprep.mubr.f32.mxu0 0.0
        %2285 = vmatmul.mubr.f32.gmra.mrb[0].mxu0 %v2066
        %v2286 = vpop.f32.mrb[0].mxu0
        %v2287 = vadd.f32 0.0, %v2286
        %v2288 = vpop.f32.mrb[0].mxu0
        %2289 = vmatprep.mubr.f32.mxu0 0.0
        %2290 = vmatmul.mubr.f32.gmra.mrb[0].mxu0 %v2069
        %v2291 = vpop.f32.mrb[0].mxu0
        %v2292 = vadd.f32 0.0, %v2291
        %v2293 = vpop.f32.mrb[0].mxu0
        %2294 = vmatprep.mubr.f32.mxu0 0.0
        %2295 = vmatmul.mubr.f32.gmra.mrb[0].mxu0 %v2072
        %v2296 = vpop.f32.mrb[0].mxu0
        %v2297 = vadd.f32 0.0, %v2296
        %v2298 = vpop.f32.mrb[0].mxu0
        %2299 = vmatprep.mubr.f32.mxu0 0.0
        %2300 = vmatmul.mubr.f32.gmra.mrb[0].mxu0 %v2075
        %v2301 = vpop.f32.mrb[0].mxu0
        %v2302 = vadd.f32 0.0, %v2301
        %v2303 = vpop.f32.mrb[0].mxu0
        %2304 = vdwg.mxu0
        %v2305 = vadd.f32 %v1916, %v2147
        %v2306 = vadd.f32 %v1917, %v2152
        %v2307 = vadd.f32 %v1918, %v2157
        %v2308 = vadd.f32 %v1919, %v2162
        %v2309 = vadd.f32 %v1920, %v2167
        %v2310 = vadd.f32 %v1921, %v2172
        %v2311 = vadd.f32 %v1922, %v2177
        %v2312 = vadd.f32 %v1923, %v2182
        %v2313 = vadd.f32 %v1924, %v2187
        %v2314 = vadd.f32 %v1925, %v2192
        %v2315 = vadd.f32 %v1926, %v2197
        %v2316 = vadd.f32 %v1927, %v2202
        %v2317 = vadd.f32 %v1928, %v2207
        %v2318 = vadd.f32 %v1929, %v2212
        %v2319 = vadd.f32 %v1930, %v2217
        %v2320 = vadd.f32 %v1931, %v2222
        %v2321 = vadd.f32 %v1932, %v2227
        %v2322 = vadd.f32 %v1933, %v2232
        %v2323 = vadd.f32 %v1934, %v2237
        %v2324 = vadd.f32 %v1935, %v2242
        %v2325 = vadd.f32 %v1936, %v2247
        %v2326 = vadd.f32 %v1937, %v2252
        %v2327 = vadd.f32 %v1938, %v2257
        %v2328 = vadd.f32 %v1939, %v2262
        %v2329 = vadd.f32 %v1940, %v2267
        %v2330 = vadd.f32 %v1941, %v2272
        %v2331 = vadd.f32 %v1942, %v2277
        %v2332 = vadd.f32 %v1943, %v2282
        %v2333 = vadd.f32 %v1944, %v2287
        %v2334 = vadd.f32 %v1945, %v2292
        %v2335 = vadd.f32 %v1946, %v2297
        %v2336 = vadd.f32 %v1947, %v2302
        %v2337 = vld [vmem:[%s351 + $0x2] sm:$0xff]
        %v2338 = vld [vmem:[%s351 + $0xa] sm:$0xff]
        %v2339 = vld [vmem:[%s351 + $0x1a] sm:$0xff]
        %v2340 = vld [vmem:[%s351 + $0x22] sm:$0xff]
        %v2341 = vld [vmem:[%s351 + $0x32] sm:$0xff]
        %v2342 = vld [vmem:[%s351 + $0x3a] sm:$0xff]
        %v2343 = vld [vmem:[%s351 + $0x4a] sm:$0xff]
        %v2344 = vld [vmem:[%s351 + $0x52] sm:$0xff]
        %v2345 = vld [vmem:[%s351 + $0x62] sm:$0xff]
        %v2346 = vld [vmem:[%s351 + $0x6a] sm:$0xff]
        %v2347 = vld [vmem:[%s351 + $0x7a] sm:$0xff]
        %v2348 = vld [vmem:[%s351 + $0x82] sm:$0xff]
        %v2349 = vld [vmem:[%s351 + $0x92] sm:$0xff]
        %v2350 = vld [vmem:[%s351 + $0x9a] sm:$0xff]
        %v2351 = vld [vmem:[%s351 + $0xaa] sm:$0xff]
        %v2352 = vld [vmem:[%s351 + $0xb2] sm:$0xff]
        %v2353 = vld [vmem:[%s351 + $0xc2] sm:$0xff]
        %v2354 = vld [vmem:[%s351 + $0xca] sm:$0xff]
        %v2355 = vld [vmem:[%s351 + $0xda] sm:$0xff]
        %v2356 = vld [vmem:[%s351 + $0xe2] sm:$0xff]
        %v2357 = vld [vmem:[%s351 + $0xf2] sm:$0xff]
        %v2358 = vld [vmem:[%s351 + $0xfa] sm:$0xff]
        %v2359 = vld [vmem:[%s351 + $0x10a] sm:$0xff]
        %v2360 = vld [vmem:[%s351 + $0x112] sm:$0xff]
        %v2361 = vld [vmem:[%s351 + $0x122] sm:$0xff]
        %v2362 = vld [vmem:[%s351 + $0x12a] sm:$0xff]
        %v2363 = vld [vmem:[%s351 + $0x13a] sm:$0xff]
        %v2364 = vld [vmem:[%s351 + $0x142] sm:$0xff]
        %v2365 = vld [vmem:[%s351 + $0x152] sm:$0xff]
        %v2366 = vld [vmem:[%s351 + $0x15a] sm:$0xff]
        %v2367 = vld [vmem:[%s351 + $0x16a] sm:$0xff]
        %v2368 = vld [vmem:[%s351 + $0x172] sm:$0xff]
        %v2369 = vld [vmem:[%s1 + $0x14] sm:$0xf]
        %v2371 = vsel %vm263, %v2337, 0
        %v2374 = vsel %vm263, %v2338, 0
        %v2377 = vsel %vm263, %v2339, 0
        %v2380 = vsel %vm263, %v2340, 0
        %v2383 = vsel %vm263, %v2341, 0
        %v2386 = vsel %vm263, %v2342, 0
        %v2389 = vsel %vm263, %v2343, 0
        %v2392 = vsel %vm263, %v2344, 0
        %v2395 = vsel %vm263, %v2345, 0
        %v2398 = vsel %vm263, %v2346, 0
        %v2401 = vsel %vm263, %v2347, 0
        %v2404 = vsel %vm263, %v2348, 0
        %v2407 = vsel %vm263, %v2349, 0
        %v2410 = vsel %vm263, %v2350, 0
        %v2413 = vsel %vm263, %v2351, 0
        %v2416 = vsel %vm263, %v2352, 0
        %v2419 = vsel %vm263, %v2353, 0
        %v2422 = vsel %vm263, %v2354, 0
        %v2425 = vsel %vm263, %v2355, 0
        %v2428 = vsel %vm263, %v2356, 0
        %v2431 = vsel %vm263, %v2357, 0
        %v2434 = vsel %vm263, %v2358, 0
        %v2437 = vsel %vm263, %v2359, 0
        %v2440 = vsel %vm263, %v2360, 0
        %v2443 = vsel %vm263, %v2361, 0
        %v2446 = vsel %vm263, %v2362, 0
        %v2449 = vsel %vm263, %v2363, 0
        %v2452 = vsel %vm263, %v2364, 0
        %v2455 = vsel %vm263, %v2365, 0
        %v2458 = vsel %vm263, %v2366, 0
        %v2461 = vsel %vm263, %v2367, 0
        %v2464 = vsel %vm263, %v2368, 0
        %v2467 = vsel %vm520, %v2369, 0
        %2469 = vmatprep.subr.mxu0 0.0
        %2470 = vmatpush1.msra.mxu0 %v2467
        %2471 = vmatprep.subr.mxu0 0.0
        %2472 = vmatpush1.msra.mxu0 0.0
        %2473 = vmatprep.subr.mxu0 0.0
        %2474 = vmatpush1.msra.mxu0 0.0
        %2475 = vmatprep.subr.mxu0 0.0
        %2476 = vmatpush1.msra.mxu0 0.0
        %2477 = vmatprep.subr.mxu0 0.0
        %2478 = vmatpush1.msra.mxu0 0.0
        %2479 = vmatprep.subr.mxu0 0.0
        %2480 = vmatpush1.msra.mxu0 0.0
        %2481 = vmatprep.subr.mxu0 0.0
        %2482 = vmatpush1.msra.mxu0 0.0
        %2483 = vmatprep.subr.mxu0 0.0
        %2484 = vmatpush1.msra.mxu0 0.0
        %2485 = vmatprep.subr.mxu0 0.0
        %2486 = vmatpush1.msra.mxu0 0.0
        %2487 = vmatprep.subr.mxu0 0.0
        %2488 = vmatpush1.msra.mxu0 0.0
        %2489 = vmatprep.subr.mxu0 0.0
        %2490 = vmatpush1.msra.mxu0 0.0
        %2491 = vmatprep.subr.mxu0 0.0
        %2492 = vmatpush1.msra.mxu0 0.0
        %2493 = vmatprep.subr.mxu0 0.0
        %2494 = vmatpush1.msra.mxu0 0.0
        %2495 = vmatprep.subr.mxu0 0.0
        %2496 = vmatpush1.msra.mxu0 0.0
        %2497 = vmatprep.subr.mxu0 0.0
        %2498 = vmatpush1.msra.mxu0 0.0
        %2499 = vmatprep.subr.mxu0 0.0
        %2500 = vmatpush1.msra.mxu0 0.0
        %2501 = vmatprep.subr.mxu0 0.0
        %2502 = vmatpush1.msra.mxu0 0.0
        %2503 = vmatprep.subr.mxu0 0.0
        %2504 = vmatpush1.msra.mxu0 0.0
        %2505 = vmatprep.subr.mxu0 0.0
        %2506 = vmatpush1.msra.mxu0 0.0
        %2507 = vmatprep.subr.mxu0 0.0
        %2508 = vmatpush1.msra.mxu0 0.0
        %2509 = vmatprep.subr.mxu0 0.0
        %2510 = vmatpush1.msra.mxu0 0.0
        %2511 = vmatprep.subr.mxu0 0.0
        %2512 = vmatpush1.msra.mxu0 0.0
        %2513 = vmatprep.subr.mxu0 0.0
        %2514 = vmatpush1.msra.mxu0 0.0
        %2515 = vmatprep.subr.mxu0 0.0
        %2516 = vmatpush1.msra.mxu0 0.0
        %2517 = vmatprep.subr.mxu0 0.0
        %2518 = vmatpush1.msra.mxu0 0.0
        %2519 = vmatprep.subr.mxu0 0.0
        %2520 = vmatpush1.msra.mxu0 0.0
        %2521 = vmatprep.subr.mxu0 0.0
        %2522 = vmatpush1.msra.mxu0 0.0
        %2523 = vmatprep.subr.mxu0 0.0
        %2524 = vmatpush1.msra.mxu0 0.0
        %2525 = vmatprep.subr.mxu0 0.0
        %2526 = vmatpush1.msra.mxu0 0.0
        %2527 = vmatprep.subr.mxu0 0.0
        %2528 = vmatpush1.msra.mxu0 0.0
        %2529 = vmatprep.subr.mxu0 0.0
        %2530 = vmatpush1.msra.mxu0 0.0
        %2531 = vmatprep.subr.mxu0 0.0
        %2532 = vmatpush1.msra.mxu0 0.0
        %2533 = vmatprep.mubr.f32.mxu0 0.0
        %2534 = vmatmul.mubr.f32.gmra.mrb[0].mxu0 %v2371
        %v2535 = vpop.f32.mrb[0].mxu0
        %v2536 = vadd.f32 0.0, %v2535
        %v2537 = vpop.f32.mrb[0].mxu0
        %2538 = vmatprep.mubr.f32.mxu0 0.0
        %2539 = vmatmul.mubr.f32.gmra.mrb[0].mxu0 %v2374
        %v2540 = vpop.f32.mrb[0].mxu0
        %v2541 = vadd.f32 0.0, %v2540
        %v2542 = vpop.f32.mrb[0].mxu0
        %2543 = vmatprep.mubr.f32.mxu0 0.0
        %2544 = vmatmul.mubr.f32.gmra.mrb[0].mxu0 %v2377
        %v2545 = vpop.f32.mrb[0].mxu0
        %v2546 = vadd.f32 0.0, %v2545
        %v2547 = vpop.f32.mrb[0].mxu0
        %2548 = vmatprep.mubr.f32.mxu0 0.0
        %2549 = vmatmul.mubr.f32.gmra.mrb[0].mxu0 %v2380
        %v2550 = vpop.f32.mrb[0].mxu0
        %v2551 = vadd.f32 0.0, %v2550
        %v2552 = vpop.f32.mrb[0].mxu0
        %2553 = vmatprep.mubr.f32.mxu0 0.0
        %2554 = vmatmul.mubr.f32.gmra.mrb[0].mxu0 %v2383
        %v2555 = vpop.f32.mrb[0].mxu0
        %v2556 = vadd.f32 0.0, %v2555
        %v2557 = vpop.f32.mrb[0].mxu0
        %2558 = vmatprep.mubr.f32.mxu0 0.0
        %2559 = vmatmul.mubr.f32.gmra.mrb[0].mxu0 %v2386
        %v2560 = vpop.f32.mrb[0].mxu0
        %v2561 = vadd.f32 0.0, %v2560
        %v2562 = vpop.f32.mrb[0].mxu0
        %2563 = vmatprep.mubr.f32.mxu0 0.0
        %2564 = vmatmul.mubr.f32.gmra.mrb[0].mxu0 %v2389
        %v2565 = vpop.f32.mrb[0].mxu0
        %v2566 = vadd.f32 0.0, %v2565
        %v2567 = vpop.f32.mrb[0].mxu0
        %2568 = vmatprep.mubr.f32.mxu0 0.0
        %2569 = vmatmul.mubr.f32.gmra.mrb[0].mxu0 %v2392
        %v2570 = vpop.f32.mrb[0].mxu0
        %v2571 = vadd.f32 0.0, %v2570
        %v2572 = vpop.f32.mrb[0].mxu0
        %2573 = vmatprep.mubr.f32.mxu0 0.0
        %2574 = vmatmul.mubr.f32.gmra.mrb[0].mxu0 %v2395
        %v2575 = vpop.f32.mrb[0].mxu0
        %v2576 = vadd.f32 0.0, %v2575
        %v2577 = vpop.f32.mrb[0].mxu0
        %2578 = vmatprep.mubr.f32.mxu0 0.0
        %2579 = vmatmul.mubr.f32.gmra.mrb[0].mxu0 %v2398
        %v2580 = vpop.f32.mrb[0].mxu0
        %v2581 = vadd.f32 0.0, %v2580
        %v2582 = vpop.f32.mrb[0].mxu0
        %2583 = vmatprep.mubr.f32.mxu0 0.0
        %2584 = vmatmul.mubr.f32.gmra.mrb[0].mxu0 %v2401
        %v2585 = vpop.f32.mrb[0].mxu0
        %v2586 = vadd.f32 0.0, %v2585
        %v2587 = vpop.f32.mrb[0].mxu0
        %2588 = vmatprep.mubr.f32.mxu0 0.0
        %2589 = vmatmul.mubr.f32.gmra.mrb[0].mxu0 %v2404
        %v2590 = vpop.f32.mrb[0].mxu0
        %v2591 = vadd.f32 0.0, %v2590
        %v2592 = vpop.f32.mrb[0].mxu0
        %2593 = vmatprep.mubr.f32.mxu0 0.0
        %2594 = vmatmul.mubr.f32.gmra.mrb[0].mxu0 %v2407
        %v2595 = vpop.f32.mrb[0].mxu0
        %v2596 = vadd.f32 0.0, %v2595
        %v2597 = vpop.f32.mrb[0].mxu0
        %2598 = vmatprep.mubr.f32.mxu0 0.0
        %2599 = vmatmul.mubr.f32.gmra.mrb[0].mxu0 %v2410
        %v2600 = vpop.f32.mrb[0].mxu0
        %v2601 = vadd.f32 0.0, %v2600
        %v2602 = vpop.f32.mrb[0].mxu0
        %2603 = vmatprep.mubr.f32.mxu0 0.0
        %2604 = vmatmul.mubr.f32.gmra.mrb[0].mxu0 %v2413
        %v2605 = vpop.f32.mrb[0].mxu0
        %v2606 = vadd.f32 0.0, %v2605
        %v2607 = vpop.f32.mrb[0].mxu0
        %2608 = vmatprep.mubr.f32.mxu0 0.0
        %2609 = vmatmul.mubr.f32.gmra.mrb[0].mxu0 %v2416
        %v2610 = vpop.f32.mrb[0].mxu0
        %v2611 = vadd.f32 0.0, %v2610
        %v2612 = vpop.f32.mrb[0].mxu0
        %2613 = vmatprep.mubr.f32.mxu0 0.0
        %2614 = vmatmul.mubr.f32.gmra.mrb[0].mxu0 %v2419
        %v2615 = vpop.f32.mrb[0].mxu0
        %v2616 = vadd.f32 0.0, %v2615
        %v2617 = vpop.f32.mrb[0].mxu0
        %2618 = vmatprep.mubr.f32.mxu0 0.0
        %2619 = vmatmul.mubr.f32.gmra.mrb[0].mxu0 %v2422
        %v2620 = vpop.f32.mrb[0].mxu0
        %v2621 = vadd.f32 0.0, %v2620
        %v2622 = vpop.f32.mrb[0].mxu0
        %2623 = vmatprep.mubr.f32.mxu0 0.0
        %2624 = vmatmul.mubr.f32.gmra.mrb[0].mxu0 %v2425
        %v2625 = vpop.f32.mrb[0].mxu0
        %v2626 = vadd.f32 0.0, %v2625
        %v2627 = vpop.f32.mrb[0].mxu0
        %2628 = vmatprep.mubr.f32.mxu0 0.0
        %2629 = vmatmul.mubr.f32.gmra.mrb[0].mxu0 %v2428
        %v2630 = vpop.f32.mrb[0].mxu0
        %v2631 = vadd.f32 0.0, %v2630
        %v2632 = vpop.f32.mrb[0].mxu0
        %2633 = vmatprep.mubr.f32.mxu0 0.0
        %2634 = vmatmul.mubr.f32.gmra.mrb[0].mxu0 %v2431
        %v2635 = vpop.f32.mrb[0].mxu0
        %v2636 = vadd.f32 0.0, %v2635
        %v2637 = vpop.f32.mrb[0].mxu0
        %2638 = vmatprep.mubr.f32.mxu0 0.0
        %2639 = vmatmul.mubr.f32.gmra.mrb[0].mxu0 %v2434
        %v2640 = vpop.f32.mrb[0].mxu0
        %v2641 = vadd.f32 0.0, %v2640
        %v2642 = vpop.f32.mrb[0].mxu0
        %2643 = vmatprep.mubr.f32.mxu0 0.0
        %2644 = vmatmul.mubr.f32.gmra.mrb[0].mxu0 %v2437
        %v2645 = vpop.f32.mrb[0].mxu0
        %v2646 = vadd.f32 0.0, %v2645
        %v2647 = vpop.f32.mrb[0].mxu0
        %2648 = vmatprep.mubr.f32.mxu0 0.0
        %2649 = vmatmul.mubr.f32.gmra.mrb[0].mxu0 %v2440
        %v2650 = vpop.f32.mrb[0].mxu0
        %v2651 = vadd.f32 0.0, %v2650
        %v2652 = vpop.f32.mrb[0].mxu0
        %2653 = vmatprep.mubr.f32.mxu0 0.0
        %2654 = vmatmul.mubr.f32.gmra.mrb[0].mxu0 %v2443
        %v2655 = vpop.f32.mrb[0].mxu0
        %v2656 = vadd.f32 0.0, %v2655
        %v2657 = vpop.f32.mrb[0].mxu0
        %2658 = vmatprep.mubr.f32.mxu0 0.0
        %2659 = vmatmul.mubr.f32.gmra.mrb[0].mxu0 %v2446
        %v2660 = vpop.f32.mrb[0].mxu0
        %v2661 = vadd.f32 0.0, %v2660
        %v2662 = vpop.f32.mrb[0].mxu0
        %2663 = vmatprep.mubr.f32.mxu0 0.0
        %2664 = vmatmul.mubr.f32.gmra.mrb[0].mxu0 %v2449
        %v2665 = vpop.f32.mrb[0].mxu0
        %v2666 = vadd.f32 0.0, %v2665
        %v2667 = vpop.f32.mrb[0].mxu0
        %2668 = vmatprep.mubr.f32.mxu0 0.0
        %2669 = vmatmul.mubr.f32.gmra.mrb[0].mxu0 %v2452
        %v2670 = vpop.f32.mrb[0].mxu0
        %v2671 = vadd.f32 0.0, %v2670
        %v2672 = vpop.f32.mrb[0].mxu0
        %2673 = vmatprep.mubr.f32.mxu0 0.0
        %2674 = vmatmul.mubr.f32.gmra.mrb[0].mxu0 %v2455
        %v2675 = vpop.f32.mrb[0].mxu0
        %v2676 = vadd.f32 0.0, %v2675
        %v2677 = vpop.f32.mrb[0].mxu0
        %2678 = vmatprep.mubr.f32.mxu0 0.0
        %2679 = vmatmul.mubr.f32.gmra.mrb[0].mxu0 %v2458
        %v2680 = vpop.f32.mrb[0].mxu0
        %v2681 = vadd.f32 0.0, %v2680
        %v2682 = vpop.f32.mrb[0].mxu0
        %2683 = vmatprep.mubr.f32.mxu0 0.0
        %2684 = vmatmul.mubr.f32.gmra.mrb[0].mxu0 %v2461
        %v2685 = vpop.f32.mrb[0].mxu0
        %v2686 = vadd.f32 0.0, %v2685
        %v2687 = vpop.f32.mrb[0].mxu0
        %2688 = vmatprep.mubr.f32.mxu0 0.0
        %2689 = vmatmul.mubr.f32.gmra.mrb[0].mxu0 %v2464
        %v2690 = vpop.f32.mrb[0].mxu0
        %v2691 = vadd.f32 0.0, %v2690
        %v2692 = vpop.f32.mrb[0].mxu0
        %2693 = vdwg.mxu0
        %v2694 = vadd.f32 %v2305, %v2536
        %v2695 = vadd.f32 %v2306, %v2541
        %v2696 = vadd.f32 %v2307, %v2546
        %v2697 = vadd.f32 %v2308, %v2551
        %v2698 = vadd.f32 %v2309, %v2556
        %v2699 = vadd.f32 %v2310, %v2561
        %v2700 = vadd.f32 %v2311, %v2566
        %v2701 = vadd.f32 %v2312, %v2571
        %v2702 = vadd.f32 %v2313, %v2576
        %v2703 = vadd.f32 %v2314, %v2581
        %v2704 = vadd.f32 %v2315, %v2586
        %v2705 = vadd.f32 %v2316, %v2591
        %v2706 = vadd.f32 %v2317, %v2596
        %v2707 = vadd.f32 %v2318, %v2601
        %v2708 = vadd.f32 %v2319, %v2606
        %v2709 = vadd.f32 %v2320, %v2611
        %v2710 = vadd.f32 %v2321, %v2616
        %v2711 = vadd.f32 %v2322, %v2621
        %v2712 = vadd.f32 %v2323, %v2626
        %v2713 = vadd.f32 %v2324, %v2631
        %v2714 = vadd.f32 %v2325, %v2636
        %v2715 = vadd.f32 %v2326, %v2641
        %v2716 = vadd.f32 %v2327, %v2646
        %v2717 = vadd.f32 %v2328, %v2651
        %v2718 = vadd.f32 %v2329, %v2656
        %v2719 = vadd.f32 %v2330, %v2661
        %v2720 = vadd.f32 %v2331, %v2666
        %v2721 = vadd.f32 %v2332, %v2671
        %v2722 = vadd.f32 %v2333, %v2676
        %v2723 = vadd.f32 %v2334, %v2681
        %v2724 = vadd.f32 %v2335, %v2686
        %v2725 = vadd.f32 %v2336, %v2691
        %s2726 = scalar_lea.vmem [#allocation2], 48
        %v2727 = vld [vmem:[%s2726] sm:$0xff]
        %v2728 = vld [vmem:[%s2726 + $0x8] sm:$0xff]
        %v2729 = vld [vmem:[%s2726 + $0x18] sm:$0xff]
        %v2730 = vld [vmem:[%s2726 + $0x20] sm:$0xff]
        %v2731 = vld [vmem:[%s2726 + $0x30] sm:$0xff]
        %v2732 = vld [vmem:[%s2726 + $0x38] sm:$0xff]
        %v2733 = vld [vmem:[%s2726 + $0x48] sm:$0xff]
        %v2734 = vld [vmem:[%s2726 + $0x50] sm:$0xff]
        %v2735 = vld [vmem:[%s2726 + $0x60] sm:$0xff]
        %v2736 = vld [vmem:[%s2726 + $0x68] sm:$0xff]
        %v2737 = vld [vmem:[%s2726 + $0x78] sm:$0xff]
        %v2738 = vld [vmem:[%s2726 + $0x80] sm:$0xff]
        %v2739 = vld [vmem:[%s2726 + $0x90] sm:$0xff]
        %v2740 = vld [vmem:[%s2726 + $0x98] sm:$0xff]
        %v2741 = vld [vmem:[%s2726 + $0xa8] sm:$0xff]
        %v2742 = vld [vmem:[%s2726 + $0xb0] sm:$0xff]
        %v2743 = vld [vmem:[%s2726 + $0xc0] sm:$0xff]
        %v2744 = vld [vmem:[%s2726 + $0xc8] sm:$0xff]
        %v2745 = vld [vmem:[%s2726 + $0xd8] sm:$0xff]
        %v2746 = vld [vmem:[%s2726 + $0xe0] sm:$0xff]
        %v2747 = vld [vmem:[%s2726 + $0xf0] sm:$0xff]
        %v2748 = vld [vmem:[%s2726 + $0xf8] sm:$0xff]
        %v2749 = vld [vmem:[%s2726 + $0x108] sm:$0xff]
        %v2750 = vld [vmem:[%s2726 + $0x110] sm:$0xff]
        %v2751 = vld [vmem:[%s2726 + $0x120] sm:$0xff]
        %v2752 = vld [vmem:[%s2726 + $0x128] sm:$0xff]
        %v2753 = vld [vmem:[%s2726 + $0x138] sm:$0xff]
        %v2754 = vld [vmem:[%s2726 + $0x140] sm:$0xff]
        %v2755 = vld [vmem:[%s2726 + $0x150] sm:$0xff]
        %v2756 = vld [vmem:[%s2726 + $0x158] sm:$0xff]
        %v2757 = vld [vmem:[%s2726 + $0x168] sm:$0xff]
        %v2758 = vld [vmem:[%s2726 + $0x170] sm:$0xff]
        %v2759 = vld [vmem:[%s1 + $0x18] sm:$0xf]
        %v2761 = vsel %vm263, %v2727, 0
        %v2764 = vsel %vm263, %v2728, 0
        %v2767 = vsel %vm263, %v2729, 0
        %v2770 = vsel %vm263, %v2730, 0
        %v2773 = vsel %vm263, %v2731, 0
        %v2776 = vsel %vm263, %v2732, 0
        %v2779 = vsel %vm263, %v2733, 0
        %v2782 = vsel %vm263, %v2734, 0
        %v2785 = vsel %vm263, %v2735, 0
        %v2788 = vsel %vm263, %v2736, 0
        %v2791 = vsel %vm263, %v2737, 0
        %v2794 = vsel %vm263, %v2738, 0
        %v2797 = vsel %vm263, %v2739, 0
        %v2800 = vsel %vm263, %v2740, 0
        %v2803 = vsel %vm263, %v2741, 0
        %v2806 = vsel %vm263, %v2742, 0
        %v2809 = vsel %vm263, %v2743, 0
        %v2812 = vsel %vm263, %v2744, 0
        %v2815 = vsel %vm263, %v2745, 0
        %v2818 = vsel %vm263, %v2746, 0
        %v2821 = vsel %vm263, %v2747, 0
        %v2824 = vsel %vm263, %v2748, 0
        %v2827 = vsel %vm263, %v2749, 0
        %v2830 = vsel %vm263, %v2750, 0
        %v2833 = vsel %vm263, %v2751, 0
        %v2836 = vsel %vm263, %v2752, 0
        %v2839 = vsel %vm263, %v2753, 0
        %v2842 = vsel %vm263, %v2754, 0
        %v2845 = vsel %vm263, %v2755, 0
        %v2848 = vsel %vm263, %v2756, 0
        %v2851 = vsel %vm263, %v2757, 0
        %v2854 = vsel %vm263, %v2758, 0
        %v2857 = vsel %vm520, %v2759, 0
        %2859 = vmatprep.subr.mxu0 0.0
        %2860 = vmatpush1.msra.mxu0 %v2857
        %2861 = vmatprep.subr.mxu0 0.0
        %2862 = vmatpush1.msra.mxu0 0.0
        %2863 = vmatprep.subr.mxu0 0.0
        %2864 = vmatpush1.msra.mxu0 0.0
        %2865 = vmatprep.subr.mxu0 0.0
        %2866 = vmatpush1.msra.mxu0 0.0
        %2867 = vmatprep.subr.mxu0 0.0
        %2868 = vmatpush1.msra.mxu0 0.0
        %2869 = vmatprep.subr.mxu0 0.0
        %2870 = vmatpush1.msra.mxu0 0.0
        %2871 = vmatprep.subr.mxu0 0.0
        %2872 = vmatpush1.msra.mxu0 0.0
        %2873 = vmatprep.subr.mxu0 0.0
        %2874 = vmatpush1.msra.mxu0 0.0
        %2875 = vmatprep.subr.mxu0 0.0
        %2876 = vmatpush1.msra.mxu0 0.0
        %2877 = vmatprep.subr.mxu0 0.0
        %2878 = vmatpush1.msra.mxu0 0.0
        %2879 = vmatprep.subr.mxu0 0.0
        %2880 = vmatpush1.msra.mxu0 0.0
        %2881 = vmatprep.subr.mxu0 0.0
        %2882 = vmatpush1.msra.mxu0 0.0
        %2883 = vmatprep.subr.mxu0 0.0
        %2884 = vmatpush1.msra.mxu0 0.0
        %2885 = vmatprep.subr.mxu0 0.0
        %2886 = vmatpush1.msra.mxu0 0.0
        %2887 = vmatprep.subr.mxu0 0.0
        %2888 = vmatpush1.msra.mxu0 0.0
        %2889 = vmatprep.subr.mxu0 0.0
        %2890 = vmatpush1.msra.mxu0 0.0
        %2891 = vmatprep.subr.mxu0 0.0
        %2892 = vmatpush1.msra.mxu0 0.0
        %2893 = vmatprep.subr.mxu0 0.0
        %2894 = vmatpush1.msra.mxu0 0.0
        %2895 = vmatprep.subr.mxu0 0.0
        %2896 = vmatpush1.msra.mxu0 0.0
        %2897 = vmatprep.subr.mxu0 0.0
        %2898 = vmatpush1.msra.mxu0 0.0
        %2899 = vmatprep.subr.mxu0 0.0
        %2900 = vmatpush1.msra.mxu0 0.0
        %2901 = vmatprep.subr.mxu0 0.0
        %2902 = vmatpush1.msra.mxu0 0.0
        %2903 = vmatprep.subr.mxu0 0.0
        %2904 = vmatpush1.msra.mxu0 0.0
        %2905 = vmatprep.subr.mxu0 0.0
        %2906 = vmatpush1.msra.mxu0 0.0
        %2907 = vmatprep.subr.mxu0 0.0
        %2908 = vmatpush1.msra.mxu0 0.0
        %2909 = vmatprep.subr.mxu0 0.0
        %2910 = vmatpush1.msra.mxu0 0.0
        %2911 = vmatprep.subr.mxu0 0.0
        %2912 = vmatpush1.msra.mxu0 0.0
        %2913 = vmatprep.subr.mxu0 0.0
        %2914 = vmatpush1.msra.mxu0 0.0
        %2915 = vmatprep.subr.mxu0 0.0
        %2916 = vmatpush1.msra.mxu0 0.0
        %2917 = vmatprep.subr.mxu0 0.0
        %2918 = vmatpush1.msra.mxu0 0.0
        %2919 = vmatprep.subr.mxu0 0.0
        %2920 = vmatpush1.msra.mxu0 0.0
        %2921 = vmatprep.subr.mxu0 0.0
        %2922 = vmatpush1.msra.mxu0 0.0
        %2923 = vmatprep.mubr.f32.mxu0 0.0
        %2924 = vmatmul.mubr.f32.gmra.mrb[0].mxu0 %v2761
        %v2925 = vpop.f32.mrb[0].mxu0
        %v2926 = vadd.f32 0.0, %v2925
        %v2927 = vpop.f32.mrb[0].mxu0
        %2928 = vmatprep.mubr.f32.mxu0 0.0
        %2929 = vmatmul.mubr.f32.gmra.mrb[0].mxu0 %v2764
        %v2930 = vpop.f32.mrb[0].mxu0
        %v2931 = vadd.f32 0.0, %v2930
        %v2932 = vpop.f32.mrb[0].mxu0
        %2933 = vmatprep.mubr.f32.mxu0 0.0
        %2934 = vmatmul.mubr.f32.gmra.mrb[0].mxu0 %v2767
        %v2935 = vpop.f32.mrb[0].mxu0
        %v2936 = vadd.f32 0.0, %v2935
        %v2937 = vpop.f32.mrb[0].mxu0
        %2938 = vmatprep.mubr.f32.mxu0 0.0
        %2939 = vmatmul.mubr.f32.gmra.mrb[0].mxu0 %v2770
        %v2940 = vpop.f32.mrb[0].mxu0
        %v2941 = vadd.f32 0.0, %v2940
        %v2942 = vpop.f32.mrb[0].mxu0
        %2943 = vmatprep.mubr.f32.mxu0 0.0
        %2944 = vmatmul.mubr.f32.gmra.mrb[0].mxu0 %v2773
        %v2945 = vpop.f32.mrb[0].mxu0
        %v2946 = vadd.f32 0.0, %v2945
        %v2947 = vpop.f32.mrb[0].mxu0
        %2948 = vmatprep.mubr.f32.mxu0 0.0
        %2949 = vmatmul.mubr.f32.gmra.mrb[0].mxu0 %v2776
        %v2950 = vpop.f32.mrb[0].mxu0
        %v2951 = vadd.f32 0.0, %v2950
        %v2952 = vpop.f32.mrb[0].mxu0
        %2953 = vmatprep.mubr.f32.mxu0 0.0
        %2954 = vmatmul.mubr.f32.gmra.mrb[0].mxu0 %v2779
        %v2955 = vpop.f32.mrb[0].mxu0
        %v2956 = vadd.f32 0.0, %v2955
        %v2957 = vpop.f32.mrb[0].mxu0
        %2958 = vmatprep.mubr.f32.mxu0 0.0
        %2959 = vmatmul.mubr.f32.gmra.mrb[0].mxu0 %v2782
        %v2960 = vpop.f32.mrb[0].mxu0
        %v2961 = vadd.f32 0.0, %v2960
        %v2962 = vpop.f32.mrb[0].mxu0
        %2963 = vmatprep.mubr.f32.mxu0 0.0
        %2964 = vmatmul.mubr.f32.gmra.mrb[0].mxu0 %v2785
        %v2965 = vpop.f32.mrb[0].mxu0
        %v2966 = vadd.f32 0.0, %v2965
        %v2967 = vpop.f32.mrb[0].mxu0
        %2968 = vmatprep.mubr.f32.mxu0 0.0
        %2969 = vmatmul.mubr.f32.gmra.mrb[0].mxu0 %v2788
        %v2970 = vpop.f32.mrb[0].mxu0
        %v2971 = vadd.f32 0.0, %v2970
        %v2972 = vpop.f32.mrb[0].mxu0
        %2973 = vmatprep.mubr.f32.mxu0 0.0
        %2974 = vmatmul.mubr.f32.gmra.mrb[0].mxu0 %v2791
        %v2975 = vpop.f32.mrb[0].mxu0
        %v2976 = vadd.f32 0.0, %v2975
        %v2977 = vpop.f32.mrb[0].mxu0
        %2978 = vmatprep.mubr.f32.mxu0 0.0
        %2979 = vmatmul.mubr.f32.gmra.mrb[0].mxu0 %v2794
        %v2980 = vpop.f32.mrb[0].mxu0
        %v2981 = vadd.f32 0.0, %v2980
        %v2982 = vpop.f32.mrb[0].mxu0
        %2983 = vmatprep.mubr.f32.mxu0 0.0
        %2984 = vmatmul.mubr.f32.gmra.mrb[0].mxu0 %v2797
        %v2985 = vpop.f32.mrb[0].mxu0
        %v2986 = vadd.f32 0.0, %v2985
        %v2987 = vpop.f32.mrb[0].mxu0
        %2988 = vmatprep.mubr.f32.mxu0 0.0
        %2989 = vmatmul.mubr.f32.gmra.mrb[0].mxu0 %v2800
        %v2990 = vpop.f32.mrb[0].mxu0
        %v2991 = vadd.f32 0.0, %v2990
        %v2992 = vpop.f32.mrb[0].mxu0
        %2993 = vmatprep.mubr.f32.mxu0 0.0
        %2994 = vmatmul.mubr.f32.gmra.mrb[0].mxu0 %v2803
        %v2995 = vpop.f32.mrb[0].mxu0
        %v2996 = vadd.f32 0.0, %v2995
        %v2997 = vpop.f32.mrb[0].mxu0
        %2998 = vmatprep.mubr.f32.mxu0 0.0
        %2999 = vmatmul.mubr.f32.gmra.mrb[0].mxu0 %v2806
        %v3000 = vpop.f32.mrb[0].mxu0
        %v3001 = vadd.f32 0.0, %v3000
        %v3002 = vpop.f32.mrb[0].mxu0
        %3003 = vmatprep.mubr.f32.mxu0 0.0
        %3004 = vmatmul.mubr.f32.gmra.mrb[0].mxu0 %v2809
        %v3005 = vpop.f32.mrb[0].mxu0
        %v3006 = vadd.f32 0.0, %v3005
        %v3007 = vpop.f32.mrb[0].mxu0
        %3008 = vmatprep.mubr.f32.mxu0 0.0
        %3009 = vmatmul.mubr.f32.gmra.mrb[0].mxu0 %v2812
        %v3010 = vpop.f32.mrb[0].mxu0
        %v3011 = vadd.f32 0.0, %v3010
        %v3012 = vpop.f32.mrb[0].mxu0
        %3013 = vmatprep.mubr.f32.mxu0 0.0
        %3014 = vmatmul.mubr.f32.gmra.mrb[0].mxu0 %v2815
        %v3015 = vpop.f32.mrb[0].mxu0
        %v3016 = vadd.f32 0.0, %v3015
        %v3017 = vpop.f32.mrb[0].mxu0
        %3018 = vmatprep.mubr.f32.mxu0 0.0
        %3019 = vmatmul.mubr.f32.gmra.mrb[0].mxu0 %v2818
        %v3020 = vpop.f32.mrb[0].mxu0
        %v3021 = vadd.f32 0.0, %v3020
        %v3022 = vpop.f32.mrb[0].mxu0
        %3023 = vmatprep.mubr.f32.mxu0 0.0
        %3024 = vmatmul.mubr.f32.gmra.mrb[0].mxu0 %v2821
        %v3025 = vpop.f32.mrb[0].mxu0
        %v3026 = vadd.f32 0.0, %v3025
        %v3027 = vpop.f32.mrb[0].mxu0
        %3028 = vmatprep.mubr.f32.mxu0 0.0
        %3029 = vmatmul.mubr.f32.gmra.mrb[0].mxu0 %v2824
        %v3030 = vpop.f32.mrb[0].mxu0
        %v3031 = vadd.f32 0.0, %v3030
        %v3032 = vpop.f32.mrb[0].mxu0
        %3033 = vmatprep.mubr.f32.mxu0 0.0
        %3034 = vmatmul.mubr.f32.gmra.mrb[0].mxu0 %v2827
        %v3035 = vpop.f32.mrb[0].mxu0
        %v3036 = vadd.f32 0.0, %v3035
        %v3037 = vpop.f32.mrb[0].mxu0
        %3038 = vmatprep.mubr.f32.mxu0 0.0
        %3039 = vmatmul.mubr.f32.gmra.mrb[0].mxu0 %v2830
        %v3040 = vpop.f32.mrb[0].mxu0
        %v3041 = vadd.f32 0.0, %v3040
        %v3042 = vpop.f32.mrb[0].mxu0
        %3043 = vmatprep.mubr.f32.mxu0 0.0
        %3044 = vmatmul.mubr.f32.gmra.mrb[0].mxu0 %v2833
        %v3045 = vpop.f32.mrb[0].mxu0
        %v3046 = vadd.f32 0.0, %v3045
        %v3047 = vpop.f32.mrb[0].mxu0
        %3048 = vmatprep.mubr.f32.mxu0 0.0
        %3049 = vmatmul.mubr.f32.gmra.mrb[0].mxu0 %v2836
        %v3050 = vpop.f32.mrb[0].mxu0
        %v3051 = vadd.f32 0.0, %v3050
        %v3052 = vpop.f32.mrb[0].mxu0
        %3053 = vmatprep.mubr.f32.mxu0 0.0
        %3054 = vmatmul.mubr.f32.gmra.mrb[0].mxu0 %v2839
        %v3055 = vpop.f32.mrb[0].mxu0
        %v3056 = vadd.f32 0.0, %v3055
        %v3057 = vpop.f32.mrb[0].mxu0
        %3058 = vmatprep.mubr.f32.mxu0 0.0
        %3059 = vmatmul.mubr.f32.gmra.mrb[0].mxu0 %v2842
        %v3060 = vpop.f32.mrb[0].mxu0
        %v3061 = vadd.f32 0.0, %v3060
        %v3062 = vpop.f32.mrb[0].mxu0
        %3063 = vmatprep.mubr.f32.mxu0 0.0
        %3064 = vmatmul.mubr.f32.gmra.mrb[0].mxu0 %v2845
        %v3065 = vpop.f32.mrb[0].mxu0
        %v3066 = vadd.f32 0.0, %v3065
        %v3067 = vpop.f32.mrb[0].mxu0
        %3068 = vmatprep.mubr.f32.mxu0 0.0
        %3069 = vmatmul.mubr.f32.gmra.mrb[0].mxu0 %v2848
        %v3070 = vpop.f32.mrb[0].mxu0
        %v3071 = vadd.f32 0.0, %v3070
        %v3072 = vpop.f32.mrb[0].mxu0
        %3073 = vmatprep.mubr.f32.mxu0 0.0
        %3074 = vmatmul.mubr.f32.gmra.mrb[0].mxu0 %v2851
        %v3075 = vpop.f32.mrb[0].mxu0
        %v3076 = vadd.f32 0.0, %v3075
        %v3077 = vpop.f32.mrb[0].mxu0
        %3078 = vmatprep.mubr.f32.mxu0 0.0
        %3079 = vmatmul.mubr.f32.gmra.mrb[0].mxu0 %v2854
        %v3080 = vpop.f32.mrb[0].mxu0
        %v3081 = vadd.f32 0.0, %v3080
        %v3082 = vpop.f32.mrb[0].mxu0
        %3083 = vdwg.mxu0
        %v3084 = vadd.f32 %v2694, %v2926
        %v3085 = vadd.f32 %v2695, %v2931
        %v3086 = vadd.f32 %v2696, %v2936
        %v3087 = vadd.f32 %v2697, %v2941
        %v3088 = vadd.f32 %v2698, %v2946
        %v3089 = vadd.f32 %v2699, %v2951
        %v3090 = vadd.f32 %v2700, %v2956
        %v3091 = vadd.f32 %v2701, %v2961
        %v3092 = vadd.f32 %v2702, %v2966
        %v3093 = vadd.f32 %v2703, %v2971
        %v3094 = vadd.f32 %v2704, %v2976
        %v3095 = vadd.f32 %v2705, %v2981
        %v3096 = vadd.f32 %v2706, %v2986
        %v3097 = vadd.f32 %v2707, %v2991
        %v3098 = vadd.f32 %v2708, %v2996
        %v3099 = vadd.f32 %v2709, %v3001
        %v3100 = vadd.f32 %v2710, %v3006
        %v3101 = vadd.f32 %v2711, %v3011
        %v3102 = vadd.f32 %v2712, %v3016
        %v3103 = vadd.f32 %v2713, %v3021
        %v3104 = vadd.f32 %v2714, %v3026
        %v3105 = vadd.f32 %v2715, %v3031
        %v3106 = vadd.f32 %v2716, %v3036
        %v3107 = vadd.f32 %v2717, %v3041
        %v3108 = vadd.f32 %v2718, %v3046
        %v3109 = vadd.f32 %v2719, %v3051
        %v3110 = vadd.f32 %v2720, %v3056
        %v3111 = vadd.f32 %v2721, %v3061
        %v3112 = vadd.f32 %v2722, %v3066
        %v3113 = vadd.f32 %v2723, %v3071
        %v3114 = vadd.f32 %v2724, %v3076
        %v3115 = vadd.f32 %v2725, %v3081
        %v3116 = vld [vmem:[%s2726 + $0x1] sm:$0xff]
        %v3117 = vld [vmem:[%s2726 + $0x9] sm:$0xff]
        %v3118 = vld [vmem:[%s2726 + $0x19] sm:$0xff]
        %v3119 = vld [vmem:[%s2726 + $0x21] sm:$0xff]
        %v3120 = vld [vmem:[%s2726 + $0x31] sm:$0xff]
        %v3121 = vld [vmem:[%s2726 + $0x39] sm:$0xff]
        %v3122 = vld [vmem:[%s2726 + $0x49] sm:$0xff]
        %v3123 = vld [vmem:[%s2726 + $0x51] sm:$0xff]
        %v3124 = vld [vmem:[%s2726 + $0x61] sm:$0xff]
        %v3125 = vld [vmem:[%s2726 + $0x69] sm:$0xff]
        %v3126 = vld [vmem:[%s2726 + $0x79] sm:$0xff]
        %v3127 = vld [vmem:[%s2726 + $0x81] sm:$0xff]
        %v3128 = vld [vmem:[%s2726 + $0x91] sm:$0xff]
        %v3129 = vld [vmem:[%s2726 + $0x99] sm:$0xff]
        %v3130 = vld [vmem:[%s2726 + $0xa9] sm:$0xff]
        %v3131 = vld [vmem:[%s2726 + $0xb1] sm:$0xff]
        %v3132 = vld [vmem:[%s2726 + $0xc1] sm:$0xff]
        %v3133 = vld [vmem:[%s2726 + $0xc9] sm:$0xff]
        %v3134 = vld [vmem:[%s2726 + $0xd9] sm:$0xff]
        %v3135 = vld [vmem:[%s2726 + $0xe1] sm:$0xff]
        %v3136 = vld [vmem:[%s2726 + $0xf1] sm:$0xff]
        %v3137 = vld [vmem:[%s2726 + $0xf9] sm:$0xff]
        %v3138 = vld [vmem:[%s2726 + $0x109] sm:$0xff]
        %v3139 = vld [vmem:[%s2726 + $0x111] sm:$0xff]
        %v3140 = vld [vmem:[%s2726 + $0x121] sm:$0xff]
        %v3141 = vld [vmem:[%s2726 + $0x129] sm:$0xff]
        %v3142 = vld [vmem:[%s2726 + $0x139] sm:$0xff]
        %v3143 = vld [vmem:[%s2726 + $0x141] sm:$0xff]
        %v3144 = vld [vmem:[%s2726 + $0x151] sm:$0xff]
        %v3145 = vld [vmem:[%s2726 + $0x159] sm:$0xff]
        %v3146 = vld [vmem:[%s2726 + $0x169] sm:$0xff]
        %v3147 = vld [vmem:[%s2726 + $0x171] sm:$0xff]
        %v3148 = vld [vmem:[%s1 + $0x1c] sm:$0xf]
        %v3150 = vsel %vm263, %v3116, 0
        %v3153 = vsel %vm263, %v3117, 0
        %v3156 = vsel %vm263, %v3118, 0
        %v3159 = vsel %vm263, %v3119, 0
        %v3162 = vsel %vm263, %v3120, 0
        %v3165 = vsel %vm263, %v3121, 0
        %v3168 = vsel %vm263, %v3122, 0
        %v3171 = vsel %vm263, %v3123, 0
        %v3174 = vsel %vm263, %v3124, 0
        %v3177 = vsel %vm263, %v3125, 0
        %v3180 = vsel %vm263, %v3126, 0
        %v3183 = vsel %vm263, %v3127, 0
        %v3186 = vsel %vm263, %v3128, 0
        %v3189 = vsel %vm263, %v3129, 0
        %v3192 = vsel %vm263, %v3130, 0
        %v3195 = vsel %vm263, %v3131, 0
        %v3198 = vsel %vm263, %v3132, 0
        %v3201 = vsel %vm263, %v3133, 0
        %v3204 = vsel %vm263, %v3134, 0
        %v3207 = vsel %vm263, %v3135, 0
        %v3210 = vsel %vm263, %v3136, 0
        %v3213 = vsel %vm263, %v3137, 0
        %v3216 = vsel %vm263, %v3138, 0
        %v3219 = vsel %vm263, %v3139, 0
        %v3222 = vsel %vm263, %v3140, 0
        %v3225 = vsel %vm263, %v3141, 0
        %v3228 = vsel %vm263, %v3142, 0
        %v3231 = vsel %vm263, %v3143, 0
        %v3234 = vsel %vm263, %v3144, 0
        %v3237 = vsel %vm263, %v3145, 0
        %v3240 = vsel %vm263, %v3146, 0
        %v3243 = vsel %vm263, %v3147, 0
        %v3246 = vsel %vm520, %v3148, 0
        %3248 = vmatprep.subr.mxu0 0.0
        %3249 = vmatpush1.msra.mxu0 %v3246
        %3250 = vmatprep.subr.mxu0 0.0
        %3251 = vmatpush1.msra.mxu0 0.0
        %3252 = vmatprep.subr.mxu0 0.0
        %3253 = vmatpush1.msra.mxu0 0.0
        %3254 = vmatprep.subr.mxu0 0.0
        %3255 = vmatpush1.msra.mxu0 0.0
        %3256 = vmatprep.subr.mxu0 0.0
        %3257 = vmatpush1.msra.mxu0 0.0
        %3258 = vmatprep.subr.mxu0 0.0
        %3259 = vmatpush1.msra.mxu0 0.0
        %3260 = vmatprep.subr.mxu0 0.0
        %3261 = vmatpush1.msra.mxu0 0.0
        %3262 = vmatprep.subr.mxu0 0.0
        %3263 = vmatpush1.msra.mxu0 0.0
        %3264 = vmatprep.subr.mxu0 0.0
        %3265 = vmatpush1.msra.mxu0 0.0
        %3266 = vmatprep.subr.mxu0 0.0
        %3267 = vmatpush1.msra.mxu0 0.0
        %3268 = vmatprep.subr.mxu0 0.0
        %3269 = vmatpush1.msra.mxu0 0.0
        %3270 = vmatprep.subr.mxu0 0.0
        %3271 = vmatpush1.msra.mxu0 0.0
        %3272 = vmatprep.subr.mxu0 0.0
        %3273 = vmatpush1.msra.mxu0 0.0
        %3274 = vmatprep.subr.mxu0 0.0
        %3275 = vmatpush1.msra.mxu0 0.0
        %3276 = vmatprep.subr.mxu0 0.0
        %3277 = vmatpush1.msra.mxu0 0.0
        %3278 = vmatprep.subr.mxu0 0.0
        %3279 = vmatpush1.msra.mxu0 0.0
        %3280 = vmatprep.subr.mxu0 0.0
        %3281 = vmatpush1.msra.mxu0 0.0
        %3282 = vmatprep.subr.mxu0 0.0
        %3283 = vmatpush1.msra.mxu0 0.0
        %3284 = vmatprep.subr.mxu0 0.0
        %3285 = vmatpush1.msra.mxu0 0.0
        %3286 = vmatprep.subr.mxu0 0.0
        %3287 = vmatpush1.msra.mxu0 0.0
        %3288 = vmatprep.subr.mxu0 0.0
        %3289 = vmatpush1.msra.mxu0 0.0
        %3290 = vmatprep.subr.mxu0 0.0
        %3291 = vmatpush1.msra.mxu0 0.0
        %3292 = vmatprep.subr.mxu0 0.0
        %3293 = vmatpush1.msra.mxu0 0.0
        %3294 = vmatprep.subr.mxu0 0.0
        %3295 = vmatpush1.msra.mxu0 0.0
        %3296 = vmatprep.subr.mxu0 0.0
        %3297 = vmatpush1.msra.mxu0 0.0
        %3298 = vmatprep.subr.mxu0 0.0
        %3299 = vmatpush1.msra.mxu0 0.0
        %3300 = vmatprep.subr.mxu0 0.0
        %3301 = vmatpush1.msra.mxu0 0.0
        %3302 = vmatprep.subr.mxu0 0.0
        %3303 = vmatpush1.msra.mxu0 0.0
        %3304 = vmatprep.subr.mxu0 0.0
        %3305 = vmatpush1.msra.mxu0 0.0
        %3306 = vmatprep.subr.mxu0 0.0
        %3307 = vmatpush1.msra.mxu0 0.0
        %3308 = vmatprep.subr.mxu0 0.0
        %3309 = vmatpush1.msra.mxu0 0.0
        %3310 = vmatprep.subr.mxu0 0.0
        %3311 = vmatpush1.msra.mxu0 0.0
        %3312 = vmatprep.mubr.f32.mxu0 0.0
        %3313 = vmatmul.mubr.f32.gmra.mrb[0].mxu0 %v3150
        %v3314 = vpop.f32.mrb[0].mxu0
        %v3315 = vadd.f32 0.0, %v3314
        %v3316 = vpop.f32.mrb[0].mxu0
        %3317 = vmatprep.mubr.f32.mxu0 0.0
        %3318 = vmatmul.mubr.f32.gmra.mrb[0].mxu0 %v3153
        %v3319 = vpop.f32.mrb[0].mxu0
        %v3320 = vadd.f32 0.0, %v3319
        %v3321 = vpop.f32.mrb[0].mxu0
        %3322 = vmatprep.mubr.f32.mxu0 0.0
        %3323 = vmatmul.mubr.f32.gmra.mrb[0].mxu0 %v3156
        %v3324 = vpop.f32.mrb[0].mxu0
        %v3325 = vadd.f32 0.0, %v3324
        %v3326 = vpop.f32.mrb[0].mxu0
        %3327 = vmatprep.mubr.f32.mxu0 0.0
        %3328 = vmatmul.mubr.f32.gmra.mrb[0].mxu0 %v3159
        %v3329 = vpop.f32.mrb[0].mxu0
        %v3330 = vadd.f32 0.0, %v3329
        %v3331 = vpop.f32.mrb[0].mxu0
        %3332 = vmatprep.mubr.f32.mxu0 0.0
        %3333 = vmatmul.mubr.f32.gmra.mrb[0].mxu0 %v3162
        %v3334 = vpop.f32.mrb[0].mxu0
        %v3335 = vadd.f32 0.0, %v3334
        %v3336 = vpop.f32.mrb[0].mxu0
        %3337 = vmatprep.mubr.f32.mxu0 0.0
        %3338 = vmatmul.mubr.f32.gmra.mrb[0].mxu0 %v3165
        %v3339 = vpop.f32.mrb[0].mxu0
        %v3340 = vadd.f32 0.0, %v3339
        %v3341 = vpop.f32.mrb[0].mxu0
        %3342 = vmatprep.mubr.f32.mxu0 0.0
        %3343 = vmatmul.mubr.f32.gmra.mrb[0].mxu0 %v3168
        %v3344 = vpop.f32.mrb[0].mxu0
        %v3345 = vadd.f32 0.0, %v3344
        %v3346 = vpop.f32.mrb[0].mxu0
        %3347 = vmatprep.mubr.f32.mxu0 0.0
        %3348 = vmatmul.mubr.f32.gmra.mrb[0].mxu0 %v3171
        %v3349 = vpop.f32.mrb[0].mxu0
        %v3350 = vadd.f32 0.0, %v3349
        %v3351 = vpop.f32.mrb[0].mxu0
        %3352 = vmatprep.mubr.f32.mxu0 0.0
        %3353 = vmatmul.mubr.f32.gmra.mrb[0].mxu0 %v3174
        %v3354 = vpop.f32.mrb[0].mxu0
        %v3355 = vadd.f32 0.0, %v3354
        %v3356 = vpop.f32.mrb[0].mxu0
        %3357 = vmatprep.mubr.f32.mxu0 0.0
        %3358 = vmatmul.mubr.f32.gmra.mrb[0].mxu0 %v3177
        %v3359 = vpop.f32.mrb[0].mxu0
        %v3360 = vadd.f32 0.0, %v3359
        %v3361 = vpop.f32.mrb[0].mxu0
        %3362 = vmatprep.mubr.f32.mxu0 0.0
        %3363 = vmatmul.mubr.f32.gmra.mrb[0].mxu0 %v3180
        %v3364 = vpop.f32.mrb[0].mxu0
        %v3365 = vadd.f32 0.0, %v3364
        %v3366 = vpop.f32.mrb[0].mxu0
        %3367 = vmatprep.mubr.f32.mxu0 0.0
        %3368 = vmatmul.mubr.f32.gmra.mrb[0].mxu0 %v3183
        %v3369 = vpop.f32.mrb[0].mxu0
        %v3370 = vadd.f32 0.0, %v3369
        %v3371 = vpop.f32.mrb[0].mxu0
        %3372 = vmatprep.mubr.f32.mxu0 0.0
        %3373 = vmatmul.mubr.f32.gmra.mrb[0].mxu0 %v3186
        %v3374 = vpop.f32.mrb[0].mxu0
        %v3375 = vadd.f32 0.0, %v3374
        %v3376 = vpop.f32.mrb[0].mxu0
        %3377 = vmatprep.mubr.f32.mxu0 0.0
        %3378 = vmatmul.mubr.f32.gmra.mrb[0].mxu0 %v3189
        %v3379 = vpop.f32.mrb[0].mxu0
        %v3380 = vadd.f32 0.0, %v3379
        %v3381 = vpop.f32.mrb[0].mxu0
        %3382 = vmatprep.mubr.f32.mxu0 0.0
        %3383 = vmatmul.mubr.f32.gmra.mrb[0].mxu0 %v3192
        %v3384 = vpop.f32.mrb[0].mxu0
        %v3385 = vadd.f32 0.0, %v3384
        %v3386 = vpop.f32.mrb[0].mxu0
        %3387 = vmatprep.mubr.f32.mxu0 0.0
        %3388 = vmatmul.mubr.f32.gmra.mrb[0].mxu0 %v3195
        %v3389 = vpop.f32.mrb[0].mxu0
        %v3390 = vadd.f32 0.0, %v3389
        %v3391 = vpop.f32.mrb[0].mxu0
        %3392 = vmatprep.mubr.f32.mxu0 0.0
        %3393 = vmatmul.mubr.f32.gmra.mrb[0].mxu0 %v3198
        %v3394 = vpop.f32.mrb[0].mxu0
        %v3395 = vadd.f32 0.0, %v3394
        %v3396 = vpop.f32.mrb[0].mxu0
        %3397 = vmatprep.mubr.f32.mxu0 0.0
        %3398 = vmatmul.mubr.f32.gmra.mrb[0].mxu0 %v3201
        %v3399 = vpop.f32.mrb[0].mxu0
        %v3400 = vadd.f32 0.0, %v3399
        %v3401 = vpop.f32.mrb[0].mxu0
        %3402 = vmatprep.mubr.f32.mxu0 0.0
        %3403 = vmatmul.mubr.f32.gmra.mrb[0].mxu0 %v3204
        %v3404 = vpop.f32.mrb[0].mxu0
        %v3405 = vadd.f32 0.0, %v3404
        %v3406 = vpop.f32.mrb[0].mxu0
        %3407 = vmatprep.mubr.f32.mxu0 0.0
        %3408 = vmatmul.mubr.f32.gmra.mrb[0].mxu0 %v3207
        %v3409 = vpop.f32.mrb[0].mxu0
        %v3410 = vadd.f32 0.0, %v3409
        %v3411 = vpop.f32.mrb[0].mxu0
        %3412 = vmatprep.mubr.f32.mxu0 0.0
        %3413 = vmatmul.mubr.f32.gmra.mrb[0].mxu0 %v3210
        %v3414 = vpop.f32.mrb[0].mxu0
        %v3415 = vadd.f32 0.0, %v3414
        %v3416 = vpop.f32.mrb[0].mxu0
        %3417 = vmatprep.mubr.f32.mxu0 0.0
        %3418 = vmatmul.mubr.f32.gmra.mrb[0].mxu0 %v3213
        %v3419 = vpop.f32.mrb[0].mxu0
        %v3420 = vadd.f32 0.0, %v3419
        %v3421 = vpop.f32.mrb[0].mxu0
        %3422 = vmatprep.mubr.f32.mxu0 0.0
        %3423 = vmatmul.mubr.f32.gmra.mrb[0].mxu0 %v3216
        %v3424 = vpop.f32.mrb[0].mxu0
        %v3425 = vadd.f32 0.0, %v3424
        %v3426 = vpop.f32.mrb[0].mxu0
        %3427 = vmatprep.mubr.f32.mxu0 0.0
        %3428 = vmatmul.mubr.f32.gmra.mrb[0].mxu0 %v3219
        %v3429 = vpop.f32.mrb[0].mxu0
        %v3430 = vadd.f32 0.0, %v3429
        %v3431 = vpop.f32.mrb[0].mxu0
        %3432 = vmatprep.mubr.f32.mxu0 0.0
        %3433 = vmatmul.mubr.f32.gmra.mrb[0].mxu0 %v3222
        %v3434 = vpop.f32.mrb[0].mxu0
        %v3435 = vadd.f32 0.0, %v3434
        %v3436 = vpop.f32.mrb[0].mxu0
        %3437 = vmatprep.mubr.f32.mxu0 0.0
        %3438 = vmatmul.mubr.f32.gmra.mrb[0].mxu0 %v3225
        %v3439 = vpop.f32.mrb[0].mxu0
        %v3440 = vadd.f32 0.0, %v3439
        %v3441 = vpop.f32.mrb[0].mxu0
        %3442 = vmatprep.mubr.f32.mxu0 0.0
        %3443 = vmatmul.mubr.f32.gmra.mrb[0].mxu0 %v3228
        %v3444 = vpop.f32.mrb[0].mxu0
        %v3445 = vadd.f32 0.0, %v3444
        %v3446 = vpop.f32.mrb[0].mxu0
        %3447 = vmatprep.mubr.f32.mxu0 0.0
        %3448 = vmatmul.mubr.f32.gmra.mrb[0].mxu0 %v3231
        %v3449 = vpop.f32.mrb[0].mxu0
        %v3450 = vadd.f32 0.0, %v3449
        %v3451 = vpop.f32.mrb[0].mxu0
        %3452 = vmatprep.mubr.f32.mxu0 0.0
        %3453 = vmatmul.mubr.f32.gmra.mrb[0].mxu0 %v3234
        %v3454 = vpop.f32.mrb[0].mxu0
        %v3455 = vadd.f32 0.0, %v3454
        %v3456 = vpop.f32.mrb[0].mxu0
        %3457 = vmatprep.mubr.f32.mxu0 0.0
        %3458 = vmatmul.mubr.f32.gmra.mrb[0].mxu0 %v3237
        %v3459 = vpop.f32.mrb[0].mxu0
        %v3460 = vadd.f32 0.0, %v3459
        %v3461 = vpop.f32.mrb[0].mxu0
        %3462 = vmatprep.mubr.f32.mxu0 0.0
        %3463 = vmatmul.mubr.f32.gmra.mrb[0].mxu0 %v3240
        %v3464 = vpop.f32.mrb[0].mxu0
        %v3465 = vadd.f32 0.0, %v3464
        %v3466 = vpop.f32.mrb[0].mxu0
        %3467 = vmatprep.mubr.f32.mxu0 0.0
        %3468 = vmatmul.mubr.f32.gmra.mrb[0].mxu0 %v3243
        %v3469 = vpop.f32.mrb[0].mxu0
        %v3470 = vadd.f32 0.0, %v3469
        %v3471 = vpop.f32.mrb[0].mxu0
        %3472 = vdwg.mxu0
        %v3473 = vadd.f32 %v3084, %v3315
        %v3474 = vadd.f32 %v3085, %v3320
        %v3475 = vadd.f32 %v3086, %v3325
        %v3476 = vadd.f32 %v3087, %v3330
        %v3477 = vadd.f32 %v3088, %v3335
        %v3478 = vadd.f32 %v3089, %v3340
        %v3479 = vadd.f32 %v3090, %v3345
        %v3480 = vadd.f32 %v3091, %v3350
        %v3481 = vadd.f32 %v3092, %v3355
        %v3482 = vadd.f32 %v3093, %v3360
        %v3483 = vadd.f32 %v3094, %v3365
        %v3484 = vadd.f32 %v3095, %v3370
        %v3485 = vadd.f32 %v3096, %v3375
        %v3486 = vadd.f32 %v3097, %v3380
        %v3487 = vadd.f32 %v3098, %v3385
        %v3488 = vadd.f32 %v3099, %v3390
        %v3489 = vadd.f32 %v3100, %v3395
        %v3490 = vadd.f32 %v3101, %v3400
        %v3491 = vadd.f32 %v3102, %v3405
        %v3492 = vadd.f32 %v3103, %v3410
        %v3493 = vadd.f32 %v3104, %v3415
        %v3494 = vadd.f32 %v3105, %v3420
        %v3495 = vadd.f32 %v3106, %v3425
        %v3496 = vadd.f32 %v3107, %v3430
        %v3497 = vadd.f32 %v3108, %v3435
        %v3498 = vadd.f32 %v3109, %v3440
        %v3499 = vadd.f32 %v3110, %v3445
        %v3500 = vadd.f32 %v3111, %v3450
        %v3501 = vadd.f32 %v3112, %v3455
        %v3502 = vadd.f32 %v3113, %v3460
        %v3503 = vadd.f32 %v3114, %v3465
        %v3504 = vadd.f32 %v3115, %v3470
        %v3505 = vld [vmem:[%s2726 + $0x2] sm:$0xff]
        %v3506 = vld [vmem:[%s2726 + $0xa] sm:$0xff]
        %v3507 = vld [vmem:[%s2726 + $0x1a] sm:$0xff]
        %v3508 = vld [vmem:[%s2726 + $0x22] sm:$0xff]
        %v3509 = vld [vmem:[%s2726 + $0x32] sm:$0xff]
        %v3510 = vld [vmem:[%s2726 + $0x3a] sm:$0xff]
        %v3511 = vld [vmem:[%s2726 + $0x4a] sm:$0xff]
        %v3512 = vld [vmem:[%s2726 + $0x52] sm:$0xff]
        %v3513 = vld [vmem:[%s2726 + $0x62] sm:$0xff]
        %v3514 = vld [vmem:[%s2726 + $0x6a] sm:$0xff]
        %v3515 = vld [vmem:[%s2726 + $0x7a] sm:$0xff]
        %v3516 = vld [vmem:[%s2726 + $0x82] sm:$0xff]
        %v3517 = vld [vmem:[%s2726 + $0x92] sm:$0xff]
        %v3518 = vld [vmem:[%s2726 + $0x9a] sm:$0xff]
        %v3519 = vld [vmem:[%s2726 + $0xaa] sm:$0xff]
        %v3520 = vld [vmem:[%s2726 + $0xb2] sm:$0xff]
        %v3521 = vld [vmem:[%s2726 + $0xc2] sm:$0xff]
        %v3522 = vld [vmem:[%s2726 + $0xca] sm:$0xff]
        %v3523 = vld [vmem:[%s2726 + $0xda] sm:$0xff]
        %v3524 = vld [vmem:[%s2726 + $0xe2] sm:$0xff]
        %v3525 = vld [vmem:[%s2726 + $0xf2] sm:$0xff]
        %v3526 = vld [vmem:[%s2726 + $0xfa] sm:$0xff]
        %v3527 = vld [vmem:[%s2726 + $0x10a] sm:$0xff]
        %v3528 = vld [vmem:[%s2726 + $0x112] sm:$0xff]
        %v3529 = vld [vmem:[%s2726 + $0x122] sm:$0xff]
        %v3530 = vld [vmem:[%s2726 + $0x12a] sm:$0xff]
        %v3531 = vld [vmem:[%s2726 + $0x13a] sm:$0xff]
        %v3532 = vld [vmem:[%s2726 + $0x142] sm:$0xff]
        %v3533 = vld [vmem:[%s2726 + $0x152] sm:$0xff]
        %v3534 = vld [vmem:[%s2726 + $0x15a] sm:$0xff]
        %v3535 = vld [vmem:[%s2726 + $0x16a] sm:$0xff]
        %v3536 = vld [vmem:[%s2726 + $0x172] sm:$0xff]
        %v3537 = vld [vmem:[%s1 + $0x20] sm:$0xf]
        %v3539 = vsel %vm263, %v3505, 0
        %v3542 = vsel %vm263, %v3506, 0
        %v3545 = vsel %vm263, %v3507, 0
        %v3548 = vsel %vm263, %v3508, 0
        %v3551 = vsel %vm263, %v3509, 0
        %v3554 = vsel %vm263, %v3510, 0
        %v3557 = vsel %vm263, %v3511, 0
        %v3560 = vsel %vm263, %v3512, 0
        %v3563 = vsel %vm263, %v3513, 0
        %v3566 = vsel %vm263, %v3514, 0
        %v3569 = vsel %vm263, %v3515, 0
        %v3572 = vsel %vm263, %v3516, 0
        %v3575 = vsel %vm263, %v3517, 0
        %v3578 = vsel %vm263, %v3518, 0
        %v3581 = vsel %vm263, %v3519, 0
        %v3584 = vsel %vm263, %v3520, 0
        %v3587 = vsel %vm263, %v3521, 0
        %v3590 = vsel %vm263, %v3522, 0
        %v3593 = vsel %vm263, %v3523, 0
        %v3596 = vsel %vm263, %v3524, 0
        %v3599 = vsel %vm263, %v3525, 0
        %v3602 = vsel %vm263, %v3526, 0
        %v3605 = vsel %vm263, %v3527, 0
        %v3608 = vsel %vm263, %v3528, 0
        %v3611 = vsel %vm263, %v3529, 0
        %v3614 = vsel %vm263, %v3530, 0
        %v3617 = vsel %vm263, %v3531, 0
        %v3620 = vsel %vm263, %v3532, 0
        %v3623 = vsel %vm263, %v3533, 0
        %v3626 = vsel %vm263, %v3534, 0
        %v3629 = vsel %vm263, %v3535, 0
        %v3632 = vsel %vm263, %v3536, 0
        %v3635 = vsel %vm520, %v3537, 0
        %3637 = vmatprep.subr.mxu0 0.0
        %3638 = vmatpush1.msra.mxu0 %v3635
        %3639 = vmatprep.subr.mxu0 0.0
        %3640 = vmatpush1.msra.mxu0 0.0
        %3641 = vmatprep.subr.mxu0 0.0
        %3642 = vmatpush1.msra.mxu0 0.0
        %3643 = vmatprep.subr.mxu0 0.0
        %3644 = vmatpush1.msra.mxu0 0.0
        %3645 = vmatprep.subr.mxu0 0.0
        %3646 = vmatpush1.msra.mxu0 0.0
        %3647 = vmatprep.subr.mxu0 0.0
        %3648 = vmatpush1.msra.mxu0 0.0
        %3649 = vmatprep.subr.mxu0 0.0
        %3650 = vmatpush1.msra.mxu0 0.0
        %3651 = vmatprep.subr.mxu0 0.0
        %3652 = vmatpush1.msra.mxu0 0.0
        %3653 = vmatprep.subr.mxu0 0.0
        %3654 = vmatpush1.msra.mxu0 0.0
        %3655 = vmatprep.subr.mxu0 0.0
        %3656 = vmatpush1.msra.mxu0 0.0
        %3657 = vmatprep.subr.mxu0 0.0
        %3658 = vmatpush1.msra.mxu0 0.0
        %3659 = vmatprep.subr.mxu0 0.0
        %3660 = vmatpush1.msra.mxu0 0.0
        %3661 = vmatprep.subr.mxu0 0.0
        %3662 = vmatpush1.msra.mxu0 0.0
        %3663 = vmatprep.subr.mxu0 0.0
        %3664 = vmatpush1.msra.mxu0 0.0
        %3665 = vmatprep.subr.mxu0 0.0
        %3666 = vmatpush1.msra.mxu0 0.0
        %3667 = vmatprep.subr.mxu0 0.0
        %3668 = vmatpush1.msra.mxu0 0.0
        %3669 = vmatprep.subr.mxu0 0.0
        %3670 = vmatpush1.msra.mxu0 0.0
        %3671 = vmatprep.subr.mxu0 0.0
        %3672 = vmatpush1.msra.mxu0 0.0
        %3673 = vmatprep.subr.mxu0 0.0
        %3674 = vmatpush1.msra.mxu0 0.0
        %3675 = vmatprep.subr.mxu0 0.0
        %3676 = vmatpush1.msra.mxu0 0.0
        %3677 = vmatprep.subr.mxu0 0.0
        %3678 = vmatpush1.msra.mxu0 0.0
        %3679 = vmatprep.subr.mxu0 0.0
        %3680 = vmatpush1.msra.mxu0 0.0
        %3681 = vmatprep.subr.mxu0 0.0
        %3682 = vmatpush1.msra.mxu0 0.0
        %3683 = vmatprep.subr.mxu0 0.0
        %3684 = vmatpush1.msra.mxu0 0.0
        %3685 = vmatprep.subr.mxu0 0.0
        %3686 = vmatpush1.msra.mxu0 0.0
        %3687 = vmatprep.subr.mxu0 0.0
        %3688 = vmatpush1.msra.mxu0 0.0
        %3689 = vmatprep.subr.mxu0 0.0
        %3690 = vmatpush1.msra.mxu0 0.0
        %3691 = vmatprep.subr.mxu0 0.0
        %3692 = vmatpush1.msra.mxu0 0.0
        %3693 = vmatprep.subr.mxu0 0.0
        %3694 = vmatpush1.msra.mxu0 0.0
        %3695 = vmatprep.subr.mxu0 0.0
        %3696 = vmatpush1.msra.mxu0 0.0
        %3697 = vmatprep.subr.mxu0 0.0
        %3698 = vmatpush1.msra.mxu0 0.0
        %3699 = vmatprep.subr.mxu0 0.0
        %3700 = vmatpush1.msra.mxu0 0.0
        %3701 = vmatprep.mubr.f32.mxu0 0.0
        %3702 = vmatmul.mubr.f32.gmra.mrb[0].mxu0 %v3539
        %v3703 = vpop.f32.mrb[0].mxu0
        %v3704 = vadd.f32 0.0, %v3703
        %v3705 = vpop.f32.mrb[0].mxu0
        %3706 = vmatprep.mubr.f32.mxu0 0.0
        %3707 = vmatmul.mubr.f32.gmra.mrb[0].mxu0 %v3542
        %v3708 = vpop.f32.mrb[0].mxu0
        %v3709 = vadd.f32 0.0, %v3708
        %v3710 = vpop.f32.mrb[0].mxu0
        %3711 = vmatprep.mubr.f32.mxu0 0.0
        %3712 = vmatmul.mubr.f32.gmra.mrb[0].mxu0 %v3545
        %v3713 = vpop.f32.mrb[0].mxu0
        %v3714 = vadd.f32 0.0, %v3713
        %v3715 = vpop.f32.mrb[0].mxu0
        %3716 = vmatprep.mubr.f32.mxu0 0.0
        %3717 = vmatmul.mubr.f32.gmra.mrb[0].mxu0 %v3548
        %v3718 = vpop.f32.mrb[0].mxu0
        %v3719 = vadd.f32 0.0, %v3718
        %v3720 = vpop.f32.mrb[0].mxu0
        %3721 = vmatprep.mubr.f32.mxu0 0.0
        %3722 = vmatmul.mubr.f32.gmra.mrb[0].mxu0 %v3551
        %v3723 = vpop.f32.mrb[0].mxu0
        %v3724 = vadd.f32 0.0, %v3723
        %v3725 = vpop.f32.mrb[0].mxu0
        %3726 = vmatprep.mubr.f32.mxu0 0.0
        %3727 = vmatmul.mubr.f32.gmra.mrb[0].mxu0 %v3554
        %v3728 = vpop.f32.mrb[0].mxu0
        %v3729 = vadd.f32 0.0, %v3728
        %v3730 = vpop.f32.mrb[0].mxu0
        %3731 = vmatprep.mubr.f32.mxu0 0.0
        %3732 = vmatmul.mubr.f32.gmra.mrb[0].mxu0 %v3557
        %v3733 = vpop.f32.mrb[0].mxu0
        %v3734 = vadd.f32 0.0, %v3733
        %v3735 = vpop.f32.mrb[0].mxu0
        %3736 = vmatprep.mubr.f32.mxu0 0.0
        %3737 = vmatmul.mubr.f32.gmra.mrb[0].mxu0 %v3560
        %v3738 = vpop.f32.mrb[0].mxu0
        %v3739 = vadd.f32 0.0, %v3738
        %v3740 = vpop.f32.mrb[0].mxu0
        %3741 = vmatprep.mubr.f32.mxu0 0.0
        %3742 = vmatmul.mubr.f32.gmra.mrb[0].mxu0 %v3563
        %v3743 = vpop.f32.mrb[0].mxu0
        %v3744 = vadd.f32 0.0, %v3743
        %v3745 = vpop.f32.mrb[0].mxu0
        %3746 = vmatprep.mubr.f32.mxu0 0.0
        %3747 = vmatmul.mubr.f32.gmra.mrb[0].mxu0 %v3566
        %v3748 = vpop.f32.mrb[0].mxu0
        %v3749 = vadd.f32 0.0, %v3748
        %v3750 = vpop.f32.mrb[0].mxu0
        %3751 = vmatprep.mubr.f32.mxu0 0.0
        %3752 = vmatmul.mubr.f32.gmra.mrb[0].mxu0 %v3569
        %v3753 = vpop.f32.mrb[0].mxu0
        %v3754 = vadd.f32 0.0, %v3753
        %v3755 = vpop.f32.mrb[0].mxu0
        %3756 = vmatprep.mubr.f32.mxu0 0.0
        %3757 = vmatmul.mubr.f32.gmra.mrb[0].mxu0 %v3572
        %v3758 = vpop.f32.mrb[0].mxu0
        %v3759 = vadd.f32 0.0, %v3758
        %v3760 = vpop.f32.mrb[0].mxu0
        %3761 = vmatprep.mubr.f32.mxu0 0.0
        %3762 = vmatmul.mubr.f32.gmra.mrb[0].mxu0 %v3575
        %v3763 = vpop.f32.mrb[0].mxu0
        %v3764 = vadd.f32 0.0, %v3763
        %v3765 = vpop.f32.mrb[0].mxu0
        %3766 = vmatprep.mubr.f32.mxu0 0.0
        %3767 = vmatmul.mubr.f32.gmra.mrb[0].mxu0 %v3578
        %v3768 = vpop.f32.mrb[0].mxu0
        %v3769 = vadd.f32 0.0, %v3768
        %v3770 = vpop.f32.mrb[0].mxu0
        %3771 = vmatprep.mubr.f32.mxu0 0.0
        %3772 = vmatmul.mubr.f32.gmra.mrb[0].mxu0 %v3581
        %v3773 = vpop.f32.mrb[0].mxu0
        %v3774 = vadd.f32 0.0, %v3773
        %v3775 = vpop.f32.mrb[0].mxu0
        %3776 = vmatprep.mubr.f32.mxu0 0.0
        %3777 = vmatmul.mubr.f32.gmra.mrb[0].mxu0 %v3584
        %v3778 = vpop.f32.mrb[0].mxu0
        %v3779 = vadd.f32 0.0, %v3778
        %v3780 = vpop.f32.mrb[0].mxu0
        %3781 = vmatprep.mubr.f32.mxu0 0.0
        %3782 = vmatmul.mubr.f32.gmra.mrb[0].mxu0 %v3587
        %v3783 = vpop.f32.mrb[0].mxu0
        %v3784 = vadd.f32 0.0, %v3783
        %v3785 = vpop.f32.mrb[0].mxu0
        %3786 = vmatprep.mubr.f32.mxu0 0.0
        %3787 = vmatmul.mubr.f32.gmra.mrb[0].mxu0 %v3590
        %v3788 = vpop.f32.mrb[0].mxu0
        %v3789 = vadd.f32 0.0, %v3788
        %v3790 = vpop.f32.mrb[0].mxu0
        %3791 = vmatprep.mubr.f32.mxu0 0.0
        %3792 = vmatmul.mubr.f32.gmra.mrb[0].mxu0 %v3593
        %v3793 = vpop.f32.mrb[0].mxu0
        %v3794 = vadd.f32 0.0, %v3793
        %v3795 = vpop.f32.mrb[0].mxu0
        %3796 = vmatprep.mubr.f32.mxu0 0.0
        %3797 = vmatmul.mubr.f32.gmra.mrb[0].mxu0 %v3596
        %v3798 = vpop.f32.mrb[0].mxu0
        %v3799 = vadd.f32 0.0, %v3798
        %v3800 = vpop.f32.mrb[0].mxu0
        %3801 = vmatprep.mubr.f32.mxu0 0.0
        %3802 = vmatmul.mubr.f32.gmra.mrb[0].mxu0 %v3599
        %v3803 = vpop.f32.mrb[0].mxu0
        %v3804 = vadd.f32 0.0, %v3803
        %v3805 = vpop.f32.mrb[0].mxu0
        %3806 = vmatprep.mubr.f32.mxu0 0.0
        %3807 = vmatmul.mubr.f32.gmra.mrb[0].mxu0 %v3602
        %v3808 = vpop.f32.mrb[0].mxu0
        %v3809 = vadd.f32 0.0, %v3808
        %v3810 = vpop.f32.mrb[0].mxu0
        %3811 = vmatprep.mubr.f32.mxu0 0.0
        %3812 = vmatmul.mubr.f32.gmra.mrb[0].mxu0 %v3605
        %v3813 = vpop.f32.mrb[0].mxu0
        %v3814 = vadd.f32 0.0, %v3813
        %v3815 = vpop.f32.mrb[0].mxu0
        %3816 = vmatprep.mubr.f32.mxu0 0.0
        %3817 = vmatmul.mubr.f32.gmra.mrb[0].mxu0 %v3608
        %v3818 = vpop.f32.mrb[0].mxu0
        %v3819 = vadd.f32 0.0, %v3818
        %v3820 = vpop.f32.mrb[0].mxu0
        %3821 = vmatprep.mubr.f32.mxu0 0.0
        %3822 = vmatmul.mubr.f32.gmra.mrb[0].mxu0 %v3611
        %v3823 = vpop.f32.mrb[0].mxu0
        %v3824 = vadd.f32 0.0, %v3823
        %v3825 = vpop.f32.mrb[0].mxu0
        %3826 = vmatprep.mubr.f32.mxu0 0.0
        %3827 = vmatmul.mubr.f32.gmra.mrb[0].mxu0 %v3614
        %v3828 = vpop.f32.mrb[0].mxu0
        %v3829 = vadd.f32 0.0, %v3828
        %v3830 = vpop.f32.mrb[0].mxu0
        %3831 = vmatprep.mubr.f32.mxu0 0.0
        %3832 = vmatmul.mubr.f32.gmra.mrb[0].mxu0 %v3617
        %v3833 = vpop.f32.mrb[0].mxu0
        %v3834 = vadd.f32 0.0, %v3833
        %v3835 = vpop.f32.mrb[0].mxu0
        %3836 = vmatprep.mubr.f32.mxu0 0.0
        %3837 = vmatmul.mubr.f32.gmra.mrb[0].mxu0 %v3620
        %v3838 = vpop.f32.mrb[0].mxu0
        %v3839 = vadd.f32 0.0, %v3838
        %v3840 = vpop.f32.mrb[0].mxu0
        %3841 = vmatprep.mubr.f32.mxu0 0.0
        %3842 = vmatmul.mubr.f32.gmra.mrb[0].mxu0 %v3623
        %v3843 = vpop.f32.mrb[0].mxu0
        %v3844 = vadd.f32 0.0, %v3843
        %v3845 = vpop.f32.mrb[0].mxu0
        %3846 = vmatprep.mubr.f32.mxu0 0.0
        %3847 = vmatmul.mubr.f32.gmra.mrb[0].mxu0 %v3626
        %v3848 = vpop.f32.mrb[0].mxu0
        %v3849 = vadd.f32 0.0, %v3848
        %v3850 = vpop.f32.mrb[0].mxu0
        %3851 = vmatprep.mubr.f32.mxu0 0.0
        %3852 = vmatmul.mubr.f32.gmra.mrb[0].mxu0 %v3629
        %v3853 = vpop.f32.mrb[0].mxu0
        %v3854 = vadd.f32 0.0, %v3853
        %v3855 = vpop.f32.mrb[0].mxu0
        %3856 = vmatprep.mubr.f32.mxu0 0.0
        %3857 = vmatmul.mubr.f32.gmra.mrb[0].mxu0 %v3632
        %v3858 = vpop.f32.mrb[0].mxu0
        %v3859 = vadd.f32 0.0, %v3858
        %v3860 = vpop.f32.mrb[0].mxu0
        %3861 = vdwg.mxu0
        %v3862 = vadd.f32 %v3473, %v3704
        %v3863 = vadd.f32 %v3474, %v3709
        %v3864 = vadd.f32 %v3475, %v3714
        %v3865 = vadd.f32 %v3476, %v3719
        %v3866 = vadd.f32 %v3477, %v3724
        %v3867 = vadd.f32 %v3478, %v3729
        %v3868 = vadd.f32 %v3479, %v3734
        %v3869 = vadd.f32 %v3480, %v3739
        %v3870 = vadd.f32 %v3481, %v3744
        %v3871 = vadd.f32 %v3482, %v3749
        %v3872 = vadd.f32 %v3483, %v3754
        %v3873 = vadd.f32 %v3484, %v3759
        %v3874 = vadd.f32 %v3485, %v3764
        %v3875 = vadd.f32 %v3486, %v3769
        %v3876 = vadd.f32 %v3487, %v3774
        %v3877 = vadd.f32 %v3488, %v3779
        %v3878 = vadd.f32 %v3489, %v3784
        %v3879 = vadd.f32 %v3490, %v3789
        %v3880 = vadd.f32 %v3491, %v3794
        %v3881 = vadd.f32 %v3492, %v3799
        %v3882 = vadd.f32 %v3493, %v3804
        %v3883 = vadd.f32 %v3494, %v3809
        %v3884 = vadd.f32 %v3495, %v3814
        %v3885 = vadd.f32 %v3496, %v3819
        %v3886 = vadd.f32 %v3497, %v3824
        %v3887 = vadd.f32 %v3498, %v3829
        %v3888 = vadd.f32 %v3499, %v3834
        %v3889 = vadd.f32 %v3500, %v3839
        %v3890 = vadd.f32 %v3501, %v3844
        %v3891 = vadd.f32 %v3502, %v3849
        %v3892 = vadd.f32 %v3503, %v3854
        %v3893 = vadd.f32 %v3504, %v3859
        %v3894 = vmax.f32 %v3862, 0.0
        %v3895 = vmax.f32 %v3863, 0.0
        %v3896 = vmax.f32 %v3864, 0.0
        %v3897 = vmax.f32 %v3865, 0.0
        %v3898 = vmax.f32 %v3866, 0.0
        %v3899 = vmax.f32 %v3867, 0.0
        %v3900 = vmax.f32 %v3868, 0.0
        %v3901 = vmax.f32 %v3869, 0.0
        %v3902 = vmax.f32 %v3870, 0.0
        %v3903 = vmax.f32 %v3871, 0.0
        %v3904 = vmax.f32 %v3872, 0.0
        %v3905 = vmax.f32 %v3873, 0.0
        %v3906 = vmax.f32 %v3874, 0.0
        %v3907 = vmax.f32 %v3875, 0.0
        %v3908 = vmax.f32 %v3876, 0.0
        %v3909 = vmax.f32 %v3877, 0.0
        %v3910 = vmax.f32 %v3878, 0.0
        %v3911 = vmax.f32 %v3879, 0.0
        %v3912 = vmax.f32 %v3880, 0.0
        %v3913 = vmax.f32 %v3881, 0.0
        %v3914 = vmax.f32 %v3882, 0.0
        %v3915 = vmax.f32 %v3883, 0.0
        %v3916 = vmax.f32 %v3884, 0.0
        %v3917 = vmax.f32 %v3885, 0.0
        %v3918 = vmax.f32 %v3886, 0.0
        %v3919 = vmax.f32 %v3887, 0.0
        %v3920 = vmax.f32 %v3888, 0.0
        %v3921 = vmax.f32 %v3889, 0.0
        %v3922 = vmax.f32 %v3890, 0.0
        %v3923 = vmax.f32 %v3891, 0.0
        %v3924 = vmax.f32 %v3892, 0.0
        %v3925 = vmax.f32 %v3893, 0.0
        %vm3926 = vcmask 64512
        %3927 = vst.msk [vmem:[%s262] sm:$0xff] %vm3926, %v3894
        %3928 = vst.msk [vmem:[%s262 + $0x8] sm:$0xff] %vm3926, %v3895
        %3929 = vst.msk [vmem:[%s262 + $0x10] sm:$0xff] %vm3926, %v3896
        %3930 = vst.msk [vmem:[%s262 + $0x18] sm:$0xff] %vm3926, %v3897
        %3931 = vst.msk [vmem:[%s262 + $0x20] sm:$0xff] %vm3926, %v3898
        %3932 = vst.msk [vmem:[%s262 + $0x28] sm:$0xff] %vm3926, %v3899
        %3933 = vst.msk [vmem:[%s262 + $0x30] sm:$0xff] %vm3926, %v3900
        %3934 = vst.msk [vmem:[%s262 + $0x38] sm:$0xff] %vm3926, %v3901
        %3935 = vst.msk [vmem:[%s262 + $0x40] sm:$0xff] %vm3926, %v3902
        %3936 = vst.msk [vmem:[%s262 + $0x48] sm:$0xff] %vm3926, %v3903
        %3937 = vst.msk [vmem:[%s262 + $0x50] sm:$0xff] %vm3926, %v3904
        %3938 = vst.msk [vmem:[%s262 + $0x58] sm:$0xff] %vm3926, %v3905
        %3939 = vst.msk [vmem:[%s262 + $0x60] sm:$0xff] %vm3926, %v3906
        %3940 = vst.msk [vmem:[%s262 + $0x68] sm:$0xff] %vm3926, %v3907
        %3941 = vst.msk [vmem:[%s262 + $0x70] sm:$0xff] %vm3926, %v3908
        %3942 = vst.msk [vmem:[%s262 + $0x78] sm:$0xff] %vm3926, %v3909
        %3943 = vst.msk [vmem:[%s262 + $0x80] sm:$0xff] %vm3926, %v3910
        %3944 = vst.msk [vmem:[%s262 + $0x88] sm:$0xff] %vm3926, %v3911
        %3945 = vst.msk [vmem:[%s262 + $0x90] sm:$0xff] %vm3926, %v3912
        %3946 = vst.msk [vmem:[%s262 + $0x98] sm:$0xff] %vm3926, %v3913
        %3947 = vst.msk [vmem:[%s262 + $0xa0] sm:$0xff] %vm3926, %v3914
        %3948 = vst.msk [vmem:[%s262 + $0xa8] sm:$0xff] %vm3926, %v3915
        %3949 = vst.msk [vmem:[%s262 + $0xb0] sm:$0xff] %vm3926, %v3916
        %3950 = vst.msk [vmem:[%s262 + $0xb8] sm:$0xff] %vm3926, %v3917
        %3951 = vst.msk [vmem:[%s262 + $0xc0] sm:$0xff] %vm3926, %v3918
        %3952 = vst.msk [vmem:[%s262 + $0xc8] sm:$0xff] %vm3926, %v3919
        %3953 = vst.msk [vmem:[%s262 + $0xd0] sm:$0xff] %vm3926, %v3920
        %3954 = vst.msk [vmem:[%s262 + $0xd8] sm:$0xff] %vm3926, %v3921
        %3955 = vst.msk [vmem:[%s262 + $0xe0] sm:$0xff] %vm3926, %v3922
        %3956 = vst.msk [vmem:[%s262 + $0xe8] sm:$0xff] %vm3926, %v3923
        %3957 = vst.msk [vmem:[%s262 + $0xf0] sm:$0xff] %vm3926, %v3924
        %3958 = vst.msk [vmem:[%s262 + $0xf8] sm:$0xff] %vm3926, %v3925
        %v3959 = vld [vmem:[%s262] sm:$0xff]
        %v3960 = vld [vmem:[%s262 + $0x8] sm:$0xff]
        %v3961 = vld [vmem:[%s262 + $0x20] sm:$0xff]
        %v3962 = vld [vmem:[%s262 + $0x28] sm:$0xff]
        %v3963 = vld [vmem:[%s262 + $0x40] sm:$0xff]
        %v3964 = vld [vmem:[%s262 + $0x48] sm:$0xff]
        %v3965 = vld [vmem:[%s262 + $0x60] sm:$0xff]
        %v3966 = vld [vmem:[%s262 + $0x68] sm:$0xff]
        %v3967 = vld [vmem:[%s262 + $0x80] sm:$0xff]
        %v3968 = vld [vmem:[%s262 + $0x88] sm:$0xff]
        %v3969 = vld [vmem:[%s262 + $0xa0] sm:$0xff]
        %v3970 = vld [vmem:[%s262 + $0xa8] sm:$0xff]
        %v3971 = vld [vmem:[%s262 + $0xc0] sm:$0xff]
        %v3972 = vld [vmem:[%s262 + $0xc8] sm:$0xff]
        %v3973 = vld [vmem:[%s262 + $0xe0] sm:$0xff]
        %v3974 = vld [vmem:[%s262 + $0xe8] sm:$0xff]
        %s3975 = scalar_lea.vmem %s262, 16
        %v3976 = vld [vmem:[%s3975] sm:$0xff]
        %v3977 = vld [vmem:[%s3975 + $0x8] sm:$0xff]
        %v3978 = vld [vmem:[%s3975 + $0x20] sm:$0xff]
        %v3979 = vld [vmem:[%s3975 + $0x28] sm:$0xff]
        %v3980 = vld [vmem:[%s3975 + $0x40] sm:$0xff]
        %v3981 = vld [vmem:[%s3975 + $0x48] sm:$0xff]
        %v3982 = vld [vmem:[%s3975 + $0x60] sm:$0xff]
        %v3983 = vld [vmem:[%s3975 + $0x68] sm:$0xff]
        %v3984 = vld [vmem:[%s3975 + $0x80] sm:$0xff]
        %v3985 = vld [vmem:[%s3975 + $0x88] sm:$0xff]
        %v3986 = vld [vmem:[%s3975 + $0xa0] sm:$0xff]
        %v3987 = vld [vmem:[%s3975 + $0xa8] sm:$0xff]
        %v3988 = vld [vmem:[%s3975 + $0xc0] sm:$0xff]
        %v3989 = vld [vmem:[%s3975 + $0xc8] sm:$0xff]
        %v3990 = vld [vmem:[%s3975 + $0xe0] sm:$0xff]
        %v3991 = vld [vmem:[%s3975 + $0xe8] sm:$0xff]
        %v3992 = vmax.f32 %v3959, %v3976
        %v3993 = vmax.f32 %v3960, %v3977
        %v3994 = vmax.f32 %v3961, %v3978
        %v3995 = vmax.f32 %v3962, %v3979
        %v3996 = vmax.f32 %v3963, %v3980
        %v3997 = vmax.f32 %v3964, %v3981
        %v3998 = vmax.f32 %v3965, %v3982
        %v3999 = vmax.f32 %v3966, %v3983
        %v4000 = vmax.f32 %v3967, %v3984
        %v4001 = vmax.f32 %v3968, %v3985
        %v4002 = vmax.f32 %v3969, %v3986
        %v4003 = vmax.f32 %v3970, %v3987
        %v4004 = vmax.f32 %v3971, %v3988
        %v4005 = vmax.f32 %v3972, %v3989
        %v4006 = vmax.f32 %v3973, %v3990
        %v4007 = vmax.f32 %v3974, %v3991
        %4008 = vst.msk [vmem:[#allocation3] sm:$0xff] %vm3926, %v3992
        %4009 = vst.msk [vmem:[#allocation3 + $0x8] sm:$0xff] %vm3926, %v3993
        %4010 = vst.msk [vmem:[#allocation3 + $0x10] sm:$0xff] %vm3926, %v3994
        %4011 = vst.msk [vmem:[#allocation3 + $0x18] sm:$0xff] %vm3926, %v3995
        %4012 = vst.msk [vmem:[#allocation3 + $0x20] sm:$0xff] %vm3926, %v3996
        %4013 = vst.msk [vmem:[#allocation3 + $0x28] sm:$0xff] %vm3926, %v3997
        %4014 = vst.msk [vmem:[#allocation3 + $0x30] sm:$0xff] %vm3926, %v3998
        %4015 = vst.msk [vmem:[#allocation3 + $0x38] sm:$0xff] %vm3926, %v3999
        %4016 = vst.msk [vmem:[#allocation3 + $0x40] sm:$0xff] %vm3926, %v4000
        %4017 = vst.msk [vmem:[#allocation3 + $0x48] sm:$0xff] %vm3926, %v4001
        %4018 = vst.msk [vmem:[#allocation3 + $0x50] sm:$0xff] %vm3926, %v4002
        %4019 = vst.msk [vmem:[#allocation3 + $0x58] sm:$0xff] %vm3926, %v4003
        %4020 = vst.msk [vmem:[#allocation3 + $0x60] sm:$0xff] %vm3926, %v4004
        %4021 = vst.msk [vmem:[#allocation3 + $0x68] sm:$0xff] %vm3926, %v4005
        %4022 = vst.msk [vmem:[#allocation3 + $0x70] sm:$0xff] %vm3926, %v4006
        %4023 = vst.msk [vmem:[#allocation3 + $0x78] sm:$0xff] %vm3926, %v4007
        %v4024 = vld [vmem:[#allocation3] ss:$2 sm:$0xff]
        %s4025 = scalar_lea.vmem [#allocation3], 16
        %v4026 = vld [vmem:[%s4025] ss:$2 sm:$0xff]
        %s4027 = scalar_lea.vmem [#allocation3], 32
        %v4028 = vld [vmem:[%s4027] ss:$2 sm:$0xff]
        %s4029 = scalar_lea.vmem [#allocation3], 48
        %v4030 = vld [vmem:[%s4029] ss:$2 sm:$0xff]
        %s4031 = scalar_lea.vmem [#allocation3], 64
        %v4032 = vld [vmem:[%s4031] ss:$2 sm:$0xff]
        %s4033 = scalar_lea.vmem [#allocation3], 80
        %v4034 = vld [vmem:[%s4033] ss:$2 sm:$0xff]
        %s4035 = scalar_lea.vmem [#allocation3], 96
        %v4036 = vld [vmem:[%s4035] ss:$2 sm:$0xff]
        %s4037 = scalar_lea.vmem [#allocation3], 112
        %v4038 = vld [vmem:[%s4037] ss:$2 sm:$0xff]
        %s4039 = scalar_lea.vmem [#allocation3], 1
        %v4040 = vld [vmem:[%s4039] ss:$2 sm:$0xff]
        %s4041 = scalar_lea.vmem [#allocation3], 17
        %v4042 = vld [vmem:[%s4041] ss:$2 sm:$0xff]
        %s4043 = scalar_lea.vmem [#allocation3], 33
        %v4044 = vld [vmem:[%s4043] ss:$2 sm:$0xff]
        %s4045 = scalar_lea.vmem [#allocation3], 49
        %v4046 = vld [vmem:[%s4045] ss:$2 sm:$0xff]
        %s4047 = scalar_lea.vmem [#allocation3], 65
        %v4048 = vld [vmem:[%s4047] ss:$2 sm:$0xff]
        %s4049 = scalar_lea.vmem [#allocation3], 81
        %v4050 = vld [vmem:[%s4049] ss:$2 sm:$0xff]
        %s4051 = scalar_lea.vmem [#allocation3], 97
        %v4052 = vld [vmem:[%s4051] ss:$2 sm:$0xff]
        %s4053 = scalar_lea.vmem [#allocation3], 113
        %v4054 = vld [vmem:[%s4053] ss:$2 sm:$0xff]
        %v4055 = vmax.f32 %v4024, %v4040
        %v4056 = vmax.f32 %v4026, %v4042
        %v4057 = vmax.f32 %v4028, %v4044
        %v4058 = vmax.f32 %v4030, %v4046
        %v4059 = vmax.f32 %v4032, %v4048
        %v4060 = vmax.f32 %v4034, %v4050
        %v4061 = vmax.f32 %v4036, %v4052
        %v4062 = vmax.f32 %v4038, %v4054
        %4063 = vst.msk [vmem:[#allocation4] sm:$0xff] %vm3926, 0.0
        %vm4064 = vcmask 58368
        %4065 = vst.msk [vmem:[#allocation4 + $0x8] sm:$0x3] %vm4064, 0.0
        %4066 = vst.msk [vmem:[#allocation4 + $0x10] sm:$0xff] %vm3926, 0.0
        %4067 = vst.msk [vmem:[#allocation4 + $0x18] sm:$0x3] %vm4064, 0.0
        %4068 = vst.msk [vmem:[#allocation4 + $0x20] sm:$0xff] %vm3926, 0.0
        %4069 = vst.msk [vmem:[#allocation4 + $0x28] sm:$0x3] %vm4064, 0.0
        %4070 = vst.msk [vmem:[#allocation4 + $0x30] sm:$0xff] %vm3926, 0.0
        %4071 = vst.msk [vmem:[#allocation4 + $0x38] sm:$0x3] %vm4064, 0.0
        %4072 = vst.msk [vmem:[#allocation4 + $0x40] sm:$0xff] %vm3926, 0.0
        %4073 = vst.msk [vmem:[#allocation4 + $0x48] sm:$0x3] %vm4064, 0.0
        %4074 = vst.msk [vmem:[#allocation4 + $0x50] sm:$0xff] %vm3926, 0.0
        %4075 = vst.msk [vmem:[#allocation4 + $0x58] sm:$0x3] %vm4064, 0.0
        %4076 = vst.msk [vmem:[#allocation4 + $0x60] sm:$0xff] %vm3926, 0.0
        %4077 = vst.msk [vmem:[#allocation4 + $0x68] sm:$0x3] %vm4064, 0.0
        %4078 = vst.msk [vmem:[#allocation4 + $0x70] sm:$0xff] %vm3926, 0.0
        %4079 = vst.msk [vmem:[#allocation4 + $0x78] sm:$0x3] %vm4064, 0.0
        %4080 = vst.msk [vmem:[#allocation4 + $0x80] sm:$0xff] %vm3926, 0.0
        %4081 = vst.msk [vmem:[#allocation4 + $0x88] sm:$0x3] %vm4064, 0.0
        %4082 = vst.msk [vmem:[#allocation4 + $0x90] sm:$0xff] %vm3926, 0.0
        %4083 = vst.msk [vmem:[#allocation4 + $0x98] sm:$0x3] %vm4064, 0.0
        %s4084 = scalar_lea.vmem [#allocation4], 16
        %4085 = vst.msk [vmem:[%s4084 + $0x1] sm:$0xff] %vm3926, %v4055
        %4086 = vst.msk [vmem:[%s4084 + $0x11] sm:$0xff] %vm3926, %v4056
        %4087 = vst.msk [vmem:[%s4084 + $0x21] sm:$0xff] %vm3926, %v4057
        %4088 = vst.msk [vmem:[%s4084 + $0x31] sm:$0xff] %vm3926, %v4058
        %4089 = vst.msk [vmem:[%s4084 + $0x41] sm:$0xff] %vm3926, %v4059
        %4090 = vst.msk [vmem:[%s4084 + $0x51] sm:$0xff] %vm3926, %v4060
        %4091 = vst.msk [vmem:[%s4084 + $0x61] sm:$0xff] %vm3926, %v4061
        %4092 = vst.msk [vmem:[%s4084 + $0x71] sm:$0xff] %vm3926, %v4062
        %v4093 = vld [vmem:[%s4] sm:$0x1]
        %v4095 = vlaneseq
        %v4096 = vshrl.u32 %v4095, 7
        %v4097 = vsub.s32 0, %v4096
        %v4098 = vrot.slane %v4093, %v4097
        %v4100 = vld [vmem:[#allocation4] sm:$0xff]
        %v4101 = vld [vmem:[#allocation4 + $0x10] sm:$0xff]
        %v4102 = vld [vmem:[#allocation4 + $0x20] sm:$0xff]
        %v4103 = vld [vmem:[#allocation4 + $0x30] sm:$0xff]
        %v4104 = vld [vmem:[#allocation4 + $0x40] sm:$0xff]
        %v4105 = vld [vmem:[#allocation4 + $0x50] sm:$0xff]
        %v4106 = vld [vmem:[#allocation4 + $0x60] sm:$0xff]
        %v4107 = vld [vmem:[#allocation4 + $0x70] sm:$0xff]
        %v4108 = vld [vmem:[%s3] sm:$0xff]
        %v4110 = vsel %vm3926, %v4100, 0
        %v4113 = vsel %vm3926, %v4101, 0
        %v4116 = vsel %vm3926, %v4102, 0
        %v4119 = vsel %vm3926, %v4103, 0
        %v4122 = vsel %vm3926, %v4104, 0
        %v4125 = vsel %vm3926, %v4105, 0
        %v4128 = vsel %vm3926, %v4106, 0
        %v4131 = vsel %vm3926, %v4107, 0
        %4133 = vmatprep.subr.mxu0 0.0
        %4134 = vmatpush1.msra.mxu0 %v4108
        %4135 = vmatprep.subr.mxu0 0.0
        %4136 = vmatpush1.msra.mxu0 0.0
        %4137 = vmatprep.subr.mxu0 0.0
        %4138 = vmatpush1.msra.mxu0 0.0
        %4139 = vmatprep.subr.mxu0 0.0
        %4140 = vmatpush1.msra.mxu0 0.0
        %4141 = vmatprep.subr.mxu0 0.0
        %4142 = vmatpush1.msra.mxu0 0.0
        %4143 = vmatprep.subr.mxu0 0.0
        %4144 = vmatpush1.msra.mxu0 0.0
        %4145 = vmatprep.subr.mxu0 0.0
        %4146 = vmatpush1.msra.mxu0 0.0
        %4147 = vmatprep.subr.mxu0 0.0
        %4148 = vmatpush1.msra.mxu0 0.0
        %4149 = vmatprep.subr.mxu0 0.0
        %4150 = vmatpush1.msra.mxu0 0.0
        %4151 = vmatprep.subr.mxu0 0.0
        %4152 = vmatpush1.msra.mxu0 0.0
        %4153 = vmatprep.subr.mxu0 0.0
        %4154 = vmatpush1.msra.mxu0 0.0
        %4155 = vmatprep.subr.mxu0 0.0
        %4156 = vmatpush1.msra.mxu0 0.0
        %4157 = vmatprep.subr.mxu0 0.0
        %4158 = vmatpush1.msra.mxu0 0.0
        %4159 = vmatprep.subr.mxu0 0.0
        %4160 = vmatpush1.msra.mxu0 0.0
        %4161 = vmatprep.subr.mxu0 0.0
        %4162 = vmatpush1.msra.mxu0 0.0
        %4163 = vmatprep.subr.mxu0 0.0
        %4164 = vmatpush1.msra.mxu0 0.0
        %4165 = vmatprep.subr.mxu0 0.0
        %4166 = vmatpush1.msra.mxu0 0.0
        %4167 = vmatprep.subr.mxu0 0.0
        %4168 = vmatpush1.msra.mxu0 0.0
        %4169 = vmatprep.subr.mxu0 0.0
        %4170 = vmatpush1.msra.mxu0 0.0
        %4171 = vmatprep.subr.mxu0 0.0
        %4172 = vmatpush1.msra.mxu0 0.0
        %4173 = vmatprep.subr.mxu0 0.0
        %4174 = vmatpush1.msra.mxu0 0.0
        %4175 = vmatprep.subr.mxu0 0.0
        %4176 = vmatpush1.msra.mxu0 0.0
        %4177 = vmatprep.subr.mxu0 0.0
        %4178 = vmatpush1.msra.mxu0 0.0
        %4179 = vmatprep.subr.mxu0 0.0
        %4180 = vmatpush1.msra.mxu0 0.0
        %4181 = vmatprep.subr.mxu0 0.0
        %4182 = vmatpush1.msra.mxu0 0.0
        %4183 = vmatprep.subr.mxu0 0.0
        %4184 = vmatpush1.msra.mxu0 0.0
        %4185 = vmatprep.subr.mxu0 0.0
        %4186 = vmatpush1.msra.mxu0 0.0
        %4187 = vmatprep.subr.mxu0 0.0
        %4188 = vmatpush1.msra.mxu0 0.0
        %4189 = vmatprep.subr.mxu0 0.0
        %4190 = vmatpush1.msra.mxu0 0.0
        %4191 = vmatprep.subr.mxu0 0.0
        %4192 = vmatpush1.msra.mxu0 0.0
        %4193 = vmatprep.subr.mxu0 0.0
        %4194 = vmatpush1.msra.mxu0 0.0
        %4195 = vmatprep.subr.mxu0 0.0
        %4196 = vmatpush1.msra.mxu0 0.0
        %4197 = vmatprep.mubr.f32.mxu0 0.0
        %4198 = vmatmul.mubr.f32.gmra.mrb[0].mxu0 %v4110
        %v4199 = vpop.f32.mrb[0].mxu0
        %v4200 = vadd.f32 0.0, %v4199
        %v4201 = vpop.f32.mrb[0].mxu0
        %4202 = vmatprep.mubr.f32.mxu0 0.0
        %4203 = vmatmul.mubr.f32.gmra.mrb[0].mxu0 %v4113
        %v4204 = vpop.f32.mrb[0].mxu0
        %v4205 = vadd.f32 0.0, %v4204
        %v4206 = vpop.f32.mrb[0].mxu0
        %4207 = vmatprep.mubr.f32.mxu0 0.0
        %4208 = vmatmul.mubr.f32.gmra.mrb[0].mxu0 %v4116
        %v4209 = vpop.f32.mrb[0].mxu0
        %v4210 = vadd.f32 0.0, %v4209
        %v4211 = vpop.f32.mrb[0].mxu0
        %4212 = vmatprep.mubr.f32.mxu0 0.0
        %4213 = vmatmul.mubr.f32.gmra.mrb[0].mxu0 %v4119
        %v4214 = vpop.f32.mrb[0].mxu0
        %v4215 = vadd.f32 0.0, %v4214
        %v4216 = vpop.f32.mrb[0].mxu0
        %4217 = vmatprep.mubr.f32.mxu0 0.0
        %4218 = vmatmul.mubr.f32.gmra.mrb[0].mxu0 %v4122
        %v4219 = vpop.f32.mrb[0].mxu0
        %v4220 = vadd.f32 0.0, %v4219
        %v4221 = vpop.f32.mrb[0].mxu0
        %4222 = vmatprep.mubr.f32.mxu0 0.0
        %4223 = vmatmul.mubr.f32.gmra.mrb[0].mxu0 %v4125
        %v4224 = vpop.f32.mrb[0].mxu0
        %v4225 = vadd.f32 0.0, %v4224
        %v4226 = vpop.f32.mrb[0].mxu0
        %4227 = vmatprep.mubr.f32.mxu0 0.0
        %4228 = vmatmul.mubr.f32.gmra.mrb[0].mxu0 %v4128
        %v4229 = vpop.f32.mrb[0].mxu0
        %v4230 = vadd.f32 0.0, %v4229
        %v4231 = vpop.f32.mrb[0].mxu0
        %4232 = vmatprep.mubr.f32.mxu0 0.0
        %4233 = vmatmul.mubr.f32.gmra.mrb[0].mxu0 %v4131
        %v4234 = vpop.f32.mrb[0].mxu0
        %v4235 = vadd.f32 0.0, %v4234
        %v4236 = vpop.f32.mrb[0].mxu0
        %4237 = vdwg.mxu0
        %v4238 = vadd.f32 %v4098, %v4200
        %v4239 = vadd.f32 %v4098, %v4205
        %v4240 = vadd.f32 %v4098, %v4210
        %v4241 = vadd.f32 %v4098, %v4215
        %v4242 = vadd.f32 %v4098, %v4220
        %v4243 = vadd.f32 %v4098, %v4225
        %v4244 = vadd.f32 %v4098, %v4230
        %v4245 = vadd.f32 %v4098, %v4235
        %v4246 = vld [vmem:[#allocation4 + $0x1] sm:$0xff]
        %v4247 = vld [vmem:[#allocation4 + $0x11] sm:$0xff]
        %v4248 = vld [vmem:[#allocation4 + $0x21] sm:$0xff]
        %v4249 = vld [vmem:[#allocation4 + $0x31] sm:$0xff]
        %v4250 = vld [vmem:[#allocation4 + $0x41] sm:$0xff]
        %v4251 = vld [vmem:[#allocation4 + $0x51] sm:$0xff]
        %v4252 = vld [vmem:[#allocation4 + $0x61] sm:$0xff]
        %v4253 = vld [vmem:[#allocation4 + $0x71] sm:$0xff]
        %v4254 = vld [vmem:[%s3 + $0x8] sm:$0xff]
        %v4256 = vsel %vm3926, %v4246, 0
        %v4259 = vsel %vm3926, %v4247, 0
        %v4262 = vsel %vm3926, %v4248, 0
        %v4265 = vsel %vm3926, %v4249, 0
        %v4268 = vsel %vm3926, %v4250, 0
        %v4271 = vsel %vm3926, %v4251, 0
        %v4274 = vsel %vm3926, %v4252, 0
        %v4277 = vsel %vm3926, %v4253, 0
        %4279 = vmatprep.subr.mxu0 0.0
        %4280 = vmatpush1.msra.mxu0 %v4254
        %4281 = vmatprep.subr.mxu0 0.0
        %4282 = vmatpush1.msra.mxu0 0.0
        %4283 = vmatprep.subr.mxu0 0.0
        %4284 = vmatpush1.msra.mxu0 0.0
        %4285 = vmatprep.subr.mxu0 0.0
        %4286 = vmatpush1.msra.mxu0 0.0
        %4287 = vmatprep.subr.mxu0 0.0
        %4288 = vmatpush1.msra.mxu0 0.0
        %4289 = vmatprep.subr.mxu0 0.0
        %4290 = vmatpush1.msra.mxu0 0.0
        %4291 = vmatprep.subr.mxu0 0.0
        %4292 = vmatpush1.msra.mxu0 0.0
        %4293 = vmatprep.subr.mxu0 0.0
        %4294 = vmatpush1.msra.mxu0 0.0
        %4295 = vmatprep.subr.mxu0 0.0
        %4296 = vmatpush1.msra.mxu0 0.0
        %4297 = vmatprep.subr.mxu0 0.0
        %4298 = vmatpush1.msra.mxu0 0.0
        %4299 = vmatprep.subr.mxu0 0.0
        %4300 = vmatpush1.msra.mxu0 0.0
        %4301 = vmatprep.subr.mxu0 0.0
        %4302 = vmatpush1.msra.mxu0 0.0
        %4303 = vmatprep.subr.mxu0 0.0
        %4304 = vmatpush1.msra.mxu0 0.0
        %4305 = vmatprep.subr.mxu0 0.0
        %4306 = vmatpush1.msra.mxu0 0.0
        %4307 = vmatprep.subr.mxu0 0.0
        %4308 = vmatpush1.msra.mxu0 0.0
        %4309 = vmatprep.subr.mxu0 0.0
        %4310 = vmatpush1.msra.mxu0 0.0
        %4311 = vmatprep.subr.mxu0 0.0
        %4312 = vmatpush1.msra.mxu0 0.0
        %4313 = vmatprep.subr.mxu0 0.0
        %4314 = vmatpush1.msra.mxu0 0.0
        %4315 = vmatprep.subr.mxu0 0.0
        %4316 = vmatpush1.msra.mxu0 0.0
        %4317 = vmatprep.subr.mxu0 0.0
        %4318 = vmatpush1.msra.mxu0 0.0
        %4319 = vmatprep.subr.mxu0 0.0
        %4320 = vmatpush1.msra.mxu0 0.0
        %4321 = vmatprep.subr.mxu0 0.0
        %4322 = vmatpush1.msra.mxu0 0.0
        %4323 = vmatprep.subr.mxu0 0.0
        %4324 = vmatpush1.msra.mxu0 0.0
        %4325 = vmatprep.subr.mxu0 0.0
        %4326 = vmatpush1.msra.mxu0 0.0
        %4327 = vmatprep.subr.mxu0 0.0
        %4328 = vmatpush1.msra.mxu0 0.0
        %4329 = vmatprep.subr.mxu0 0.0
        %4330 = vmatpush1.msra.mxu0 0.0
        %4331 = vmatprep.subr.mxu0 0.0
        %4332 = vmatpush1.msra.mxu0 0.0
        %4333 = vmatprep.subr.mxu0 0.0
        %4334 = vmatpush1.msra.mxu0 0.0
        %4335 = vmatprep.subr.mxu0 0.0
        %4336 = vmatpush1.msra.mxu0 0.0
        %4337 = vmatprep.subr.mxu0 0.0
        %4338 = vmatpush1.msra.mxu0 0.0
        %4339 = vmatprep.subr.mxu0 0.0
        %4340 = vmatpush1.msra.mxu0 0.0
        %4341 = vmatprep.subr.mxu0 0.0
        %4342 = vmatpush1.msra.mxu0 0.0
        %4343 = vmatprep.mubr.f32.mxu0 0.0
        %4344 = vmatmul.mubr.f32.gmra.mrb[0].mxu0 %v4256
        %v4345 = vpop.f32.mrb[0].mxu0
        %v4346 = vadd.f32 0.0, %v4345
        %v4347 = vpop.f32.mrb[0].mxu0
        %4348 = vmatprep.mubr.f32.mxu0 0.0
        %4349 = vmatmul.mubr.f32.gmra.mrb[0].mxu0 %v4259
        %v4350 = vpop.f32.mrb[0].mxu0
        %v4351 = vadd.f32 0.0, %v4350
        %v4352 = vpop.f32.mrb[0].mxu0
        %4353 = vmatprep.mubr.f32.mxu0 0.0
        %4354 = vmatmul.mubr.f32.gmra.mrb[0].mxu0 %v4262
        %v4355 = vpop.f32.mrb[0].mxu0
        %v4356 = vadd.f32 0.0, %v4355
        %v4357 = vpop.f32.mrb[0].mxu0
        %4358 = vmatprep.mubr.f32.mxu0 0.0
        %4359 = vmatmul.mubr.f32.gmra.mrb[0].mxu0 %v4265
        %v4360 = vpop.f32.mrb[0].mxu0
        %v4361 = vadd.f32 0.0, %v4360
        %v4362 = vpop.f32.mrb[0].mxu0
        %4363 = vmatprep.mubr.f32.mxu0 0.0
        %4364 = vmatmul.mubr.f32.gmra.mrb[0].mxu0 %v4268
        %v4365 = vpop.f32.mrb[0].mxu0
        %v4366 = vadd.f32 0.0, %v4365
        %v4367 = vpop.f32.mrb[0].mxu0
        %4368 = vmatprep.mubr.f32.mxu0 0.0
        %4369 = vmatmul.mubr.f32.gmra.mrb[0].mxu0 %v4271
        %v4370 = vpop.f32.mrb[0].mxu0
        %v4371 = vadd.f32 0.0, %v4370
        %v4372 = vpop.f32.mrb[0].mxu0
        %4373 = vmatprep.mubr.f32.mxu0 0.0
        %4374 = vmatmul.mubr.f32.gmra.mrb[0].mxu0 %v4274
        %v4375 = vpop.f32.mrb[0].mxu0
        %v4376 = vadd.f32 0.0, %v4375
        %v4377 = vpop.f32.mrb[0].mxu0
        %4378 = vmatprep.mubr.f32.mxu0 0.0
        %4379 = vmatmul.mubr.f32.gmra.mrb[0].mxu0 %v4277
        %v4380 = vpop.f32.mrb[0].mxu0
        %v4381 = vadd.f32 0.0, %v4380
        %v4382 = vpop.f32.mrb[0].mxu0
        %4383 = vdwg.mxu0
        %v4384 = vadd.f32 %v4238, %v4346
        %v4385 = vadd.f32 %v4239, %v4351
        %v4386 = vadd.f32 %v4240, %v4356
        %v4387 = vadd.f32 %v4241, %v4361
        %v4388 = vadd.f32 %v4242, %v4366
        %v4389 = vadd.f32 %v4243, %v4371
        %v4390 = vadd.f32 %v4244, %v4376
        %v4391 = vadd.f32 %v4245, %v4381
        %v4392 = vld [vmem:[#allocation4 + $0x2] sm:$0xff]
        %v4393 = vld [vmem:[#allocation4 + $0x12] sm:$0xff]
        %v4394 = vld [vmem:[#allocation4 + $0x22] sm:$0xff]
        %v4395 = vld [vmem:[#allocation4 + $0x32] sm:$0xff]
        %v4396 = vld [vmem:[#allocation4 + $0x42] sm:$0xff]
        %v4397 = vld [vmem:[#allocation4 + $0x52] sm:$0xff]
        %v4398 = vld [vmem:[#allocation4 + $0x62] sm:$0xff]
        %v4399 = vld [vmem:[#allocation4 + $0x72] sm:$0xff]
        %v4400 = vld [vmem:[%s3 + $0x10] sm:$0xff]
        %v4402 = vsel %vm3926, %v4392, 0
        %v4405 = vsel %vm3926, %v4393, 0
        %v4408 = vsel %vm3926, %v4394, 0
        %v4411 = vsel %vm3926, %v4395, 0
        %v4414 = vsel %vm3926, %v4396, 0
        %v4417 = vsel %vm3926, %v4397, 0
        %v4420 = vsel %vm3926, %v4398, 0
        %v4423 = vsel %vm3926, %v4399, 0
        %4425 = vmatprep.subr.mxu0 0.0
        %4426 = vmatpush1.msra.mxu0 %v4400
        %4427 = vmatprep.subr.mxu0 0.0
        %4428 = vmatpush1.msra.mxu0 0.0
        %4429 = vmatprep.subr.mxu0 0.0
        %4430 = vmatpush1.msra.mxu0 0.0
        %4431 = vmatprep.subr.mxu0 0.0
        %4432 = vmatpush1.msra.mxu0 0.0
        %4433 = vmatprep.subr.mxu0 0.0
        %4434 = vmatpush1.msra.mxu0 0.0
        %4435 = vmatprep.subr.mxu0 0.0
        %4436 = vmatpush1.msra.mxu0 0.0
        %4437 = vmatprep.subr.mxu0 0.0
        %4438 = vmatpush1.msra.mxu0 0.0
        %4439 = vmatprep.subr.mxu0 0.0
        %4440 = vmatpush1.msra.mxu0 0.0
        %4441 = vmatprep.subr.mxu0 0.0
        %4442 = vmatpush1.msra.mxu0 0.0
        %4443 = vmatprep.subr.mxu0 0.0
        %4444 = vmatpush1.msra.mxu0 0.0
        %4445 = vmatprep.subr.mxu0 0.0
        %4446 = vmatpush1.msra.mxu0 0.0
        %4447 = vmatprep.subr.mxu0 0.0
        %4448 = vmatpush1.msra.mxu0 0.0
        %4449 = vmatprep.subr.mxu0 0.0
        %4450 = vmatpush1.msra.mxu0 0.0
        %4451 = vmatprep.subr.mxu0 0.0
        %4452 = vmatpush1.msra.mxu0 0.0
        %4453 = vmatprep.subr.mxu0 0.0
        %4454 = vmatpush1.msra.mxu0 0.0
        %4455 = vmatprep.subr.mxu0 0.0
        %4456 = vmatpush1.msra.mxu0 0.0
        %4457 = vmatprep.subr.mxu0 0.0
        %4458 = vmatpush1.msra.mxu0 0.0
        %4459 = vmatprep.subr.mxu0 0.0
        %4460 = vmatpush1.msra.mxu0 0.0
        %4461 = vmatprep.subr.mxu0 0.0
        %4462 = vmatpush1.msra.mxu0 0.0
        %4463 = vmatprep.subr.mxu0 0.0
        %4464 = vmatpush1.msra.mxu0 0.0
        %4465 = vmatprep.subr.mxu0 0.0
        %4466 = vmatpush1.msra.mxu0 0.0
        %4467 = vmatprep.subr.mxu0 0.0
        %4468 = vmatpush1.msra.mxu0 0.0
        %4469 = vmatprep.subr.mxu0 0.0
        %4470 = vmatpush1.msra.mxu0 0.0
        %4471 = vmatprep.subr.mxu0 0.0
        %4472 = vmatpush1.msra.mxu0 0.0
        %4473 = vmatprep.subr.mxu0 0.0
        %4474 = vmatpush1.msra.mxu0 0.0
        %4475 = vmatprep.subr.mxu0 0.0
        %4476 = vmatpush1.msra.mxu0 0.0
        %4477 = vmatprep.subr.mxu0 0.0
        %4478 = vmatpush1.msra.mxu0 0.0
        %4479 = vmatprep.subr.mxu0 0.0
        %4480 = vmatpush1.msra.mxu0 0.0
        %4481 = vmatprep.subr.mxu0 0.0
        %4482 = vmatpush1.msra.mxu0 0.0
        %4483 = vmatprep.subr.mxu0 0.0
        %4484 = vmatpush1.msra.mxu0 0.0
        %4485 = vmatprep.subr.mxu0 0.0
        %4486 = vmatpush1.msra.mxu0 0.0
        %4487 = vmatprep.subr.mxu0 0.0
        %4488 = vmatpush1.msra.mxu0 0.0
        %4489 = vmatprep.mubr.f32.mxu0 0.0
        %4490 = vmatmul.mubr.f32.gmra.mrb[0].mxu0 %v4402
        %v4491 = vpop.f32.mrb[0].mxu0
        %v4492 = vadd.f32 0.0, %v4491
        %v4493 = vpop.f32.mrb[0].mxu0
        %4494 = vmatprep.mubr.f32.mxu0 0.0
        %4495 = vmatmul.mubr.f32.gmra.mrb[0].mxu0 %v4405
        %v4496 = vpop.f32.mrb[0].mxu0
        %v4497 = vadd.f32 0.0, %v4496
        %v4498 = vpop.f32.mrb[0].mxu0
        %4499 = vmatprep.mubr.f32.mxu0 0.0
        %4500 = vmatmul.mubr.f32.gmra.mrb[0].mxu0 %v4408
        %v4501 = vpop.f32.mrb[0].mxu0
        %v4502 = vadd.f32 0.0, %v4501
        %v4503 = vpop.f32.mrb[0].mxu0
        %4504 = vmatprep.mubr.f32.mxu0 0.0
        %4505 = vmatmul.mubr.f32.gmra.mrb[0].mxu0 %v4411
        %v4506 = vpop.f32.mrb[0].mxu0
        %v4507 = vadd.f32 0.0, %v4506
        %v4508 = vpop.f32.mrb[0].mxu0
        %4509 = vmatprep.mubr.f32.mxu0 0.0
        %4510 = vmatmul.mubr.f32.gmra.mrb[0].mxu0 %v4414
        %v4511 = vpop.f32.mrb[0].mxu0
        %v4512 = vadd.f32 0.0, %v4511
        %v4513 = vpop.f32.mrb[0].mxu0
        %4514 = vmatprep.mubr.f32.mxu0 0.0
        %4515 = vmatmul.mubr.f32.gmra.mrb[0].mxu0 %v4417
        %v4516 = vpop.f32.mrb[0].mxu0
        %v4517 = vadd.f32 0.0, %v4516
        %v4518 = vpop.f32.mrb[0].mxu0
        %4519 = vmatprep.mubr.f32.mxu0 0.0
        %4520 = vmatmul.mubr.f32.gmra.mrb[0].mxu0 %v4420
        %v4521 = vpop.f32.mrb[0].mxu0
        %v4522 = vadd.f32 0.0, %v4521
        %v4523 = vpop.f32.mrb[0].mxu0
        %4524 = vmatprep.mubr.f32.mxu0 0.0
        %4525 = vmatmul.mubr.f32.gmra.mrb[0].mxu0 %v4423
        %v4526 = vpop.f32.mrb[0].mxu0
        %v4527 = vadd.f32 0.0, %v4526
        %v4528 = vpop.f32.mrb[0].mxu0
        %4529 = vdwg.mxu0
        %v4530 = vadd.f32 %v4384, %v4492
        %v4531 = vadd.f32 %v4385, %v4497
        %v4532 = vadd.f32 %v4386, %v4502
        %v4533 = vadd.f32 %v4387, %v4507
        %v4534 = vadd.f32 %v4388, %v4512
        %v4535 = vadd.f32 %v4389, %v4517
        %v4536 = vadd.f32 %v4390, %v4522
        %v4537 = vadd.f32 %v4391, %v4527
        %v4538 = vld [vmem:[%s4084] sm:$0xff]
        %v4539 = vld [vmem:[%s4084 + $0x10] sm:$0xff]
        %v4540 = vld [vmem:[%s4084 + $0x20] sm:$0xff]
        %v4541 = vld [vmem:[%s4084 + $0x30] sm:$0xff]
        %v4542 = vld [vmem:[%s4084 + $0x40] sm:$0xff]
        %v4543 = vld [vmem:[%s4084 + $0x50] sm:$0xff]
        %v4544 = vld [vmem:[%s4084 + $0x60] sm:$0xff]
        %v4545 = vld [vmem:[%s4084 + $0x70] sm:$0xff]
        %v4546 = vld [vmem:[%s3 + $0x18] sm:$0xff]
        %v4548 = vsel %vm3926, %v4538, 0
        %v4551 = vsel %vm3926, %v4539, 0
        %v4554 = vsel %vm3926, %v4540, 0
        %v4557 = vsel %vm3926, %v4541, 0
        %v4560 = vsel %vm3926, %v4542, 0
        %v4563 = vsel %vm3926, %v4543, 0
        %v4566 = vsel %vm3926, %v4544, 0
        %v4569 = vsel %vm3926, %v4545, 0
        %4571 = vmatprep.subr.mxu0 0.0
        %4572 = vmatpush1.msra.mxu0 %v4546
        %4573 = vmatprep.subr.mxu0 0.0
        %4574 = vmatpush1.msra.mxu0 0.0
        %4575 = vmatprep.subr.mxu0 0.0
        %4576 = vmatpush1.msra.mxu0 0.0
        %4577 = vmatprep.subr.mxu0 0.0
        %4578 = vmatpush1.msra.mxu0 0.0
        %4579 = vmatprep.subr.mxu0 0.0
        %4580 = vmatpush1.msra.mxu0 0.0
        %4581 = vmatprep.subr.mxu0 0.0
        %4582 = vmatpush1.msra.mxu0 0.0
        %4583 = vmatprep.subr.mxu0 0.0
        %4584 = vmatpush1.msra.mxu0 0.0
        %4585 = vmatprep.subr.mxu0 0.0
        %4586 = vmatpush1.msra.mxu0 0.0
        %4587 = vmatprep.subr.mxu0 0.0
        %4588 = vmatpush1.msra.mxu0 0.0
        %4589 = vmatprep.subr.mxu0 0.0
        %4590 = vmatpush1.msra.mxu0 0.0
        %4591 = vmatprep.subr.mxu0 0.0
        %4592 = vmatpush1.msra.mxu0 0.0
        %4593 = vmatprep.subr.mxu0 0.0
        %4594 = vmatpush1.msra.mxu0 0.0
        %4595 = vmatprep.subr.mxu0 0.0
        %4596 = vmatpush1.msra.mxu0 0.0
        %4597 = vmatprep.subr.mxu0 0.0
        %4598 = vmatpush1.msra.mxu0 0.0
        %4599 = vmatprep.subr.mxu0 0.0
        %4600 = vmatpush1.msra.mxu0 0.0
        %4601 = vmatprep.subr.mxu0 0.0
        %4602 = vmatpush1.msra.mxu0 0.0
        %4603 = vmatprep.subr.mxu0 0.0
        %4604 = vmatpush1.msra.mxu0 0.0
        %4605 = vmatprep.subr.mxu0 0.0
        %4606 = vmatpush1.msra.mxu0 0.0
        %4607 = vmatprep.subr.mxu0 0.0
        %4608 = vmatpush1.msra.mxu0 0.0
        %4609 = vmatprep.subr.mxu0 0.0
        %4610 = vmatpush1.msra.mxu0 0.0
        %4611 = vmatprep.subr.mxu0 0.0
        %4612 = vmatpush1.msra.mxu0 0.0
        %4613 = vmatprep.subr.mxu0 0.0
        %4614 = vmatpush1.msra.mxu0 0.0
        %4615 = vmatprep.subr.mxu0 0.0
        %4616 = vmatpush1.msra.mxu0 0.0
        %4617 = vmatprep.subr.mxu0 0.0
        %4618 = vmatpush1.msra.mxu0 0.0
        %4619 = vmatprep.subr.mxu0 0.0
        %4620 = vmatpush1.msra.mxu0 0.0
        %4621 = vmatprep.subr.mxu0 0.0
        %4622 = vmatpush1.msra.mxu0 0.0
        %4623 = vmatprep.subr.mxu0 0.0
        %4624 = vmatpush1.msra.mxu0 0.0
        %4625 = vmatprep.subr.mxu0 0.0
        %4626 = vmatpush1.msra.mxu0 0.0
        %4627 = vmatprep.subr.mxu0 0.0
        %4628 = vmatpush1.msra.mxu0 0.0
        %4629 = vmatprep.subr.mxu0 0.0
        %4630 = vmatpush1.msra.mxu0 0.0
        %4631 = vmatprep.subr.mxu0 0.0
        %4632 = vmatpush1.msra.mxu0 0.0
        %4633 = vmatprep.subr.mxu0 0.0
        %4634 = vmatpush1.msra.mxu0 0.0
        %4635 = vmatprep.mubr.f32.mxu0 0.0
        %4636 = vmatmul.mubr.f32.gmra.mrb[0].mxu0 %v4548
        %v4637 = vpop.f32.mrb[0].mxu0
        %v4638 = vadd.f32 0.0, %v4637
        %v4639 = vpop.f32.mrb[0].mxu0
        %4640 = vmatprep.mubr.f32.mxu0 0.0
        %4641 = vmatmul.mubr.f32.gmra.mrb[0].mxu0 %v4551
        %v4642 = vpop.f32.mrb[0].mxu0
        %v4643 = vadd.f32 0.0, %v4642
        %v4644 = vpop.f32.mrb[0].mxu0
        %4645 = vmatprep.mubr.f32.mxu0 0.0
        %4646 = vmatmul.mubr.f32.gmra.mrb[0].mxu0 %v4554
        %v4647 = vpop.f32.mrb[0].mxu0
        %v4648 = vadd.f32 0.0, %v4647
        %v4649 = vpop.f32.mrb[0].mxu0
        %4650 = vmatprep.mubr.f32.mxu0 0.0
        %4651 = vmatmul.mubr.f32.gmra.mrb[0].mxu0 %v4557
        %v4652 = vpop.f32.mrb[0].mxu0
        %v4653 = vadd.f32 0.0, %v4652
        %v4654 = vpop.f32.mrb[0].mxu0
        %4655 = vmatprep.mubr.f32.mxu0 0.0
        %4656 = vmatmul.mubr.f32.gmra.mrb[0].mxu0 %v4560
        %v4657 = vpop.f32.mrb[0].mxu0
        %v4658 = vadd.f32 0.0, %v4657
        %v4659 = vpop.f32.mrb[0].mxu0
        %4660 = vmatprep.mubr.f32.mxu0 0.0
        %4661 = vmatmul.mubr.f32.gmra.mrb[0].mxu0 %v4563
        %v4662 = vpop.f32.mrb[0].mxu0
        %v4663 = vadd.f32 0.0, %v4662
        %v4664 = vpop.f32.mrb[0].mxu0
        %4665 = vmatprep.mubr.f32.mxu0 0.0
        %4666 = vmatmul.mubr.f32.gmra.mrb[0].mxu0 %v4566
        %v4667 = vpop.f32.mrb[0].mxu0
        %v4668 = vadd.f32 0.0, %v4667
        %v4669 = vpop.f32.mrb[0].mxu0
        %4670 = vmatprep.mubr.f32.mxu0 0.0
        %4671 = vmatmul.mubr.f32.gmra.mrb[0].mxu0 %v4569
        %v4672 = vpop.f32.mrb[0].mxu0
        %v4673 = vadd.f32 0.0, %v4672
        %v4674 = vpop.f32.mrb[0].mxu0
        %4675 = vdwg.mxu0
        %v4676 = vadd.f32 %v4530, %v4638
        %v4677 = vadd.f32 %v4531, %v4643
        %v4678 = vadd.f32 %v4532, %v4648
        %v4679 = vadd.f32 %v4533, %v4653
        %v4680 = vadd.f32 %v4534, %v4658
        %v4681 = vadd.f32 %v4535, %v4663
        %v4682 = vadd.f32 %v4536, %v4668
        %v4683 = vadd.f32 %v4537, %v4673
        %v4684 = vld [vmem:[%s4084 + $0x1] sm:$0xff]
        %v4685 = vld [vmem:[%s4084 + $0x11] sm:$0xff]
        %v4686 = vld [vmem:[%s4084 + $0x21] sm:$0xff]
        %v4687 = vld [vmem:[%s4084 + $0x31] sm:$0xff]
        %v4688 = vld [vmem:[%s4084 + $0x41] sm:$0xff]
        %v4689 = vld [vmem:[%s4084 + $0x51] sm:$0xff]
        %v4690 = vld [vmem:[%s4084 + $0x61] sm:$0xff]
        %v4691 = vld [vmem:[%s4084 + $0x71] sm:$0xff]
        %v4692 = vld [vmem:[%s3 + $0x20] sm:$0xff]
        %v4694 = vsel %vm3926, %v4684, 0
        %v4697 = vsel %vm3926, %v4685, 0
        %v4700 = vsel %vm3926, %v4686, 0
        %v4703 = vsel %vm3926, %v4687, 0
        %v4706 = vsel %vm3926, %v4688, 0
        %v4709 = vsel %vm3926, %v4689, 0
        %v4712 = vsel %vm3926, %v4690, 0
        %v4715 = vsel %vm3926, %v4691, 0
        %4717 = vmatprep.subr.mxu0 0.0
        %4718 = vmatpush1.msra.mxu0 %v4692
        %4719 = vmatprep.subr.mxu0 0.0
        %4720 = vmatpush1.msra.mxu0 0.0
        %4721 = vmatprep.subr.mxu0 0.0
        %4722 = vmatpush1.msra.mxu0 0.0
        %4723 = vmatprep.subr.mxu0 0.0
        %4724 = vmatpush1.msra.mxu0 0.0
        %4725 = vmatprep.subr.mxu0 0.0
        %4726 = vmatpush1.msra.mxu0 0.0
        %4727 = vmatprep.subr.mxu0 0.0
        %4728 = vmatpush1.msra.mxu0 0.0
        %4729 = vmatprep.subr.mxu0 0.0
        %4730 = vmatpush1.msra.mxu0 0.0
        %4731 = vmatprep.subr.mxu0 0.0
        %4732 = vmatpush1.msra.mxu0 0.0
        %4733 = vmatprep.subr.mxu0 0.0
        %4734 = vmatpush1.msra.mxu0 0.0
        %4735 = vmatprep.subr.mxu0 0.0
        %4736 = vmatpush1.msra.mxu0 0.0
        %4737 = vmatprep.subr.mxu0 0.0
        %4738 = vmatpush1.msra.mxu0 0.0
        %4739 = vmatprep.subr.mxu0 0.0
        %4740 = vmatpush1.msra.mxu0 0.0
        %4741 = vmatprep.subr.mxu0 0.0
        %4742 = vmatpush1.msra.mxu0 0.0
        %4743 = vmatprep.subr.mxu0 0.0
        %4744 = vmatpush1.msra.mxu0 0.0
        %4745 = vmatprep.subr.mxu0 0.0
        %4746 = vmatpush1.msra.mxu0 0.0
        %4747 = vmatprep.subr.mxu0 0.0
        %4748 = vmatpush1.msra.mxu0 0.0
        %4749 = vmatprep.subr.mxu0 0.0
        %4750 = vmatpush1.msra.mxu0 0.0
        %4751 = vmatprep.subr.mxu0 0.0
        %4752 = vmatpush1.msra.mxu0 0.0
        %4753 = vmatprep.subr.mxu0 0.0
        %4754 = vmatpush1.msra.mxu0 0.0
        %4755 = vmatprep.subr.mxu0 0.0
        %4756 = vmatpush1.msra.mxu0 0.0
        %4757 = vmatprep.subr.mxu0 0.0
        %4758 = vmatpush1.msra.mxu0 0.0
        %4759 = vmatprep.subr.mxu0 0.0
        %4760 = vmatpush1.msra.mxu0 0.0
        %4761 = vmatprep.subr.mxu0 0.0
        %4762 = vmatpush1.msra.mxu0 0.0
        %4763 = vmatprep.subr.mxu0 0.0
        %4764 = vmatpush1.msra.mxu0 0.0
        %4765 = vmatprep.subr.mxu0 0.0
        %4766 = vmatpush1.msra.mxu0 0.0
        %4767 = vmatprep.subr.mxu0 0.0
        %4768 = vmatpush1.msra.mxu0 0.0
        %4769 = vmatprep.subr.mxu0 0.0
        %4770 = vmatpush1.msra.mxu0 0.0
        %4771 = vmatprep.subr.mxu0 0.0
        %4772 = vmatpush1.msra.mxu0 0.0
        %4773 = vmatprep.subr.mxu0 0.0
        %4774 = vmatpush1.msra.mxu0 0.0
        %4775 = vmatprep.subr.mxu0 0.0
        %4776 = vmatpush1.msra.mxu0 0.0
        %4777 = vmatprep.subr.mxu0 0.0
        %4778 = vmatpush1.msra.mxu0 0.0
        %4779 = vmatprep.subr.mxu0 0.0
        %4780 = vmatpush1.msra.mxu0 0.0
        %4781 = vmatprep.mubr.f32.mxu0 0.0
        %4782 = vmatmul.mubr.f32.gmra.mrb[0].mxu0 %v4694
        %v4783 = vpop.f32.mrb[0].mxu0
        %v4784 = vadd.f32 0.0, %v4783
        %v4785 = vpop.f32.mrb[0].mxu0
        %4786 = vmatprep.mubr.f32.mxu0 0.0
        %4787 = vmatmul.mubr.f32.gmra.mrb[0].mxu0 %v4697
        %v4788 = vpop.f32.mrb[0].mxu0
        %v4789 = vadd.f32 0.0, %v4788
        %v4790 = vpop.f32.mrb[0].mxu0
        %4791 = vmatprep.mubr.f32.mxu0 0.0
        %4792 = vmatmul.mubr.f32.gmra.mrb[0].mxu0 %v4700
        %v4793 = vpop.f32.mrb[0].mxu0
        %v4794 = vadd.f32 0.0, %v4793
        %v4795 = vpop.f32.mrb[0].mxu0
        %4796 = vmatprep.mubr.f32.mxu0 0.0
        %4797 = vmatmul.mubr.f32.gmra.mrb[0].mxu0 %v4703
        %v4798 = vpop.f32.mrb[0].mxu0
        %v4799 = vadd.f32 0.0, %v4798
        %v4800 = vpop.f32.mrb[0].mxu0
        %4801 = vmatprep.mubr.f32.mxu0 0.0
        %4802 = vmatmul.mubr.f32.gmra.mrb[0].mxu0 %v4706
        %v4803 = vpop.f32.mrb[0].mxu0
        %v4804 = vadd.f32 0.0, %v4803
        %v4805 = vpop.f32.mrb[0].mxu0
        %4806 = vmatprep.mubr.f32.mxu0 0.0
        %4807 = vmatmul.mubr.f32.gmra.mrb[0].mxu0 %v4709
        %v4808 = vpop.f32.mrb[0].mxu0
        %v4809 = vadd.f32 0.0, %v4808
        %v4810 = vpop.f32.mrb[0].mxu0
        %4811 = vmatprep.mubr.f32.mxu0 0.0
        %4812 = vmatmul.mubr.f32.gmra.mrb[0].mxu0 %v4712
        %v4813 = vpop.f32.mrb[0].mxu0
        %v4814 = vadd.f32 0.0, %v4813
        %v4815 = vpop.f32.mrb[0].mxu0
        %4816 = vmatprep.mubr.f32.mxu0 0.0
        %4817 = vmatmul.mubr.f32.gmra.mrb[0].mxu0 %v4715
        %v4818 = vpop.f32.mrb[0].mxu0
        %v4819 = vadd.f32 0.0, %v4818
        %v4820 = vpop.f32.mrb[0].mxu0
        %4821 = vdwg.mxu0
        %v4822 = vadd.f32 %v4676, %v4784
        %v4823 = vadd.f32 %v4677, %v4789
        %v4824 = vadd.f32 %v4678, %v4794
        %v4825 = vadd.f32 %v4679, %v4799
        %v4826 = vadd.f32 %v4680, %v4804
        %v4827 = vadd.f32 %v4681, %v4809
        %v4828 = vadd.f32 %v4682, %v4814
        %v4829 = vadd.f32 %v4683, %v4819
        %v4830 = vld [vmem:[%s4084 + $0x2] sm:$0xff]
        %v4831 = vld [vmem:[%s4084 + $0x12] sm:$0xff]
        %v4832 = vld [vmem:[%s4084 + $0x22] sm:$0xff]
        %v4833 = vld [vmem:[%s4084 + $0x32] sm:$0xff]
        %v4834 = vld [vmem:[%s4084 + $0x42] sm:$0xff]
        %v4835 = vld [vmem:[%s4084 + $0x52] sm:$0xff]
        %v4836 = vld [vmem:[%s4084 + $0x62] sm:$0xff]
        %v4837 = vld [vmem:[%s4084 + $0x72] sm:$0xff]
        %v4838 = vld [vmem:[%s3 + $0x28] sm:$0xff]
        %v4840 = vsel %vm3926, %v4830, 0
        %v4843 = vsel %vm3926, %v4831, 0
        %v4846 = vsel %vm3926, %v4832, 0
        %v4849 = vsel %vm3926, %v4833, 0
        %v4852 = vsel %vm3926, %v4834, 0
        %v4855 = vsel %vm3926, %v4835, 0
        %v4858 = vsel %vm3926, %v4836, 0
        %v4861 = vsel %vm3926, %v4837, 0
        %4863 = vmatprep.subr.mxu0 0.0
        %4864 = vmatpush1.msra.mxu0 %v4838
        %4865 = vmatprep.subr.mxu0 0.0
        %4866 = vmatpush1.msra.mxu0 0.0
        %4867 = vmatprep.subr.mxu0 0.0
        %4868 = vmatpush1.msra.mxu0 0.0
        %4869 = vmatprep.subr.mxu0 0.0
        %4870 = vmatpush1.msra.mxu0 0.0
        %4871 = vmatprep.subr.mxu0 0.0
        %4872 = vmatpush1.msra.mxu0 0.0
        %4873 = vmatprep.subr.mxu0 0.0
        %4874 = vmatpush1.msra.mxu0 0.0
        %4875 = vmatprep.subr.mxu0 0.0
        %4876 = vmatpush1.msra.mxu0 0.0
        %4877 = vmatprep.subr.mxu0 0.0
        %4878 = vmatpush1.msra.mxu0 0.0
        %4879 = vmatprep.subr.mxu0 0.0
        %4880 = vmatpush1.msra.mxu0 0.0
        %4881 = vmatprep.subr.mxu0 0.0
        %4882 = vmatpush1.msra.mxu0 0.0
        %4883 = vmatprep.subr.mxu0 0.0
        %4884 = vmatpush1.msra.mxu0 0.0
        %4885 = vmatprep.subr.mxu0 0.0
        %4886 = vmatpush1.msra.mxu0 0.0
        %4887 = vmatprep.subr.mxu0 0.0
        %4888 = vmatpush1.msra.mxu0 0.0
        %4889 = vmatprep.subr.mxu0 0.0
        %4890 = vmatpush1.msra.mxu0 0.0
        %4891 = vmatprep.subr.mxu0 0.0
        %4892 = vmatpush1.msra.mxu0 0.0
        %4893 = vmatprep.subr.mxu0 0.0
        %4894 = vmatpush1.msra.mxu0 0.0
        %4895 = vmatprep.subr.mxu0 0.0
        %4896 = vmatpush1.msra.mxu0 0.0
        %4897 = vmatprep.subr.mxu0 0.0
        %4898 = vmatpush1.msra.mxu0 0.0
        %4899 = vmatprep.subr.mxu0 0.0
        %4900 = vmatpush1.msra.mxu0 0.0
        %4901 = vmatprep.subr.mxu0 0.0
        %4902 = vmatpush1.msra.mxu0 0.0
        %4903 = vmatprep.subr.mxu0 0.0
        %4904 = vmatpush1.msra.mxu0 0.0
        %4905 = vmatprep.subr.mxu0 0.0
        %4906 = vmatpush1.msra.mxu0 0.0
        %4907 = vmatprep.subr.mxu0 0.0
        %4908 = vmatpush1.msra.mxu0 0.0
        %4909 = vmatprep.subr.mxu0 0.0
        %4910 = vmatpush1.msra.mxu0 0.0
        %4911 = vmatprep.subr.mxu0 0.0
        %4912 = vmatpush1.msra.mxu0 0.0
        %4913 = vmatprep.subr.mxu0 0.0
        %4914 = vmatpush1.msra.mxu0 0.0
        %4915 = vmatprep.subr.mxu0 0.0
        %4916 = vmatpush1.msra.mxu0 0.0
        %4917 = vmatprep.subr.mxu0 0.0
        %4918 = vmatpush1.msra.mxu0 0.0
        %4919 = vmatprep.subr.mxu0 0.0
        %4920 = vmatpush1.msra.mxu0 0.0
        %4921 = vmatprep.subr.mxu0 0.0
        %4922 = vmatpush1.msra.mxu0 0.0
        %4923 = vmatprep.subr.mxu0 0.0
        %4924 = vmatpush1.msra.mxu0 0.0
        %4925 = vmatprep.subr.mxu0 0.0
        %4926 = vmatpush1.msra.mxu0 0.0
        %4927 = vmatprep.mubr.f32.mxu0 0.0
        %4928 = vmatmul.mubr.f32.gmra.mrb[0].mxu0 %v4840
        %v4929 = vpop.f32.mrb[0].mxu0
        %v4930 = vadd.f32 0.0, %v4929
        %v4931 = vpop.f32.mrb[0].mxu0
        %4932 = vmatprep.mubr.f32.mxu0 0.0
        %4933 = vmatmul.mubr.f32.gmra.mrb[0].mxu0 %v4843
        %v4934 = vpop.f32.mrb[0].mxu0
        %v4935 = vadd.f32 0.0, %v4934
        %v4936 = vpop.f32.mrb[0].mxu0
        %4937 = vmatprep.mubr.f32.mxu0 0.0
        %4938 = vmatmul.mubr.f32.gmra.mrb[0].mxu0 %v4846
        %v4939 = vpop.f32.mrb[0].mxu0
        %v4940 = vadd.f32 0.0, %v4939
        %v4941 = vpop.f32.mrb[0].mxu0
        %4942 = vmatprep.mubr.f32.mxu0 0.0
        %4943 = vmatmul.mubr.f32.gmra.mrb[0].mxu0 %v4849
        %v4944 = vpop.f32.mrb[0].mxu0
        %v4945 = vadd.f32 0.0, %v4944
        %v4946 = vpop.f32.mrb[0].mxu0
        %4947 = vmatprep.mubr.f32.mxu0 0.0
        %4948 = vmatmul.mubr.f32.gmra.mrb[0].mxu0 %v4852
        %v4949 = vpop.f32.mrb[0].mxu0
        %v4950 = vadd.f32 0.0, %v4949
        %v4951 = vpop.f32.mrb[0].mxu0
        %4952 = vmatprep.mubr.f32.mxu0 0.0
        %4953 = vmatmul.mubr.f32.gmra.mrb[0].mxu0 %v4855
        %v4954 = vpop.f32.mrb[0].mxu0
        %v4955 = vadd.f32 0.0, %v4954
        %v4956 = vpop.f32.mrb[0].mxu0
        %4957 = vmatprep.mubr.f32.mxu0 0.0
        %4958 = vmatmul.mubr.f32.gmra.mrb[0].mxu0 %v4858
        %v4959 = vpop.f32.mrb[0].mxu0
        %v4960 = vadd.f32 0.0, %v4959
        %v4961 = vpop.f32.mrb[0].mxu0
        %4962 = vmatprep.mubr.f32.mxu0 0.0
        %4963 = vmatmul.mubr.f32.gmra.mrb[0].mxu0 %v4861
        %v4964 = vpop.f32.mrb[0].mxu0
        %v4965 = vadd.f32 0.0, %v4964
        %v4966 = vpop.f32.mrb[0].mxu0
        %4967 = vdwg.mxu0
        %v4968 = vadd.f32 %v4822, %v4930
        %v4969 = vadd.f32 %v4823, %v4935
        %v4970 = vadd.f32 %v4824, %v4940
        %v4971 = vadd.f32 %v4825, %v4945
        %v4972 = vadd.f32 %v4826, %v4950
        %v4973 = vadd.f32 %v4827, %v4955
        %v4974 = vadd.f32 %v4828, %v4960
        %v4975 = vadd.f32 %v4829, %v4965
        %s4976 = scalar_lea.vmem [#allocation4], 32
        %v4977 = vld [vmem:[%s4976] sm:$0xff]
        %v4978 = vld [vmem:[%s4976 + $0x10] sm:$0xff]
        %v4979 = vld [vmem:[%s4976 + $0x20] sm:$0xff]
        %v4980 = vld [vmem:[%s4976 + $0x30] sm:$0xff]
        %v4981 = vld [vmem:[%s4976 + $0x40] sm:$0xff]
        %v4982 = vld [vmem:[%s4976 + $0x50] sm:$0xff]
        %v4983 = vld [vmem:[%s4976 + $0x60] sm:$0xff]
        %v4984 = vld [vmem:[%s4976 + $0x70] sm:$0xff]
        %v4985 = vld [vmem:[%s3 + $0x30] sm:$0xff]
        %v4987 = vsel %vm3926, %v4977, 0
        %v4990 = vsel %vm3926, %v4978, 0
        %v4993 = vsel %vm3926, %v4979, 0
        %v4996 = vsel %vm3926, %v4980, 0
        %v4999 = vsel %vm3926, %v4981, 0
        %v5002 = vsel %vm3926, %v4982, 0
        %v5005 = vsel %vm3926, %v4983, 0
        %v5008 = vsel %vm3926, %v4984, 0
        %5010 = vmatprep.subr.mxu0 0.0
        %5011 = vmatpush1.msra.mxu0 %v4985
        %5012 = vmatprep.subr.mxu0 0.0
        %5013 = vmatpush1.msra.mxu0 0.0
        %5014 = vmatprep.subr.mxu0 0.0
        %5015 = vmatpush1.msra.mxu0 0.0
        %5016 = vmatprep.subr.mxu0 0.0
        %5017 = vmatpush1.msra.mxu0 0.0
        %5018 = vmatprep.subr.mxu0 0.0
        %5019 = vmatpush1.msra.mxu0 0.0
        %5020 = vmatprep.subr.mxu0 0.0
        %5021 = vmatpush1.msra.mxu0 0.0
        %5022 = vmatprep.subr.mxu0 0.0
        %5023 = vmatpush1.msra.mxu0 0.0
        %5024 = vmatprep.subr.mxu0 0.0
        %5025 = vmatpush1.msra.mxu0 0.0
        %5026 = vmatprep.subr.mxu0 0.0
        %5027 = vmatpush1.msra.mxu0 0.0
        %5028 = vmatprep.subr.mxu0 0.0
        %5029 = vmatpush1.msra.mxu0 0.0
        %5030 = vmatprep.subr.mxu0 0.0
        %5031 = vmatpush1.msra.mxu0 0.0
        %5032 = vmatprep.subr.mxu0 0.0
        %5033 = vmatpush1.msra.mxu0 0.0
        %5034 = vmatprep.subr.mxu0 0.0
        %5035 = vmatpush1.msra.mxu0 0.0
        %5036 = vmatprep.subr.mxu0 0.0
        %5037 = vmatpush1.msra.mxu0 0.0
        %5038 = vmatprep.subr.mxu0 0.0
        %5039 = vmatpush1.msra.mxu0 0.0
        %5040 = vmatprep.subr.mxu0 0.0
        %5041 = vmatpush1.msra.mxu0 0.0
        %5042 = vmatprep.subr.mxu0 0.0
        %5043 = vmatpush1.msra.mxu0 0.0
        %5044 = vmatprep.subr.mxu0 0.0
        %5045 = vmatpush1.msra.mxu0 0.0
        %5046 = vmatprep.subr.mxu0 0.0
        %5047 = vmatpush1.msra.mxu0 0.0
        %5048 = vmatprep.subr.mxu0 0.0
        %5049 = vmatpush1.msra.mxu0 0.0
        %5050 = vmatprep.subr.mxu0 0.0
        %5051 = vmatpush1.msra.mxu0 0.0
        %5052 = vmatprep.subr.mxu0 0.0
        %5053 = vmatpush1.msra.mxu0 0.0
        %5054 = vmatprep.subr.mxu0 0.0
        %5055 = vmatpush1.msra.mxu0 0.0
        %5056 = vmatprep.subr.mxu0 0.0
        %5057 = vmatpush1.msra.mxu0 0.0
        %5058 = vmatprep.subr.mxu0 0.0
        %5059 = vmatpush1.msra.mxu0 0.0
        %5060 = vmatprep.subr.mxu0 0.0
        %5061 = vmatpush1.msra.mxu0 0.0
        %5062 = vmatprep.subr.mxu0 0.0
        %5063 = vmatpush1.msra.mxu0 0.0
        %5064 = vmatprep.subr.mxu0 0.0
        %5065 = vmatpush1.msra.mxu0 0.0
        %5066 = vmatprep.subr.mxu0 0.0
        %5067 = vmatpush1.msra.mxu0 0.0
        %5068 = vmatprep.subr.mxu0 0.0
        %5069 = vmatpush1.msra.mxu0 0.0
        %5070 = vmatprep.subr.mxu0 0.0
        %5071 = vmatpush1.msra.mxu0 0.0
        %5072 = vmatprep.subr.mxu0 0.0
        %5073 = vmatpush1.msra.mxu0 0.0
        %5074 = vmatprep.mubr.f32.mxu0 0.0
        %5075 = vmatmul.mubr.f32.gmra.mrb[0].mxu0 %v4987
        %v5076 = vpop.f32.mrb[0].mxu0
        %v5077 = vadd.f32 0.0, %v5076
        %v5078 = vpop.f32.mrb[0].mxu0
        %5079 = vmatprep.mubr.f32.mxu0 0.0
        %5080 = vmatmul.mubr.f32.gmra.mrb[0].mxu0 %v4990
        %v5081 = vpop.f32.mrb[0].mxu0
        %v5082 = vadd.f32 0.0, %v5081
        %v5083 = vpop.f32.mrb[0].mxu0
        %5084 = vmatprep.mubr.f32.mxu0 0.0
        %5085 = vmatmul.mubr.f32.gmra.mrb[0].mxu0 %v4993
        %v5086 = vpop.f32.mrb[0].mxu0
        %v5087 = vadd.f32 0.0, %v5086
        %v5088 = vpop.f32.mrb[0].mxu0
        %5089 = vmatprep.mubr.f32.mxu0 0.0
        %5090 = vmatmul.mubr.f32.gmra.mrb[0].mxu0 %v4996
        %v5091 = vpop.f32.mrb[0].mxu0
        %v5092 = vadd.f32 0.0, %v5091
        %v5093 = vpop.f32.mrb[0].mxu0
        %5094 = vmatprep.mubr.f32.mxu0 0.0
        %5095 = vmatmul.mubr.f32.gmra.mrb[0].mxu0 %v4999
        %v5096 = vpop.f32.mrb[0].mxu0
        %v5097 = vadd.f32 0.0, %v5096
        %v5098 = vpop.f32.mrb[0].mxu0
        %5099 = vmatprep.mubr.f32.mxu0 0.0
        %5100 = vmatmul.mubr.f32.gmra.mrb[0].mxu0 %v5002
        %v5101 = vpop.f32.mrb[0].mxu0
        %v5102 = vadd.f32 0.0, %v5101
        %v5103 = vpop.f32.mrb[0].mxu0
        %5104 = vmatprep.mubr.f32.mxu0 0.0
        %5105 = vmatmul.mubr.f32.gmra.mrb[0].mxu0 %v5005
        %v5106 = vpop.f32.mrb[0].mxu0
        %v5107 = vadd.f32 0.0, %v5106
        %v5108 = vpop.f32.mrb[0].mxu0
        %5109 = vmatprep.mubr.f32.mxu0 0.0
        %5110 = vmatmul.mubr.f32.gmra.mrb[0].mxu0 %v5008
        %v5111 = vpop.f32.mrb[0].mxu0
        %v5112 = vadd.f32 0.0, %v5111
        %v5113 = vpop.f32.mrb[0].mxu0
        %5114 = vdwg.mxu0
        %v5115 = vadd.f32 %v4968, %v5077
        %v5116 = vadd.f32 %v4969, %v5082
        %v5117 = vadd.f32 %v4970, %v5087
        %v5118 = vadd.f32 %v4971, %v5092
        %v5119 = vadd.f32 %v4972, %v5097
        %v5120 = vadd.f32 %v4973, %v5102
        %v5121 = vadd.f32 %v4974, %v5107
        %v5122 = vadd.f32 %v4975, %v5112
        %v5123 = vld [vmem:[%s4976 + $0x1] sm:$0xff]
        %v5124 = vld [vmem:[%s4976 + $0x11] sm:$0xff]
        %v5125 = vld [vmem:[%s4976 + $0x21] sm:$0xff]
        %v5126 = vld [vmem:[%s4976 + $0x31] sm:$0xff]
        %v5127 = vld [vmem:[%s4976 + $0x41] sm:$0xff]
        %v5128 = vld [vmem:[%s4976 + $0x51] sm:$0xff]
        %v5129 = vld [vmem:[%s4976 + $0x61] sm:$0xff]
        %v5130 = vld [vmem:[%s4976 + $0x71] sm:$0xff]
        %v5131 = vld [vmem:[%s3 + $0x38] sm:$0xff]
        %v5133 = vsel %vm3926, %v5123, 0
        %v5136 = vsel %vm3926, %v5124, 0
        %v5139 = vsel %vm3926, %v5125, 0
        %v5142 = vsel %vm3926, %v5126, 0
        %v5145 = vsel %vm3926, %v5127, 0
        %v5148 = vsel %vm3926, %v5128, 0
        %v5151 = vsel %vm3926, %v5129, 0
        %v5154 = vsel %vm3926, %v5130, 0
        %5156 = vmatprep.subr.mxu0 0.0
        %5157 = vmatpush1.msra.mxu0 %v5131
        %5158 = vmatprep.subr.mxu0 0.0
        %5159 = vmatpush1.msra.mxu0 0.0
        %5160 = vmatprep.subr.mxu0 0.0
        %5161 = vmatpush1.msra.mxu0 0.0
        %5162 = vmatprep.subr.mxu0 0.0
        %5163 = vmatpush1.msra.mxu0 0.0
        %5164 = vmatprep.subr.mxu0 0.0
        %5165 = vmatpush1.msra.mxu0 0.0
        %5166 = vmatprep.subr.mxu0 0.0
        %5167 = vmatpush1.msra.mxu0 0.0
        %5168 = vmatprep.subr.mxu0 0.0
        %5169 = vmatpush1.msra.mxu0 0.0
        %5170 = vmatprep.subr.mxu0 0.0
        %5171 = vmatpush1.msra.mxu0 0.0
        %5172 = vmatprep.subr.mxu0 0.0
        %5173 = vmatpush1.msra.mxu0 0.0
        %5174 = vmatprep.subr.mxu0 0.0
        %5175 = vmatpush1.msra.mxu0 0.0
        %5176 = vmatprep.subr.mxu0 0.0
        %5177 = vmatpush1.msra.mxu0 0.0
        %5178 = vmatprep.subr.mxu0 0.0
        %5179 = vmatpush1.msra.mxu0 0.0
        %5180 = vmatprep.subr.mxu0 0.0
        %5181 = vmatpush1.msra.mxu0 0.0
        %5182 = vmatprep.subr.mxu0 0.0
        %5183 = vmatpush1.msra.mxu0 0.0
        %5184 = vmatprep.subr.mxu0 0.0
        %5185 = vmatpush1.msra.mxu0 0.0
        %5186 = vmatprep.subr.mxu0 0.0
        %5187 = vmatpush1.msra.mxu0 0.0
        %5188 = vmatprep.subr.mxu0 0.0
        %5189 = vmatpush1.msra.mxu0 0.0
        %5190 = vmatprep.subr.mxu0 0.0
        %5191 = vmatpush1.msra.mxu0 0.0
        %5192 = vmatprep.subr.mxu0 0.0
        %5193 = vmatpush1.msra.mxu0 0.0
        %5194 = vmatprep.subr.mxu0 0.0
        %5195 = vmatpush1.msra.mxu0 0.0
        %5196 = vmatprep.subr.mxu0 0.0
        %5197 = vmatpush1.msra.mxu0 0.0
        %5198 = vmatprep.subr.mxu0 0.0
        %5199 = vmatpush1.msra.mxu0 0.0
        %5200 = vmatprep.subr.mxu0 0.0
        %5201 = vmatpush1.msra.mxu0 0.0
        %5202 = vmatprep.subr.mxu0 0.0
        %5203 = vmatpush1.msra.mxu0 0.0
        %5204 = vmatprep.subr.mxu0 0.0
        %5205 = vmatpush1.msra.mxu0 0.0
        %5206 = vmatprep.subr.mxu0 0.0
        %5207 = vmatpush1.msra.mxu0 0.0
        %5208 = vmatprep.subr.mxu0 0.0
        %5209 = vmatpush1.msra.mxu0 0.0
        %5210 = vmatprep.subr.mxu0 0.0
        %5211 = vmatpush1.msra.mxu0 0.0
        %5212 = vmatprep.subr.mxu0 0.0
        %5213 = vmatpush1.msra.mxu0 0.0
        %5214 = vmatprep.subr.mxu0 0.0
        %5215 = vmatpush1.msra.mxu0 0.0
        %5216 = vmatprep.subr.mxu0 0.0
        %5217 = vmatpush1.msra.mxu0 0.0
        %5218 = vmatprep.subr.mxu0 0.0
        %5219 = vmatpush1.msra.mxu0 0.0
        %5220 = vmatprep.mubr.f32.mxu0 0.0
        %5221 = vmatmul.mubr.f32.gmra.mrb[0].mxu0 %v5133
        %v5222 = vpop.f32.mrb[0].mxu0
        %v5223 = vadd.f32 0.0, %v5222
        %v5224 = vpop.f32.mrb[0].mxu0
        %5225 = vmatprep.mubr.f32.mxu0 0.0
        %5226 = vmatmul.mubr.f32.gmra.mrb[0].mxu0 %v5136
        %v5227 = vpop.f32.mrb[0].mxu0
        %v5228 = vadd.f32 0.0, %v5227
        %v5229 = vpop.f32.mrb[0].mxu0
        %5230 = vmatprep.mubr.f32.mxu0 0.0
        %5231 = vmatmul.mubr.f32.gmra.mrb[0].mxu0 %v5139
        %v5232 = vpop.f32.mrb[0].mxu0
        %v5233 = vadd.f32 0.0, %v5232
        %v5234 = vpop.f32.mrb[0].mxu0
        %5235 = vmatprep.mubr.f32.mxu0 0.0
        %5236 = vmatmul.mubr.f32.gmra.mrb[0].mxu0 %v5142
        %v5237 = vpop.f32.mrb[0].mxu0
        %v5238 = vadd.f32 0.0, %v5237
        %v5239 = vpop.f32.mrb[0].mxu0
        %5240 = vmatprep.mubr.f32.mxu0 0.0
        %5241 = vmatmul.mubr.f32.gmra.mrb[0].mxu0 %v5145
        %v5242 = vpop.f32.mrb[0].mxu0
        %v5243 = vadd.f32 0.0, %v5242
        %v5244 = vpop.f32.mrb[0].mxu0
        %5245 = vmatprep.mubr.f32.mxu0 0.0
        %5246 = vmatmul.mubr.f32.gmra.mrb[0].mxu0 %v5148
        %v5247 = vpop.f32.mrb[0].mxu0
        %v5248 = vadd.f32 0.0, %v5247
        %v5249 = vpop.f32.mrb[0].mxu0
        %5250 = vmatprep.mubr.f32.mxu0 0.0
        %5251 = vmatmul.mubr.f32.gmra.mrb[0].mxu0 %v5151
        %v5252 = vpop.f32.mrb[0].mxu0
        %v5253 = vadd.f32 0.0, %v5252
        %v5254 = vpop.f32.mrb[0].mxu0
        %5255 = vmatprep.mubr.f32.mxu0 0.0
        %5256 = vmatmul.mubr.f32.gmra.mrb[0].mxu0 %v5154
        %v5257 = vpop.f32.mrb[0].mxu0
        %v5258 = vadd.f32 0.0, %v5257
        %v5259 = vpop.f32.mrb[0].mxu0
        %5260 = vdwg.mxu0
        %v5261 = vadd.f32 %v5115, %v5223
        %v5262 = vadd.f32 %v5116, %v5228
        %v5263 = vadd.f32 %v5117, %v5233
        %v5264 = vadd.f32 %v5118, %v5238
        %v5265 = vadd.f32 %v5119, %v5243
        %v5266 = vadd.f32 %v5120, %v5248
        %v5267 = vadd.f32 %v5121, %v5253
        %v5268 = vadd.f32 %v5122, %v5258
        %v5269 = vld [vmem:[%s4976 + $0x2] sm:$0xff]
        %v5270 = vld [vmem:[%s4976 + $0x12] sm:$0xff]
        %v5271 = vld [vmem:[%s4976 + $0x22] sm:$0xff]
        %v5272 = vld [vmem:[%s4976 + $0x32] sm:$0xff]
        %v5273 = vld [vmem:[%s4976 + $0x42] sm:$0xff]
        %v5274 = vld [vmem:[%s4976 + $0x52] sm:$0xff]
        %v5275 = vld [vmem:[%s4976 + $0x62] sm:$0xff]
        %v5276 = vld [vmem:[%s4976 + $0x72] sm:$0xff]
        %v5277 = vld [vmem:[%s3 + $0x40] sm:$0xff]
        %v5279 = vsel %vm3926, %v5269, 0
        %v5282 = vsel %vm3926, %v5270, 0
        %v5285 = vsel %vm3926, %v5271, 0
        %v5288 = vsel %vm3926, %v5272, 0
        %v5291 = vsel %vm3926, %v5273, 0
        %v5294 = vsel %vm3926, %v5274, 0
        %v5297 = vsel %vm3926, %v5275, 0
        %v5300 = vsel %vm3926, %v5276, 0
        %5302 = vmatprep.subr.mxu0 0.0
        %5303 = vmatpush1.msra.mxu0 %v5277
        %5304 = vmatprep.subr.mxu0 0.0
        %5305 = vmatpush1.msra.mxu0 0.0
        %5306 = vmatprep.subr.mxu0 0.0
        %5307 = vmatpush1.msra.mxu0 0.0
        %5308 = vmatprep.subr.mxu0 0.0
        %5309 = vmatpush1.msra.mxu0 0.0
        %5310 = vmatprep.subr.mxu0 0.0
        %5311 = vmatpush1.msra.mxu0 0.0
        %5312 = vmatprep.subr.mxu0 0.0
        %5313 = vmatpush1.msra.mxu0 0.0
        %5314 = vmatprep.subr.mxu0 0.0
        %5315 = vmatpush1.msra.mxu0 0.0
        %5316 = vmatprep.subr.mxu0 0.0
        %5317 = vmatpush1.msra.mxu0 0.0
        %5318 = vmatprep.subr.mxu0 0.0
        %5319 = vmatpush1.msra.mxu0 0.0
        %5320 = vmatprep.subr.mxu0 0.0
        %5321 = vmatpush1.msra.mxu0 0.0
        %5322 = vmatprep.subr.mxu0 0.0
        %5323 = vmatpush1.msra.mxu0 0.0
        %5324 = vmatprep.subr.mxu0 0.0
        %5325 = vmatpush1.msra.mxu0 0.0
        %5326 = vmatprep.subr.mxu0 0.0
        %5327 = vmatpush1.msra.mxu0 0.0
        %5328 = vmatprep.subr.mxu0 0.0
        %5329 = vmatpush1.msra.mxu0 0.0
        %5330 = vmatprep.subr.mxu0 0.0
        %5331 = vmatpush1.msra.mxu0 0.0
        %5332 = vmatprep.subr.mxu0 0.0
        %5333 = vmatpush1.msra.mxu0 0.0
        %5334 = vmatprep.subr.mxu0 0.0
        %5335 = vmatpush1.msra.mxu0 0.0
        %5336 = vmatprep.subr.mxu0 0.0
        %5337 = vmatpush1.msra.mxu0 0.0
        %5338 = vmatprep.subr.mxu0 0.0
        %5339 = vmatpush1.msra.mxu0 0.0
        %5340 = vmatprep.subr.mxu0 0.0
        %5341 = vmatpush1.msra.mxu0 0.0
        %5342 = vmatprep.subr.mxu0 0.0
        %5343 = vmatpush1.msra.mxu0 0.0
        %5344 = vmatprep.subr.mxu0 0.0
        %5345 = vmatpush1.msra.mxu0 0.0
        %5346 = vmatprep.subr.mxu0 0.0
        %5347 = vmatpush1.msra.mxu0 0.0
        %5348 = vmatprep.subr.mxu0 0.0
        %5349 = vmatpush1.msra.mxu0 0.0
        %5350 = vmatprep.subr.mxu0 0.0
        %5351 = vmatpush1.msra.mxu0 0.0
        %5352 = vmatprep.subr.mxu0 0.0
        %5353 = vmatpush1.msra.mxu0 0.0
        %5354 = vmatprep.subr.mxu0 0.0
        %5355 = vmatpush1.msra.mxu0 0.0
        %5356 = vmatprep.subr.mxu0 0.0
        %5357 = vmatpush1.msra.mxu0 0.0
        %5358 = vmatprep.subr.mxu0 0.0
        %5359 = vmatpush1.msra.mxu0 0.0
        %5360 = vmatprep.subr.mxu0 0.0
        %5361 = vmatpush1.msra.mxu0 0.0
        %5362 = vmatprep.subr.mxu0 0.0
        %5363 = vmatpush1.msra.mxu0 0.0
        %5364 = vmatprep.subr.mxu0 0.0
        %5365 = vmatpush1.msra.mxu0 0.0
        %5366 = vmatprep.mubr.f32.mxu0 0.0
        %5367 = vmatmul.mubr.f32.gmra.mrb[0].mxu0 %v5279
        %v5368 = vpop.f32.mrb[0].mxu0
        %v5369 = vadd.f32 0.0, %v5368
        %v5370 = vpop.f32.mrb[0].mxu0
        %5371 = vmatprep.mubr.f32.mxu0 0.0
        %5372 = vmatmul.mubr.f32.gmra.mrb[0].mxu0 %v5282
        %v5373 = vpop.f32.mrb[0].mxu0
        %v5374 = vadd.f32 0.0, %v5373
        %v5375 = vpop.f32.mrb[0].mxu0
        %5376 = vmatprep.mubr.f32.mxu0 0.0
        %5377 = vmatmul.mubr.f32.gmra.mrb[0].mxu0 %v5285
        %v5378 = vpop.f32.mrb[0].mxu0
        %v5379 = vadd.f32 0.0, %v5378
        %v5380 = vpop.f32.mrb[0].mxu0
        %5381 = vmatprep.mubr.f32.mxu0 0.0
        %5382 = vmatmul.mubr.f32.gmra.mrb[0].mxu0 %v5288
        %v5383 = vpop.f32.mrb[0].mxu0
        %v5384 = vadd.f32 0.0, %v5383
        %v5385 = vpop.f32.mrb[0].mxu0
        %5386 = vmatprep.mubr.f32.mxu0 0.0
        %5387 = vmatmul.mubr.f32.gmra.mrb[0].mxu0 %v5291
        %v5388 = vpop.f32.mrb[0].mxu0
        %v5389 = vadd.f32 0.0, %v5388
        %v5390 = vpop.f32.mrb[0].mxu0
        %5391 = vmatprep.mubr.f32.mxu0 0.0
        %5392 = vmatmul.mubr.f32.gmra.mrb[0].mxu0 %v5294
        %v5393 = vpop.f32.mrb[0].mxu0
        %v5394 = vadd.f32 0.0, %v5393
        %v5395 = vpop.f32.mrb[0].mxu0
        %5396 = vmatprep.mubr.f32.mxu0 0.0
        %5397 = vmatmul.mubr.f32.gmra.mrb[0].mxu0 %v5297
        %v5398 = vpop.f32.mrb[0].mxu0
        %v5399 = vadd.f32 0.0, %v5398
        %v5400 = vpop.f32.mrb[0].mxu0
        %5401 = vmatprep.mubr.f32.mxu0 0.0
        %5402 = vmatmul.mubr.f32.gmra.mrb[0].mxu0 %v5300
        %v5403 = vpop.f32.mrb[0].mxu0
        %v5404 = vadd.f32 0.0, %v5403
        %v5405 = vpop.f32.mrb[0].mxu0
        %5406 = vdwg.mxu0
        %v5407 = vadd.f32 %v5261, %v5369
        %v5408 = vadd.f32 %v5262, %v5374
        %v5409 = vadd.f32 %v5263, %v5379
        %v5410 = vadd.f32 %v5264, %v5384
        %v5411 = vadd.f32 %v5265, %v5389
        %v5412 = vadd.f32 %v5266, %v5394
        %v5413 = vadd.f32 %v5267, %v5399
        %v5414 = vadd.f32 %v5268, %v5404
        %v5415 = vmax.f32 %v5407, 0.0
        %v5416 = vmax.f32 %v5408, 0.0
        %v5417 = vmax.f32 %v5409, 0.0
        %v5418 = vmax.f32 %v5410, 0.0
        %v5419 = vmax.f32 %v5411, 0.0
        %v5420 = vmax.f32 %v5412, 0.0
        %v5421 = vmax.f32 %v5413, 0.0
        %v5422 = vmax.f32 %v5414, 0.0
        %vm5423 = vcmask 130048
        %5424 = vst.msk [vmem:[%s252] sm:$0xff] %vm5423, %v5415
        %5425 = vst.msk [vmem:[%s252 + $0x8] sm:$0xff] %vm5423, %v5416
        %5426 = vst.msk [vmem:[%s252 + $0x10] sm:$0xff] %vm5423, %v5417
        %5427 = vst.msk [vmem:[%s252 + $0x18] sm:$0xff] %vm5423, %v5418
        %5428 = vst.msk [vmem:[%s252 + $0x20] sm:$0xff] %vm5423, %v5419
        %5429 = vst.msk [vmem:[%s252 + $0x28] sm:$0xff] %vm5423, %v5420
        %5430 = vst.msk [vmem:[%s252 + $0x30] sm:$0xff] %vm5423, %v5421
        %5431 = vst.msk [vmem:[%s252 + $0x38] sm:$0xff] %vm5423, %v5422
        %p5432 = scmp.lt.s32.totalorder %s21, 1
        %s5433 = scalar_select %p5432, %s21, 1
        %s5434 = smul.addr %s5433, 32
        %s5435 = smul.addr %s5434, 8
        %s5436 = scalar_lea.vmem %s5, %s5435
        %s5437 = sand.u32 %s165, 1
        %s5438 = scalar_lea.sflag [#allocation6], %s5437
        %s5439 = sand.u32 %s165, 1
        %s5440 = smul.addr %s5439, 64
        %s5441 = scalar_lea.vmem [#allocation5], %s5440
        // Predicated region
        $region41: #{encoder_forward.1} parent=39 // pred_check
          %p5442 = pneg %p149
        $region42: #{encoder_forward.1} parent=39 // pred_check_branch
          %5444 = sbr.rel (%p5442) target = $region44
        $region43: #{encoder_forward.1} parent=39 // pred_region
          _
        $region44: #{encoder_forward.1} parent=39 // pred_fallthru
          _
        // Predicated region
        $region45: #{encoder_forward.1} parent=39 // pred_check
          %p5445 = pneg %p175
        $region46: #{encoder_forward.1} parent=39 // pred_check_branch
          %5447 = sbr.rel (%p5445) target = $region48
        $region47: #{encoder_forward.1} parent=39 // pred_region
          %s5449 = ssub.s32 1024, 1024
          %5450 = vsyncadd %s5438, %s5449
          %s5451 = smul.addr %s21, 8
          %s5452 = smul.addr %s5451, 128
          %s5453 = scalar_lea.hbm %s6, %s5452
          %s5454 = sshll.u32 %s5441, 4
          %s5455 = int_to_ptr.vmem [resolvable:$true] %s5454
          %5460 = dma.vmem_to_hbm [thread:$0]  %s5455, 1024, %s5453, %s5438, 128, 128, 8
        $region48: #{encoder_forward.1} parent=39 // pred_fallthru
          _
      $region40: #{encoder_forward.1} parent=5 // pred_fallthru
        _
      %p5461 = scmp.le.s32.totalorder 2, %s16
      // Predicated region
      $region49: #{encoder_forward.1} parent=5 // pred_check
        %p5462 = pneg %p5461
      $region50: #{encoder_forward.1} parent=5 // pred_check_branch
        %5464 = sbr.rel (%p5462) target = $region52
      $region51: #{encoder_forward.1} parent=5 // pred_region
        %s5465 = ssub.s32 %s16, 2
        // Predicated region
        $region53: #{encoder_forward.1} parent=51 // pred_check
          %p5466 = pneg %p155
        $region54: #{encoder_forward.1} parent=51 // pred_check_branch
          %5468 = sbr.rel (%p5466) target = $region56
        $region55: #{encoder_forward.1} parent=51 // pred_region
          %p5469 = scmp.lt.s32.totalorder %s22, 1
          %s5470 = scalar_select %p5469, %s22, 1
          %s5471 = smul.addr %s5470, 32
          %s5472 = smul.addr %s5471, 8
          %s5473 = scalar_lea.vmem %s5, %s5472
        $region56: #{encoder_forward.1} parent=51 // pred_fallthru
          _
        // Predicated region
        $region57: #{encoder_forward.1} parent=51 // pred_check
          %p5474 = pneg %p181
        $region58: #{encoder_forward.1} parent=51 // pred_check_branch
          %5476 = sbr.rel (%p5474) target = $region60
        $region59: #{encoder_forward.1} parent=51 // pred_region
          %s5477 = sand.u32 %s166, 1
          %s5478 = scalar_lea.sflag [#allocation6], %s5477
          %s5479 = sand.u32 %s166, 1
          %s5480 = smul.addr %s5479, 64
          %s5481 = scalar_lea.vmem [#allocation5], %s5480
          %5482 = dma.done %s5478, 1024
        $region60: #{encoder_forward.1} parent=51 // pred_fallthru
          _
      $region52: #{encoder_forward.1} parent=5 // pred_fallthru
        _
    $region6: #{encoder_forward.1} parent=1 // loop_footer
      %s20 = sadd.s32 1, %s16
    $region7: #{encoder_forward.1} parent=1 // loop_footer_branch
      %15 = sbr.rel target = $region3
    $region8: #{encoder_forward.1} parent=1 // loop_exit
      _
    %5483 = vsyncpa [#allocation6], 1
    %s5484 = scalar_lea.sflag [#allocation6], 1
    %5485 = vsyncpa %s5484, 1

</llo_original>
